<compile_context>
chip_gen: v5e
topology: v5e:2x2
jax: 0.10.0
libtpu: 0.0.40
codegen_flags: <defaults>
</compile_context>

<pallas_src>
import functools
import math

import jax
import jax.numpy as jnp
from jax.experimental import pallas as pl
from jax.experimental.pallas import tpu as pltpu

_VMEM_LIMIT = 32 * 1024 * 1024  # safe scoped-VMEM budget on v5e / v6e / v7x


# ---------------------------------------------------------------------------
# tiling helpers
# ---------------------------------------------------------------------------

def _tile(dim, max_tile):
    """Return (tile, padded_dim).  tile == dim when it fits (full-dim block is
    always layout-legal); otherwise use an aligned max_tile and pad."""
    if dim <= max_tile:
        return dim, dim
    padded = ((dim + max_tile - 1) // max_tile) * max_tile
    return max_tile, padded


def _pad_axis(x, target, axis):
    pad = target - x.shape[axis]
    if pad == 0:
        return x
    widths = [(0, 0)] * x.ndim
    widths[axis] = (0, pad)
    return jnp.pad(x, widths)


# ---------------------------------------------------------------------------
# Pallas kernels
# ---------------------------------------------------------------------------

def _linear_kernel(x_ref, w_ref, b_ref, o_ref, acc_ref, *, relu):
    """Tiled (grouped) matmul: grid = (G, M/tm, N/tn, K/tk), K innermost.
    bf16 operands, f32 VMEM accumulator, bias (+optional ReLU) fused on the
    last K step."""
    @pl.when(pl.program_id(3) == 0)
    def _init():
        acc_ref[...] = jnp.zeros_like(acc_ref)

    acc_ref[...] += jnp.dot(x_ref[...], w_ref[0],
                            preferred_element_type=jnp.float32)

    @pl.when(pl.program_id(3) == pl.num_programs(3) - 1)
    def _finalize():
        y = acc_ref[...] + b_ref[0]
        if relu:
            y = jnp.maximum(y, 0.0)
        o_ref[0] = y.astype(o_ref.dtype)


def _add_layernorm_kernel(x_ref, y_ref, g_ref, b_ref, o_ref):
    """Fused residual-add + LayerNorm (f32)."""
    x = x_ref[...] + y_ref[...]
    mean = jnp.mean(x, axis=-1, keepdims=True)
    xc = x - mean
    var = jnp.mean(xc * xc, axis=-1, keepdims=True)
    o_ref[...] = xc * jax.lax.rsqrt(var + 1e-5) * g_ref[...] + b_ref[...]


def _mha_kernel(q_ref, k_ref, v_ref, m_ref, ctx_ref, *attn_refs):
    """All heads of one batch element per grid step.
    blocks: q/k/v (1, H, T, dh), mask (1, 1, Tq, Tk), ctx (1, H, Tq, dh)."""
    q = q_ref[0]                      # [H, Tq, dh] f32
    k = k_ref[0]                      # [H, Tk, dh] f32
    v = v_ref[0]                      # [H, Tk, dh] f32
    mask = m_ref[0, 0]                # [Tq, Tk] f32 (1 = keep), shared by heads
    dh = q.shape[-1]
    scale = jnp.float32(1.0 / math.sqrt(dh))
    qb = (q * scale).astype(jnp.bfloat16)   # fold 1/sqrt(dh) into q once (f32)
    kb = k.astype(jnp.bfloat16)
    vb = v.astype(jnp.bfloat16)
    # batched QK^T without explicit transpose (contract on dh)
    s = jnp.einsum("hqd,hkd->hqk", qb, kb,
                   preferred_element_type=jnp.float32)            # [H, Tq, Tk]
    s = jnp.where(mask[None, :, :] < 0.5, jnp.float32(-1e10), s)
    m = jnp.max(s, axis=-1, keepdims=True)
    e = jnp.exp(s - m)
    p = e * pl.reciprocal(jnp.sum(e, axis=-1, keepdims=True), approx=True)
    ctx = jnp.einsum("hqk,hkd->hqd", p.astype(jnp.bfloat16), vb,
                     preferred_element_type=jnp.float32)          # [H, Tq, dh]
    ctx_ref[0] = ctx
    if attn_refs:                     # only emitted for the final cross-attention
        attn_refs[0][0] = p
    # TODO(synk): flash-style Tk tiling (running max/sum) for long sequences.


# ---------------------------------------------------------------------------
# Pallas wrappers
# ---------------------------------------------------------------------------

def batched_linear(x2d, w, b, relu=False):
    """x2d [M, K] f32 @ w [G, K, N] (+ b [G, N]) -> [G, M, N] f32.
    One pallas_call covers all G projections (fused QKV / KV)."""
    M, K = x2d.shape
    G, _, N = w.shape
    tm, Mp = _tile(M, 256)
    tk, Kp = _tile(K, 512)
    tn, Np = _tile(N, 512)

    xb = _pad_axis(_pad_axis(x2d, Mp, 0), Kp, 1).astype(jnp.bfloat16)
    wb = _pad_axis(_pad_axis(w, Kp, 1), Np, 2).astype(jnp.bfloat16)
    bb = _pad_axis(b.astype(jnp.float32), Np, 1).reshape(G, 1, Np)

    grid = (G, Mp // tm, Np // tn, Kp // tk)
    out = pl.pallas_call(
        functools.partial(_linear_kernel, relu=relu),
        out_shape=jax.ShapeDtypeStruct((G, Mp, Np), jnp.float32),
        grid=grid,
        in_specs=[
            pl.BlockSpec((tm, tk), lambda g, i, j, k: (i, k)),
            pl.BlockSpec((1, tk, tn), lambda g, i, j, k: (g, k, j)),
            pl.BlockSpec((1, 1, tn), lambda g, i, j, k: (g, 0, j)),  # bias resident
        ],
        out_specs=pl.BlockSpec((1, tm, tn), lambda g, i, j, k: (g, i, j)),
        scratch_shapes=[pltpu.VMEM((tm, tn), jnp.float32)],
        compiler_params=pltpu.CompilerParams(
            dimension_semantics=("parallel", "parallel", "parallel", "arbitrary"),
            vmem_limit_bytes=_VMEM_LIMIT),
    )(xb, wb, bb)
    if Mp != M or Np != N:
        out = out[:, :M, :N]
    return out


def add_layernorm(x, y, gamma, beta):
    """LayerNorm(x + y), rows tiled, gamma/beta kept resident in VMEM."""
    B, T, D = x.shape
    M = B * T
    tm, Mp = _tile(M, 256)
    x2 = _pad_axis(x.reshape(M, D), Mp, 0)
    y2 = _pad_axis(y.reshape(M, D), Mp, 0)
    out = pl.pallas_call(
        _add_layernorm_kernel,
        out_shape=jax.ShapeDtypeStruct((Mp, D), jnp.float32),
        grid=(Mp // tm,),
        in_specs=[
            pl.BlockSpec((tm, D), lambda i: (i, 0)),
            pl.BlockSpec((tm, D), lambda i: (i, 0)),
            pl.BlockSpec((1, D), lambda i: (0, 0)),
            pl.BlockSpec((1, D), lambda i: (0, 0)),
        ],
        out_specs=pl.BlockSpec((tm, D), lambda i: (i, 0)),
        compiler_params=pltpu.CompilerParams(
            dimension_semantics=("parallel",),
            vmem_limit_bytes=_VMEM_LIMIT),
    )(x2, y2, gamma.reshape(1, D), beta.reshape(1, D))
    if Mp != M:
        out = out[:M]
    return out.reshape(B, T, D)


def pallas_attention(q_src, kv_src, mask, q_idx, k_idx, v_idx, need_attn):
    """q_src: [Gq*B, H, Tq, dh]; kv_src: [Gk*B, H, Tk, dh]; mask: [B, 1, Tq, Tk].
    Q/K/V are read straight out of the packed projection outputs via index_maps;
    the mask is shared across all heads (no H-fold duplication)."""
    B = mask.shape[0]
    _, H, Tq, dh = q_src.shape
    Tk = kv_src.shape[2]

    in_specs = [
        pl.BlockSpec((1, H, Tq, dh), lambda b: (q_idx * B + b, 0, 0, 0)),
        pl.BlockSpec((1, H, Tk, dh), lambda b: (k_idx * B + b, 0, 0, 0)),
        pl.BlockSpec((1, H, Tk, dh), lambda b: (v_idx * B + b, 0, 0, 0)),
        pl.BlockSpec((1, 1, Tq, Tk), lambda b: (b, 0, 0, 0)),
    ]
    ctx_shape = jax.ShapeDtypeStruct((B, H, Tq, dh), jnp.float32)
    ctx_spec = pl.BlockSpec((1, H, Tq, dh), lambda b: (b, 0, 0, 0))
    if need_attn:
        out_shape = (ctx_shape, jax.ShapeDtypeStruct((B, H, Tq, Tk), jnp.float32))
        out_specs = (ctx_spec, pl.BlockSpec((1, H, Tq, Tk), lambda b: (b, 0, 0, 0)))
    else:
        out_shape = ctx_shape
        out_specs = ctx_spec

    res = pl.pallas_call(
        _mha_kernel,
        out_shape=out_shape,
        grid=(B,),
        in_specs=in_specs,
        out_specs=out_specs,
        compiler_params=pltpu.CompilerParams(
            dimension_semantics=("parallel",),
            vmem_limit_bytes=_VMEM_LIMIT),
    )(q_src, kv_src, kv_src, mask)
    if need_attn:
        ctx, attn = res
        return ctx, attn
    return res, None


# ---------------------------------------------------------------------------
# Model glue
# ---------------------------------------------------------------------------

def multi_head_attention(p, q_in, kv_in, mask, num_heads, *, self_attn, need_attn):
    B, Tq, D = q_in.shape
    Tk = kv_in.shape[1]
    dh = D // num_heads

    def to_heads(y, g, t):
        # [g, B*t, D] -> [g*B, H, t, dh]  (single XLA transpose per fused projection)
        return (y.reshape(g, B, t, num_heads, dh)
                 .transpose(0, 1, 3, 2, 4)
                 .reshape(g * B, num_heads, t, dh))

    q2d = q_in.reshape(B * Tq, D)
    if self_attn:
        qkv = batched_linear(q2d, p["w_qkv"], p["b_qkv"])          # fused QKV matmul
        q_src = kv_src = to_heads(qkv, 3, Tq)
        q_idx, k_idx, v_idx = 0, 1, 2
    else:
        qp = batched_linear(q2d, p["w_qkv"][0:1], p["b_qkv"][0:1])
        kv = batched_linear(kv_in.reshape(B * Tk, D),
                            p["w_qkv"][1:3], p["b_qkv"][1:3])      # fused KV matmul
        q_src = to_heads(qp, 1, Tq)
        kv_src = to_heads(kv, 2, Tk)
        q_idx, k_idx, v_idx = 0, 0, 1

    mask_b = jnp.broadcast_to(mask.astype(jnp.float32), (B, 1, Tq, Tk))

    ctx, attn = pallas_attention(q_src, kv_src, mask_b, q_idx, k_idx, v_idx,
                                 need_attn)
    ctx2d = ctx.transpose(0, 2, 1, 3).reshape(B * Tq, D)           # merge heads
    out = batched_linear(ctx2d, p["w_o"], p["b_o"])[0].reshape(B, Tq, D)
    return out, attn


def decoder_layer(lp, target, encoded_input, target_mask, input_mask,
                  num_heads, need_attn):
    a1, _ = multi_head_attention(lp["attn1"], target, target, target_mask,
                                 num_heads, self_attn=True, need_attn=False)
    x1 = add_layernorm(target, a1, *lp["norm1"])          # residual fused into LN
    a2, attention = multi_head_attention(lp["attn2"], x1, encoded_input,
                                         input_mask, num_heads,
                                         self_attn=False, need_attn=need_attn)
    x2 = add_layernorm(x1, a2, *lp["norm2"])
    x2d = x2.reshape(-1, x2.shape[-1])
    h = batched_linear(x2d, lp["ff_w1"][None], lp["ff_b1"][None], relu=True)[0]
    ff = batched_linear(h, lp["ff_w2"][None], lp["ff_b2"][None])[0]
    out = add_layernorm(x2, ff.reshape(x2.shape), *lp["norm3"])
    return out, attention


def position_encoding(seq_len, dim):
    pos = jnp.arange(seq_len, dtype=jnp.float32)[:, None]
    i = jnp.arange(dim)[None, :]
    angle = pos / jnp.power(10000.0, (2.0 * (i // 2)) / dim)
    pe = jnp.where(i % 2 == 0, jnp.sin(angle), jnp.cos(angle))
    return pe[None]  # [1, T, D]


def transformer_decoder_forward(params, target_ids, encoded_input,
                                target_mask, input_mask, *, num_heads,
                                dim_model):
    B, T = target_ids.shape
    # TODO(synk): embedding gather kept in glue JAX (data-dependent gather).
    emb = jnp.take(params["embed"], target_ids, axis=0)
    x = emb * jnp.sqrt(jnp.float32(dim_model)) + position_encoding(T, dim_model)
    attention = None
    n_layers = len(params["layers"])
    for idx, lp in enumerate(params["layers"]):
        x, attn = decoder_layer(lp, x, encoded_input, target_mask, input_mask,
                                num_heads, need_attn=(idx == n_layers - 1))
        if attn is not None:
            attention = attn
    x2d = x.reshape(B * T, dim_model)
    out = batched_linear(x2d, params["out_w"][None], params["out_b"][None])[0]
    return out.reshape(B, T, -1), attention


# ---------------------------------------------------------------------------
# Deterministic parameter initialization (packed QKV / KV weights)
# ---------------------------------------------------------------------------

def init_params(key, vocab, dim, num_layers, ff):
    keys = iter(jax.random.split(key, 4 + 8 * num_layers))

    def dense(din, dout):
        w = jax.random.normal(next(keys), (din, dout), jnp.float32) / jnp.sqrt(
            jnp.float32(din))
        return w, jnp.zeros((dout,), jnp.float32)

    def packed(g, din, dout):
        w = jax.random.normal(next(keys), (g, din, dout), jnp.float32) / jnp.sqrt(
            jnp.float32(din))
        return w, jnp.zeros((g, dout), jnp.float32)

    params = {"embed": jax.random.normal(next(keys), (vocab, dim), jnp.float32)}
    layers = []
    for _ in range(num_layers):
        lp = {}
        for name in ("attn1", "attn2"):
            w_qkv, b_qkv = packed(3, dim, dim)   # Q|K|V stacked
            w_o, b_o = packed(1, dim, dim)
            lp[name] = {"w_qkv": w_qkv, "b_qkv": b_qkv, "w_o": w_o, "b_o": b_o}
        ones, zeros = jnp.ones((dim,), jnp.float32), jnp.zeros((dim,), jnp.float32)
        lp["norm1"], lp["norm2"], lp["norm3"] = (ones, zeros), (ones, zeros), (ones, zeros)
        lp["ff_w1"], lp["ff_b1"] = dense(dim, ff)
        lp["ff_w2"], lp["ff_b2"] = dense(ff, dim)
        layers.append(lp)
    params["layers"] = layers
    params["out_w"], params["out_b"] = dense(dim, vocab)
    return params


# ---------------------------------------------------------------------------

if __name__ == "__main__":
    B, T, S = 2, 8, 8
    vocab = 50
    dim_model = 32
    num_heads = 4
    dim_ff = 64
    num_layers = 2

    key = jax.random.PRNGKey(0)
    k_params, k_tgt, k_enc = jax.random.split(key, 3)

    params = init_params(k_params, vocab, dim_model, num_layers, dim_ff)
    target = jax.random.randint(k_tgt, (B, T), 0, vocab)
    encoded_input = jax.random.normal(k_enc, (B, S, dim_model), jnp.float32)

    target_mask = jnp.broadcast_to(
        jnp.tril(jnp.ones((T, T), jnp.float32))[None, None], (B, 1, T, T))
    input_mask = jnp.ones((B, 1, 1, S), jnp.float32)

    fwd = jax.jit(functools.partial(transformer_decoder_forward,
                                    num_heads=num_heads, dim_model=dim_model))
    out, attn = fwd(params, target, encoded_input, target_mask, input_mask)
    jax.block_until_ready((out, attn))

    assert out.shape == (B, T, vocab)
    assert attn.shape == (B, num_heads, T, S)
    print("KERNEL_OK")
</pallas_src>

<mosaic_0001>
module attributes {stable_mosaic.version = 11 : i64} {
  func.func @_mha_kernel(%arg0: i32, %arg1: memref<1x4x8x8xf32, #tpu.memory_space<vmem>>, %arg2: memref<1x4x8x8xf32, #tpu.memory_space<vmem>>, %arg3: memref<1x4x8x8xf32, #tpu.memory_space<vmem>>, %arg4: memref<1x1x8x8xf32, #tpu.memory_space<vmem>>, %arg5: memref<1x4x8x8xf32, #tpu.memory_space<vmem>>) attributes {dimension_semantics = [#tpu.dimension_semantics<parallel>], iteration_bounds = array<i64: 2>, scalar_prefetch = 0 : i64, scratch_operands = 0 : i64, tpu.core_type = #tpu.core_type<tc>, window_params = [{transform_indices = @transform_0, window_bounds = array<i64: 1, 4, 8, 8>}, {transform_indices = @transform_1, window_bounds = array<i64: 1, 4, 8, 8>}, {transform_indices = @transform_2, window_bounds = array<i64: 1, 4, 8, 8>}, {transform_indices = @transform_3, window_bounds = array<i64: 1, 1, 8, 8>}, {transform_indices = @transform_4, window_bounds = array<i64: 1, 4, 8, 8>}]} {
    %c0 = arith.constant 0 : index
    %c0_0 = arith.constant 0 : index
    %c0_1 = arith.constant 0 : index
    %c0_2 = arith.constant 0 : index
    %0 = vector.load %arg1[%c0, %c0_0, %c0_1, %c0_2] : memref<1x4x8x8xf32, #tpu.memory_space<vmem>>, vector<1x4x8x8xf32>
    %1 = vector.shape_cast %0 : vector<1x4x8x8xf32> to vector<4x8x8xf32>
    %c0_3 = arith.constant 0 : index
    %c0_4 = arith.constant 0 : index
    %c0_5 = arith.constant 0 : index
    %c0_6 = arith.constant 0 : index
    %2 = vector.load %arg2[%c0_3, %c0_4, %c0_5, %c0_6] : memref<1x4x8x8xf32, #tpu.memory_space<vmem>>, vector<1x4x8x8xf32>
    %3 = vector.shape_cast %2 : vector<1x4x8x8xf32> to vector<4x8x8xf32>
    %c0_7 = arith.constant 0 : index
    %c0_8 = arith.constant 0 : index
    %c0_9 = arith.constant 0 : index
    %c0_10 = arith.constant 0 : index
    %4 = vector.load %arg3[%c0_7, %c0_8, %c0_9, %c0_10] : memref<1x4x8x8xf32, #tpu.memory_space<vmem>>, vector<1x4x8x8xf32>
    %5 = vector.shape_cast %4 : vector<1x4x8x8xf32> to vector<4x8x8xf32>
    %c0_11 = arith.constant 0 : index
    %c0_12 = arith.constant 0 : index
    %c0_13 = arith.constant 0 : index
    %c0_14 = arith.constant 0 : index
    %6 = vector.load %arg4[%c0_11, %c0_12, %c0_13, %c0_14] : memref<1x1x8x8xf32, #tpu.memory_space<vmem>>, vector<1x1x8x8xf32>
    %7 = vector.shape_cast %6 : vector<1x1x8x8xf32> to vector<8x8xf32>
    %cst = arith.constant 0.353553385 : f32
    %8 = vector.broadcast %cst : f32 to vector<4x8x8xf32>
    %9 = arith.mulf %1, %8 : vector<4x8x8xf32>
    %10 = arith.truncf %9 : vector<4x8x8xf32> to vector<4x8x8xbf16>
    %11 = arith.truncf %3 : vector<4x8x8xf32> to vector<4x8x8xbf16>
    %12 = arith.truncf %5 : vector<4x8x8xf32> to vector<4x8x8xbf16>
    "tpu.trace_start"() <{level = 10 : i32, message = "hqd,hkd->hqk"}> : () -> ()
    %cst_15 = arith.constant dense<0.000000e+00> : vector<4x8x8xf32>
    %13 = tpu.matmul %10, %11, %cst_15 {dimension_numbers = #tpu.dot_dimension_numbers<[2], [2], [1], [1], [0, 0, 0, 1, 1, 1], [0], [0]>} : vector<4x8x8xbf16>, vector<4x8x8xbf16>, vector<4x8x8xf32> -> vector<4x8x8xf32>
    "tpu.trace_stop"() : () -> ()
    %14 = vector.shape_cast %7 : vector<8x8xf32> to vector<1x8x8xf32>
    %cst_16 = arith.constant 5.000000e-01 : f32
    %15 = vector.broadcast %cst_16 : f32 to vector<1x8x8xf32>
    %16 = arith.cmpf olt, %14, %15 : vector<1x8x8xf32>
    %cst_17 = arith.constant -1.000000e+10 : f32
    %17 = vector.shape_cast %16 : vector<1x8x8xi1> to vector<1x8x8xi1>
    %18 = vector.broadcast %17 : vector<1x8x8xi1> to vector<4x8x8xi1>
    %19 = vector.broadcast %cst_17 : f32 to vector<4x8x8xf32>
    %20 = arith.select %18, %19, %13 : vector<4x8x8xi1>, vector<4x8x8xf32>
    %cst_18 = arith.constant dense<0xFF800000> : vector<4x8xf32>
    %21 = vector.multi_reduction <maximumf>, %20, %cst_18 [2] : vector<4x8x8xf32> to vector<4x8xf32>
    %22 = vector.shape_cast %21 : vector<4x8xf32> to vector<4x8x1xf32>
    %23 = vector.broadcast %22 : vector<4x8x1xf32> to vector<4x8x8xf32>
    %24 = arith.subf %20, %23 : vector<4x8x8xf32>
    %25 = math.exp %24 : vector<4x8x8xf32>
    %cst_19 = arith.constant dense<0.000000e+00> : vector<4x8xf32>
    %26 = vector.multi_reduction <add>, %25, %cst_19 [2] : vector<4x8x8xf32> to vector<4x8xf32>
    %27 = vector.shape_cast %26 : vector<4x8xf32> to vector<4x8x1xf32>
    %28 = tpu.reciprocal %27 {approx = true} : vector<4x8x1xf32> -> vector<4x8x1xf32>
    %29 = vector.broadcast %28 : vector<4x8x1xf32> to vector<4x8x8xf32>
    %30 = arith.mulf %25, %29 : vector<4x8x8xf32>
    %31 = arith.truncf %30 : vector<4x8x8xf32> to vector<4x8x8xbf16>
    "tpu.trace_start"() <{level = 10 : i32, message = "hqk,hkd->hqd"}> : () -> ()
    %cst_20 = arith.constant dense<0.000000e+00> : vector<4x8x8xf32>
    %32 = tpu.matmul %31, %12, %cst_20 {dimension_numbers = #tpu.dot_dimension_numbers<[2], [1], [1], [2], [0, 0, 0, 1, 1, 2], [0], [0]>} : vector<4x8x8xbf16>, vector<4x8x8xbf16>, vector<4x8x8xf32> -> vector<4x8x8xf32>
    "tpu.trace_stop"() : () -> ()
    %c0_21 = arith.constant 0 : index
    %c0_22 = arith.constant 0 : index
    %c0_23 = arith.constant 0 : index
    %c0_24 = arith.constant 0 : index
    %33 = vector.load %arg5[%c0_21, %c0_22, %c0_23, %c0_24] : memref<1x4x8x8xf32, #tpu.memory_space<vmem>>, vector<1x4x8x8xf32>
    %34 = vector.shape_cast %33 : vector<1x4x8x8xf32> to vector<4x8x8xf32>
    %35 = vector.shape_cast %32 : vector<4x8x8xf32> to vector<1x4x8x8xf32>
    tpu.vector_store %arg5[%c0_21, %c0_22, %c0_23, %c0_24], %35 {strides = array<i32>} : memref<1x4x8x8xf32, #tpu.memory_space<vmem>>, vector<1x4x8x8xf32>,
    return
  }
  func.func @transform_0(%arg0: i32) -> (i32, i32, i32, i32) {
    %c0_i32 = arith.constant 0 : i32
    %0 = arith.addi %c0_i32, %arg0 : i32
    %c0_i32_0 = arith.constant 0 : i32
    %c0_i32_1 = arith.constant 0 : i32
    %c0_i32_2 = arith.constant 0 : i32
    %c0_i32_3 = arith.constant 0 : i32
    return %0, %c0_i32_0, %c0_i32_1, %c0_i32_2 : i32, i32, i32, i32
  }
  func.func @transform_1(%arg0: i32) -> (i32, i32, i32, i32) {
    %c2_i32 = arith.constant 2 : i32
    %0 = arith.addi %c2_i32, %arg0 : i32
    %c0_i32 = arith.constant 0 : i32
    %c0_i32_0 = arith.constant 0 : i32
    %c0_i32_1 = arith.constant 0 : i32
    %c0_i32_2 = arith.constant 0 : i32
    return %0, %c0_i32, %c0_i32_0, %c0_i32_1 : i32, i32, i32, i32
  }
  func.func @transform_2(%arg0: i32) -> (i32, i32, i32, i32) {
    %c4_i32 = arith.constant 4 : i32
    %0 = arith.addi %c4_i32, %arg0 : i32
    %c0_i32 = arith.constant 0 : i32
    %c0_i32_0 = arith.constant 0 : i32
    %c0_i32_1 = arith.constant 0 : i32
    %c0_i32_2 = arith.constant 0 : i32
    return %0, %c0_i32, %c0_i32_0, %c0_i32_1 : i32, i32, i32, i32
  }
  func.func @transform_3(%arg0: i32) -> (i32, i32, i32, i32) {
    %c0_i32 = arith.constant 0 : i32
    %c0_i32_0 = arith.constant 0 : i32
    %c0_i32_1 = arith.constant 0 : i32
    %c0_i32_2 = arith.constant 0 : i32
    return %arg0, %c0_i32, %c0_i32_0, %c0_i32_1 : i32, i32, i32, i32
  }
  func.func @transform_4(%arg0: i32) -> (i32, i32, i32, i32) {
    %c0_i32 = arith.constant 0 : i32
    %c0_i32_0 = arith.constant 0 : i32
    %c0_i32_1 = arith.constant 0 : i32
    %c0_i32_2 = arith.constant 0 : i32
    return %arg0, %c0_i32, %c0_i32_0, %c0_i32_1 : i32, i32, i32, i32
  }
}

module attributes {stable_mosaic.version = 11 : i64} {
  func.func @_linear_kernel(%arg0: i32, %arg1: i32, %arg2: i32, %arg3: i32, %arg4: memref<16x32xbf16, #tpu.memory_space<vmem>>, %arg5: memref<1x32x32xbf16, #tpu.memory_space<vmem>>, %arg6: memref<1x1x32xf32, #tpu.memory_space<vmem>>, %arg7: memref<1x16x32xf32, #tpu.memory_space<vmem>>, %arg8: memref<16x32xf32, #tpu.memory_space<vmem>>) attributes {dimension_semantics = [#tpu.dimension_semantics<parallel>, #tpu.dimension_semantics<parallel>, #tpu.dimension_semantics<parallel>, #tpu.dimension_semantics<arbitrary>], iteration_bounds = array<i64: 3, 1, 1, 1>, scalar_prefetch = 0 : i64, scratch_operands = 1 : i64, tpu.core_type = #tpu.core_type<tc>, window_params = [{transform_indices = @transform_0, window_bounds = array<i64: 16, 32>}, {transform_indices = @transform_1, window_bounds = array<i64: 1, 32, 32>}, {transform_indices = @transform_2, window_bounds = array<i64: 1, 1, 32>}, {transform_indices = @transform_3, window_bounds = array<i64: 1, 16, 32>}]} {
    %c0_i32 = arith.constant 0 : i32
    %0 = arith.cmpi eq, %arg3, %c0_i32 : i32
    %1 = arith.extui %0 : i1 to i32
    %c0_i32_0 = arith.constant 0 : i32
    %2 = arith.cmpi ne, %1, %c0_i32_0 : i32
    scf.if %2 {
      %cst_11 = arith.constant 0.000000e+00 : f32
      %13 = vector.broadcast %cst_11 : f32 to vector<16x32xf32>
      %c0_12 = arith.constant 0 : index
      %c0_13 = arith.constant 0 : index
      %14 = vector.load %arg8[%c0_12, %c0_13] : memref<16x32xf32, #tpu.memory_space<vmem>>, vector<16x32xf32>
      tpu.vector_store %arg8[%c0_12, %c0_13], %13 {strides = array<i32>} : memref<16x32xf32, #tpu.memory_space<vmem>>, vector<16x32xf32>,
    } else {
    }
    %c0 = arith.constant 0 : index
    %c0_1 = arith.constant 0 : index
    %3 = vector.load %arg8[%c0, %c0_1] : memref<16x32xf32, #tpu.memory_space<vmem>>, vector<16x32xf32>
    %c0_2 = arith.constant 0 : index
    %c0_3 = arith.constant 0 : index
    %4 = vector.load %arg4[%c0_2, %c0_3] : memref<16x32xbf16, #tpu.memory_space<vmem>>, vector<16x32xbf16>
    %c0_4 = arith.constant 0 : index
    %c0_5 = arith.constant 0 : index
    %c0_6 = arith.constant 0 : index
    %5 = vector.load %arg5[%c0_4, %c0_5, %c0_6] : memref<1x32x32xbf16, #tpu.memory_space<vmem>>, vector<1x32x32xbf16>
    %6 = vector.shape_cast %5 : vector<1x32x32xbf16> to vector<32x32xbf16>
    %cst = arith.constant dense<0.000000e+00> : vector<16x32xf32>
    %7 = tpu.matmul %4, %6, %cst {dimension_numbers = #tpu.dot_dimension_numbers<[1], [0], [0], [1], [0, 0, 1, 1], [], []>} : vector<16x32xbf16>, vector<32x32xbf16>, vector<16x32xf32> -> vector<16x32xf32>
    %8 = arith.addf %3, %7 : vector<16x32xf32>
    %c0_7 = arith.constant 0 : index
    %c0_8 = arith.constant 0 : index
    %9 = vector.load %arg8[%c0_7, %c0_8] : memref<16x32xf32, #tpu.memory_space<vmem>>, vector<16x32xf32>
    tpu.vector_store %arg8[%c0_7, %c0_8], %8 {strides = array<i32>} : memref<16x32xf32, #tpu.memory_space<vmem>>, vector<16x32xf32>,
    %c0_i32_9 = arith.constant 0 : i32
    %10 = arith.cmpi eq, %arg3, %c0_i32_9 : i32
    %11 = arith.extui %10 : i1 to i32
    %c0_i32_10 = arith.constant 0 : i32
    %12 = arith.cmpi ne, %11, %c0_i32_10 : i32
    scf.if %12 {
      %c0_11 = arith.constant 0 : index
      %c0_12 = arith.constant 0 : index
      %13 = vector.load %arg8[%c0_11, %c0_12] : memref<16x32xf32, #tpu.memory_space<vmem>>, vector<16x32xf32>
      %c0_13 = arith.constant 0 : index
      %c0_14 = arith.constant 0 : index
      %c0_15 = arith.constant 0 : index
      %14 = vector.load %arg6[%c0_13, %c0_14, %c0_15] : memref<1x1x32xf32, #tpu.memory_space<vmem>>, vector<1x1x32xf32>
      %15 = vector.shape_cast %14 : vector<1x1x32xf32> to vector<1x32xf32>
      %16 = vector.broadcast %15 : vector<1x32xf32> to vector<16x32xf32>
      %17 = arith.addf %13, %16 : vector<16x32xf32>
      %c0_16 = arith.constant 0 : index
      %c0_17 = arith.constant 0 : index
      %c0_18 = arith.constant 0 : index
      %18 = vector.load %arg7[%c0_16, %c0_17, %c0_18] : memref<1x16x32xf32, #tpu.memory_space<vmem>>, vector<1x16x32xf32>
      %19 = vector.shape_cast %18 : vector<1x16x32xf32> to vector<16x32xf32>
      %20 = vector.shape_cast %17 : vector<16x32xf32> to vector<1x16x32xf32>
      tpu.vector_store %arg7[%c0_16, %c0_17, %c0_18], %20 {strides = array<i32>} : memref<1x16x32xf32, #tpu.memory_space<vmem>>, vector<1x16x32xf32>,
    } else {
    }
    return
  }
  func.func @transform_0(%arg0: i32, %arg1: i32, %arg2: i32, %arg3: i32) -> (i32, i32) {
    %c0_i32 = arith.constant 0 : i32
    return %arg1, %arg3 : i32, i32
  }
  func.func @transform_1(%arg0: i32, %arg1: i32, %arg2: i32, %arg3: i32) -> (i32, i32, i32) {
    %c0_i32 = arith.constant 0 : i32
    return %arg0, %arg3, %arg2 : i32, i32, i32
  }
  func.func @transform_2(%arg0: i32, %arg1: i32, %arg2: i32, %arg3: i32) -> (i32, i32, i32) {
    %c0_i32 = arith.constant 0 : i32
    %c0_i32_0 = arith.constant 0 : i32
    return %arg0, %c0_i32, %arg2 : i32, i32, i32
  }
  func.func @transform_3(%arg0: i32, %arg1: i32, %arg2: i32, %arg3: i32) -> (i32, i32, i32) {
    %c0_i32 = arith.constant 0 : i32
    return %arg0, %arg1, %arg2 : i32, i32, i32
  }
}

module attributes {stable_mosaic.version = 11 : i64} {
  func.func @_linear_kernel(%arg0: i32, %arg1: i32, %arg2: i32, %arg3: i32, %arg4: memref<16x32xbf16, #tpu.memory_space<vmem>>, %arg5: memref<1x32x32xbf16, #tpu.memory_space<vmem>>, %arg6: memref<1x1x32xf32, #tpu.memory_space<vmem>>, %arg7: memref<1x16x32xf32, #tpu.memory_space<vmem>>, %arg8: memref<16x32xf32, #tpu.memory_space<vmem>>) attributes {dimension_semantics = [#tpu.dimension_semantics<parallel>, #tpu.dimension_semantics<parallel>, #tpu.dimension_semantics<parallel>, #tpu.dimension_semantics<arbitrary>], iteration_bounds = array<i64: 1, 1, 1, 1>, scalar_prefetch = 0 : i64, scratch_operands = 1 : i64, tpu.core_type = #tpu.core_type<tc>, window_params = [{transform_indices = @transform_0, window_bounds = array<i64: 16, 32>}, {transform_indices = @transform_1, window_bounds = array<i64: 1, 32, 32>}, {transform_indices = @transform_2, window_bounds = array<i64: 1, 1, 32>}, {transform_indices = @transform_3, window_bounds = array<i64: 1, 16, 32>}]} {
    %c0_i32 = arith.constant 0 : i32
    %0 = arith.cmpi eq, %arg3, %c0_i32 : i32
    %1 = arith.extui %0 : i1 to i32
    %c0_i32_0 = arith.constant 0 : i32
    %2 = arith.cmpi ne, %1, %c0_i32_0 : i32
    scf.if %2 {
      %cst_11 = arith.constant 0.000000e+00 : f32
      %13 = vector.broadcast %cst_11 : f32 to vector<16x32xf32>
      %c0_12 = arith.constant 0 : index
      %c0_13 = arith.constant 0 : index
      %14 = vector.load %arg8[%c0_12, %c0_13] : memref<16x32xf32, #tpu.memory_space<vmem>>, vector<16x32xf32>
      tpu.vector_store %arg8[%c0_12, %c0_13], %13 {strides = array<i32>} : memref<16x32xf32, #tpu.memory_space<vmem>>, vector<16x32xf32>,
    } else {
    }
    %c0 = arith.constant 0 : index
    %c0_1 = arith.constant 0 : index
    %3 = vector.load %arg8[%c0, %c0_1] : memref<16x32xf32, #tpu.memory_space<vmem>>, vector<16x32xf32>
    %c0_2 = arith.constant 0 : index
    %c0_3 = arith.constant 0 : index
    %4 = vector.load %arg4[%c0_2, %c0_3] : memref<16x32xbf16, #tpu.memory_space<vmem>>, vector<16x32xbf16>
    %c0_4 = arith.constant 0 : index
    %c0_5 = arith.constant 0 : index
    %c0_6 = arith.constant 0 : index
    %5 = vector.load %arg5[%c0_4, %c0_5, %c0_6] : memref<1x32x32xbf16, #tpu.memory_space<vmem>>, vector<1x32x32xbf16>
    %6 = vector.shape_cast %5 : vector<1x32x32xbf16> to vector<32x32xbf16>
    %cst = arith.constant dense<0.000000e+00> : vector<16x32xf32>
    %7 = tpu.matmul %4, %6, %cst {dimension_numbers = #tpu.dot_dimension_numbers<[1], [0], [0], [1], [0, 0, 1, 1], [], []>} : vector<16x32xbf16>, vector<32x32xbf16>, vector<16x32xf32> -> vector<16x32xf32>
    %8 = arith.addf %3, %7 : vector<16x32xf32>
    %c0_7 = arith.constant 0 : index
    %c0_8 = arith.constant 0 : index
    %9 = vector.load %arg8[%c0_7, %c0_8] : memref<16x32xf32, #tpu.memory_space<vmem>>, vector<16x32xf32>
    tpu.vector_store %arg8[%c0_7, %c0_8], %8 {strides = array<i32>} : memref<16x32xf32, #tpu.memory_space<vmem>>, vector<16x32xf32>,
    %c0_i32_9 = arith.constant 0 : i32
    %10 = arith.cmpi eq, %arg3, %c0_i32_9 : i32
    %11 = arith.extui %10 : i1 to i32
    %c0_i32_10 = arith.constant 0 : i32
    %12 = arith.cmpi ne, %11, %c0_i32_10 : i32
    scf.if %12 {
      %c0_11 = arith.constant 0 : index
      %c0_12 = arith.constant 0 : index
      %13 = vector.load %arg8[%c0_11, %c0_12] : memref<16x32xf32, #tpu.memory_space<vmem>>, vector<16x32xf32>
      %c0_13 = arith.constant 0 : index
      %c0_14 = arith.constant 0 : index
      %c0_15 = arith.constant 0 : index
      %14 = vector.load %arg6[%c0_13, %c0_14, %c0_15] : memref<1x1x32xf32, #tpu.memory_space<vmem>>, vector<1x1x32xf32>
      %15 = vector.shape_cast %14 : vector<1x1x32xf32> to vector<1x32xf32>
      %16 = vector.broadcast %15 : vector<1x32xf32> to vector<16x32xf32>
      %17 = arith.addf %13, %16 : vector<16x32xf32>
      %c0_16 = arith.constant 0 : index
      %c0_17 = arith.constant 0 : index
      %c0_18 = arith.constant 0 : index
      %18 = vector.load %arg7[%c0_16, %c0_17, %c0_18] : memref<1x16x32xf32, #tpu.memory_space<vmem>>, vector<1x16x32xf32>
      %19 = vector.shape_cast %18 : vector<1x16x32xf32> to vector<16x32xf32>
      %20 = vector.shape_cast %17 : vector<16x32xf32> to vector<1x16x32xf32>
      tpu.vector_store %arg7[%c0_16, %c0_17, %c0_18], %20 {strides = array<i32>} : memref<1x16x32xf32, #tpu.memory_space<vmem>>, vector<1x16x32xf32>,
    } else {
    }
    return
  }
  func.func @transform_0(%arg0: i32, %arg1: i32, %arg2: i32, %arg3: i32) -> (i32, i32) {
    %c0_i32 = arith.constant 0 : i32
    return %arg1, %arg3 : i32, i32
  }
  func.func @transform_1(%arg0: i32, %arg1: i32, %arg2: i32, %arg3: i32) -> (i32, i32, i32) {
    %c0_i32 = arith.constant 0 : i32
    return %arg0, %arg3, %arg2 : i32, i32, i32
  }
  func.func @transform_2(%arg0: i32, %arg1: i32, %arg2: i32, %arg3: i32) -> (i32, i32, i32) {
    %c0_i32 = arith.constant 0 : i32
    %c0_i32_0 = arith.constant 0 : i32
    return %arg0, %c0_i32, %arg2 : i32, i32, i32
  }
  func.func @transform_3(%arg0: i32, %arg1: i32, %arg2: i32, %arg3: i32) -> (i32, i32, i32) {
    %c0_i32 = arith.constant 0 : i32
    return %arg0, %arg1, %arg2 : i32, i32, i32
  }
}

module attributes {stable_mosaic.version = 11 : i64} {
  func.func @_add_layernorm_kernel(%arg0: i32, %arg1: memref<16x32xf32, #tpu.memory_space<vmem>>, %arg2: memref<16x32xf32, #tpu.memory_space<vmem>>, %arg3: memref<1x32xf32, #tpu.memory_space<vmem>>, %arg4: memref<1x32xf32, #tpu.memory_space<vmem>>, %arg5: memref<16x32xf32, #tpu.memory_space<vmem>>) attributes {dimension_semantics = [#tpu.dimension_semantics<parallel>], iteration_bounds = array<i64: 1>, scalar_prefetch = 0 : i64, scratch_operands = 0 : i64, tpu.core_type = #tpu.core_type<tc>, window_params = [{transform_indices = @transform_0, window_bounds = array<i64: 16, 32>}, {transform_indices = @transform_1, window_bounds = array<i64: 16, 32>}, {pipeline_mode = #tpu.pipeline_mode<synchronous>, transform_indices = @transform_2, window_bounds = array<i64: 1, 32>}, {pipeline_mode = #tpu.pipeline_mode<synchronous>, transform_indices = @transform_3, window_bounds = array<i64: 1, 32>}, {transform_indices = @transform_4, window_bounds = array<i64: 16, 32>}]} {
    %c0 = arith.constant 0 : index
    %c0_0 = arith.constant 0 : index
    %0 = vector.load %arg1[%c0, %c0_0] : memref<16x32xf32, #tpu.memory_space<vmem>>, vector<16x32xf32>
    %c0_1 = arith.constant 0 : index
    %c0_2 = arith.constant 0 : index
    %1 = vector.load %arg2[%c0_1, %c0_2] : memref<16x32xf32, #tpu.memory_space<vmem>>, vector<16x32xf32>
    %2 = arith.addf %0, %1 : vector<16x32xf32>
    %cst = arith.constant dense<0.000000e+00> : vector<16xf32>
    %3 = vector.multi_reduction <add>, %2, %cst [1] : vector<16x32xf32> to vector<16xf32>
    %4 = vector.shape_cast %3 : vector<16xf32> to vector<16x1xf32>
    %cst_3 = arith.constant 3.200000e+01 : f32
    %5 = vector.broadcast %cst_3 : f32 to vector<16x1xf32>
    %6 = arith.divf %4, %5 : vector<16x1xf32>
    %7 = vector.broadcast %6 : vector<16x1xf32> to vector<16x32xf32>
    %8 = arith.subf %2, %7 : vector<16x32xf32>
    %9 = arith.mulf %8, %8 : vector<16x32xf32>
    %cst_4 = arith.constant dense<0.000000e+00> : vector<16xf32>
    %10 = vector.multi_reduction <add>, %9, %cst_4 [1] : vector<16x32xf32> to vector<16xf32>
    %11 = vector.shape_cast %10 : vector<16xf32> to vector<16x1xf32>
    %cst_5 = arith.constant 3.200000e+01 : f32
    %12 = vector.broadcast %cst_5 : f32 to vector<16x1xf32>
    %13 = arith.divf %11, %12 : vector<16x1xf32>
    %cst_6 = arith.constant 9.99999974E-6 : f32
    %14 = vector.broadcast %cst_6 : f32 to vector<16x1xf32>
    %15 = arith.addf %13, %14 : vector<16x1xf32>
    %16 = math.rsqrt %15 : vector<16x1xf32>
    %17 = vector.broadcast %16 : vector<16x1xf32> to vector<16x32xf32>
    %18 = arith.mulf %8, %17 : vector<16x32xf32>
    %c0_7 = arith.constant 0 : index
    %c0_8 = arith.constant 0 : index
    %19 = vector.load %arg3[%c0_7, %c0_8] : memref<1x32xf32, #tpu.memory_space<vmem>>, vector<1x32xf32>
    %20 = vector.broadcast %19 : vector<1x32xf32> to vector<16x32xf32>
    %21 = arith.mulf %18, %20 : vector<16x32xf32>
    %c0_9 = arith.constant 0 : index
    %c0_10 = arith.constant 0 : index
    %22 = vector.load %arg4[%c0_9, %c0_10] : memref<1x32xf32, #tpu.memory_space<vmem>>, vector<1x32xf32>
    %23 = vector.broadcast %22 : vector<1x32xf32> to vector<16x32xf32>
    %24 = arith.addf %21, %23 : vector<16x32xf32>
    %c0_11 = arith.constant 0 : index
    %c0_12 = arith.constant 0 : index
    %25 = vector.load %arg5[%c0_11, %c0_12] : memref<16x32xf32, #tpu.memory_space<vmem>>, vector<16x32xf32>
    tpu.vector_store %arg5[%c0_11, %c0_12], %24 {strides = array<i32>} : memref<16x32xf32, #tpu.memory_space<vmem>>, vector<16x32xf32>,
    return
  }
  func.func @transform_0(%arg0: i32) -> (i32, i32) {
    %c0_i32 = arith.constant 0 : i32
    %c0_i32_0 = arith.constant 0 : i32
    return %arg0, %c0_i32 : i32, i32
  }
  func.func @transform_1(%arg0: i32) -> (i32, i32) {
    %c0_i32 = arith.constant 0 : i32
    %c0_i32_0 = arith.constant 0 : i32
    return %arg0, %c0_i32 : i32, i32
  }
  func.func @transform_2(%arg0: i32) -> (i32, i32) {
    %c0_i32 = arith.constant 0 : i32
    %c0_i32_0 = arith.constant 0 : i32
    %c0_i32_1 = arith.constant 0 : i32
    return %c0_i32, %c0_i32_0 : i32, i32
  }
  func.func @transform_3(%arg0: i32) -> (i32, i32) {
    %c0_i32 = arith.constant 0 : i32
    %c0_i32_0 = arith.constant 0 : i32
    %c0_i32_1 = arith.constant 0 : i32
    return %c0_i32, %c0_i32_0 : i32, i32
  }
  func.func @transform_4(%arg0: i32) -> (i32, i32) {
    %c0_i32 = arith.constant 0 : i32
    %c0_i32_0 = arith.constant 0 : i32
    return %arg0, %c0_i32 : i32, i32
  }
}

module attributes {stable_mosaic.version = 11 : i64} {
  func.func @_linear_kernel(%arg0: i32, %arg1: i32, %arg2: i32, %arg3: i32, %arg4: memref<16x32xbf16, #tpu.memory_space<vmem>>, %arg5: memref<1x32x32xbf16, #tpu.memory_space<vmem>>, %arg6: memref<1x1x32xf32, #tpu.memory_space<vmem>>, %arg7: memref<1x16x32xf32, #tpu.memory_space<vmem>>, %arg8: memref<16x32xf32, #tpu.memory_space<vmem>>) attributes {dimension_semantics = [#tpu.dimension_semantics<parallel>, #tpu.dimension_semantics<parallel>, #tpu.dimension_semantics<parallel>, #tpu.dimension_semantics<arbitrary>], iteration_bounds = array<i64: 2, 1, 1, 1>, scalar_prefetch = 0 : i64, scratch_operands = 1 : i64, tpu.core_type = #tpu.core_type<tc>, window_params = [{transform_indices = @transform_0, window_bounds = array<i64: 16, 32>}, {transform_indices = @transform_1, window_bounds = array<i64: 1, 32, 32>}, {transform_indices = @transform_2, window_bounds = array<i64: 1, 1, 32>}, {transform_indices = @transform_3, window_bounds = array<i64: 1, 16, 32>}]} {
    %c0_i32 = arith.constant 0 : i32
    %0 = arith.cmpi eq, %arg3, %c0_i32 : i32
    %1 = arith.extui %0 : i1 to i32
    %c0_i32_0 = arith.constant 0 : i32
    %2 = arith.cmpi ne, %1, %c0_i32_0 : i32
    scf.if %2 {
      %cst_11 = arith.constant 0.000000e+00 : f32
      %13 = vector.broadcast %cst_11 : f32 to vector<16x32xf32>
      %c0_12 = arith.constant 0 : index
      %c0_13 = arith.constant 0 : index
      %14 = vector.load %arg8[%c0_12, %c0_13] : memref<16x32xf32, #tpu.memory_space<vmem>>, vector<16x32xf32>
      tpu.vector_store %arg8[%c0_12, %c0_13], %13 {strides = array<i32>} : memref<16x32xf32, #tpu.memory_space<vmem>>, vector<16x32xf32>,
    } else {
    }
    %c0 = arith.constant 0 : index
    %c0_1 = arith.constant 0 : index
    %3 = vector.load %arg8[%c0, %c0_1] : memref<16x32xf32, #tpu.memory_space<vmem>>, vector<16x32xf32>
    %c0_2 = arith.constant 0 : index
    %c0_3 = arith.constant 0 : index
    %4 = vector.load %arg4[%c0_2, %c0_3] : memref<16x32xbf16, #tpu.memory_space<vmem>>, vector<16x32xbf16>
    %c0_4 = arith.constant 0 : index
    %c0_5 = arith.constant 0 : index
    %c0_6 = arith.constant 0 : index
    %5 = vector.load %arg5[%c0_4, %c0_5, %c0_6] : memref<1x32x32xbf16, #tpu.memory_space<vmem>>, vector<1x32x32xbf16>
    %6 = vector.shape_cast %5 : vector<1x32x32xbf16> to vector<32x32xbf16>
    %cst = arith.constant dense<0.000000e+00> : vector<16x32xf32>
    %7 = tpu.matmul %4, %6, %cst {dimension_numbers = #tpu.dot_dimension_numbers<[1], [0], [0], [1], [0, 0, 1, 1], [], []>} : vector<16x32xbf16>, vector<32x32xbf16>, vector<16x32xf32> -> vector<16x32xf32>
    %8 = arith.addf %3, %7 : vector<16x32xf32>
    %c0_7 = arith.constant 0 : index
    %c0_8 = arith.constant 0 : index
    %9 = vector.load %arg8[%c0_7, %c0_8] : memref<16x32xf32, #tpu.memory_space<vmem>>, vector<16x32xf32>
    tpu.vector_store %arg8[%c0_7, %c0_8], %8 {strides = array<i32>} : memref<16x32xf32, #tpu.memory_space<vmem>>, vector<16x32xf32>,
    %c0_i32_9 = arith.constant 0 : i32
    %10 = arith.cmpi eq, %arg3, %c0_i32_9 : i32
    %11 = arith.extui %10 : i1 to i32
    %c0_i32_10 = arith.constant 0 : i32
    %12 = arith.cmpi ne, %11, %c0_i32_10 : i32
    scf.if %12 {
      %c0_11 = arith.constant 0 : index
      %c0_12 = arith.constant 0 : index
      %13 = vector.load %arg8[%c0_11, %c0_12] : memref<16x32xf32, #tpu.memory_space<vmem>>, vector<16x32xf32>
      %c0_13 = arith.constant 0 : index
      %c0_14 = arith.constant 0 : index
      %c0_15 = arith.constant 0 : index
      %14 = vector.load %arg6[%c0_13, %c0_14, %c0_15] : memref<1x1x32xf32, #tpu.memory_space<vmem>>, vector<1x1x32xf32>
      %15 = vector.shape_cast %14 : vector<1x1x32xf32> to vector<1x32xf32>
      %16 = vector.broadcast %15 : vector<1x32xf32> to vector<16x32xf32>
      %17 = arith.addf %13, %16 : vector<16x32xf32>
      %c0_16 = arith.constant 0 : index
      %c0_17 = arith.constant 0 : index
      %c0_18 = arith.constant 0 : index
      %18 = vector.load %arg7[%c0_16, %c0_17, %c0_18] : memref<1x16x32xf32, #tpu.memory_space<vmem>>, vector<1x16x32xf32>
      %19 = vector.shape_cast %18 : vector<1x16x32xf32> to vector<16x32xf32>
      %20 = vector.shape_cast %17 : vector<16x32xf32> to vector<1x16x32xf32>
      tpu.vector_store %arg7[%c0_16, %c0_17, %c0_18], %20 {strides = array<i32>} : memref<1x16x32xf32, #tpu.memory_space<vmem>>, vector<1x16x32xf32>,
    } else {
    }
    return
  }
  func.func @transform_0(%arg0: i32, %arg1: i32, %arg2: i32, %arg3: i32) -> (i32, i32) {
    %c0_i32 = arith.constant 0 : i32
    return %arg1, %arg3 : i32, i32
  }
  func.func @transform_1(%arg0: i32, %arg1: i32, %arg2: i32, %arg3: i32) -> (i32, i32, i32) {
    %c0_i32 = arith.constant 0 : i32
    return %arg0, %arg3, %arg2 : i32, i32, i32
  }
  func.func @transform_2(%arg0: i32, %arg1: i32, %arg2: i32, %arg3: i32) -> (i32, i32, i32) {
    %c0_i32 = arith.constant 0 : i32
    %c0_i32_0 = arith.constant 0 : i32
    return %arg0, %c0_i32, %arg2 : i32, i32, i32
  }
  func.func @transform_3(%arg0: i32, %arg1: i32, %arg2: i32, %arg3: i32) -> (i32, i32, i32) {
    %c0_i32 = arith.constant 0 : i32
    return %arg0, %arg1, %arg2 : i32, i32, i32
  }
}

module attributes {stable_mosaic.version = 11 : i64} {
  func.func @_mha_kernel(%arg0: i32, %arg1: memref<1x4x8x8xf32, #tpu.memory_space<vmem>>, %arg2: memref<1x4x8x8xf32, #tpu.memory_space<vmem>>, %arg3: memref<1x4x8x8xf32, #tpu.memory_space<vmem>>, %arg4: memref<1x1x8x8xf32, #tpu.memory_space<vmem>>, %arg5: memref<1x4x8x8xf32, #tpu.memory_space<vmem>>) attributes {dimension_semantics = [#tpu.dimension_semantics<parallel>], iteration_bounds = array<i64: 2>, scalar_prefetch = 0 : i64, scratch_operands = 0 : i64, tpu.core_type = #tpu.core_type<tc>, window_params = [{transform_indices = @transform_0, window_bounds = array<i64: 1, 4, 8, 8>}, {transform_indices = @transform_1, window_bounds = array<i64: 1, 4, 8, 8>}, {transform_indices = @transform_2, window_bounds = array<i64: 1, 4, 8, 8>}, {transform_indices = @transform_3, window_bounds = array<i64: 1, 1, 8, 8>}, {transform_indices = @transform_4, window_bounds = array<i64: 1, 4, 8, 8>}]} {
    %c0 = arith.constant 0 : index
    %c0_0 = arith.constant 0 : index
    %c0_1 = arith.constant 0 : index
    %c0_2 = arith.constant 0 : index
    %0 = vector.load %arg1[%c0, %c0_0, %c0_1, %c0_2] : memref<1x4x8x8xf32, #tpu.memory_space<vmem>>, vector<1x4x8x8xf32>
    %1 = vector.shape_cast %0 : vector<1x4x8x8xf32> to vector<4x8x8xf32>
    %c0_3 = arith.constant 0 : index
    %c0_4 = arith.constant 0 : index
    %c0_5 = arith.constant 0 : index
    %c0_6 = arith.constant 0 : index
    %2 = vector.load %arg2[%c0_3, %c0_4, %c0_5, %c0_6] : memref<1x4x8x8xf32, #tpu.memory_space<vmem>>, vector<1x4x8x8xf32>
    %3 = vector.shape_cast %2 : vector<1x4x8x8xf32> to vector<4x8x8xf32>
    %c0_7 = arith.constant 0 : index
    %c0_8 = arith.constant 0 : index
    %c0_9 = arith.constant 0 : index
    %c0_10 = arith.constant 0 : index
    %4 = vector.load %arg3[%c0_7, %c0_8, %c0_9, %c0_10] : memref<1x4x8x8xf32, #tpu.memory_space<vmem>>, vector<1x4x8x8xf32>
    %5 = vector.shape_cast %4 : vector<1x4x8x8xf32> to vector<4x8x8xf32>
    %c0_11 = arith.constant 0 : index
    %c0_12 = arith.constant 0 : index
    %c0_13 = arith.constant 0 : index
    %c0_14 = arith.constant 0 : index
    %6 = vector.load %arg4[%c0_11, %c0_12, %c0_13, %c0_14] : memref<1x1x8x8xf32, #tpu.memory_space<vmem>>, vector<1x1x8x8xf32>
    %7 = vector.shape_cast %6 : vector<1x1x8x8xf32> to vector<8x8xf32>
    %cst = arith.constant 0.353553385 : f32
    %8 = vector.broadcast %cst : f32 to vector<4x8x8xf32>
    %9 = arith.mulf %1, %8 : vector<4x8x8xf32>
    %10 = arith.truncf %9 : vector<4x8x8xf32> to vector<4x8x8xbf16>
    %11 = arith.truncf %3 : vector<4x8x8xf32> to vector<4x8x8xbf16>
    %12 = arith.truncf %5 : vector<4x8x8xf32> to vector<4x8x8xbf16>
    "tpu.trace_start"() <{level = 10 : i32, message = "hqd,hkd->hqk"}> : () -> ()
    %cst_15 = arith.constant dense<0.000000e+00> : vector<4x8x8xf32>
    %13 = tpu.matmul %10, %11, %cst_15 {dimension_numbers = #tpu.dot_dimension_numbers<[2], [2], [1], [1], [0, 0, 0, 1, 1, 1], [0], [0]>} : vector<4x8x8xbf16>, vector<4x8x8xbf16>, vector<4x8x8xf32> -> vector<4x8x8xf32>
    "tpu.trace_stop"() : () -> ()
    %14 = vector.shape_cast %7 : vector<8x8xf32> to vector<1x8x8xf32>
    %cst_16 = arith.constant 5.000000e-01 : f32
    %15 = vector.broadcast %cst_16 : f32 to vector<1x8x8xf32>
    %16 = arith.cmpf olt, %14, %15 : vector<1x8x8xf32>
    %cst_17 = arith.constant -1.000000e+10 : f32
    %17 = vector.shape_cast %16 : vector<1x8x8xi1> to vector<1x8x8xi1>
    %18 = vector.broadcast %17 : vector<1x8x8xi1> to vector<4x8x8xi1>
    %19 = vector.broadcast %cst_17 : f32 to vector<4x8x8xf32>
    %20 = arith.select %18, %19, %13 : vector<4x8x8xi1>, vector<4x8x8xf32>
    %cst_18 = arith.constant dense<0xFF800000> : vector<4x8xf32>
    %21 = vector.multi_reduction <maximumf>, %20, %cst_18 [2] : vector<4x8x8xf32> to vector<4x8xf32>
    %22 = vector.shape_cast %21 : vector<4x8xf32> to vector<4x8x1xf32>
    %23 = vector.broadcast %22 : vector<4x8x1xf32> to vector<4x8x8xf32>
    %24 = arith.subf %20, %23 : vector<4x8x8xf32>
    %25 = math.exp %24 : vector<4x8x8xf32>
    %cst_19 = arith.constant dense<0.000000e+00> : vector<4x8xf32>
    %26 = vector.multi_reduction <add>, %25, %cst_19 [2] : vector<4x8x8xf32> to vector<4x8xf32>
    %27 = vector.shape_cast %26 : vector<4x8xf32> to vector<4x8x1xf32>
    %28 = tpu.reciprocal %27 {approx = true} : vector<4x8x1xf32> -> vector<4x8x1xf32>
    %29 = vector.broadcast %28 : vector<4x8x1xf32> to vector<4x8x8xf32>
    %30 = arith.mulf %25, %29 : vector<4x8x8xf32>
    %31 = arith.truncf %30 : vector<4x8x8xf32> to vector<4x8x8xbf16>
    "tpu.trace_start"() <{level = 10 : i32, message = "hqk,hkd->hqd"}> : () -> ()
    %cst_20 = arith.constant dense<0.000000e+00> : vector<4x8x8xf32>
    %32 = tpu.matmul %31, %12, %cst_20 {dimension_numbers = #tpu.dot_dimension_numbers<[2], [1], [1], [2], [0, 0, 0, 1, 1, 2], [0], [0]>} : vector<4x8x8xbf16>, vector<4x8x8xbf16>, vector<4x8x8xf32> -> vector<4x8x8xf32>
    "tpu.trace_stop"() : () -> ()
    %c0_21 = arith.constant 0 : index
    %c0_22 = arith.constant 0 : index
    %c0_23 = arith.constant 0 : index
    %c0_24 = arith.constant 0 : index
    %33 = vector.load %arg5[%c0_21, %c0_22, %c0_23, %c0_24] : memref<1x4x8x8xf32, #tpu.memory_space<vmem>>, vector<1x4x8x8xf32>
    %34 = vector.shape_cast %33 : vector<1x4x8x8xf32> to vector<4x8x8xf32>
    %35 = vector.shape_cast %32 : vector<4x8x8xf32> to vector<1x4x8x8xf32>
    tpu.vector_store %arg5[%c0_21, %c0_22, %c0_23, %c0_24], %35 {strides = array<i32>} : memref<1x4x8x8xf32, #tpu.memory_space<vmem>>, vector<1x4x8x8xf32>,
    return
  }
  func.func @transform_0(%arg0: i32) -> (i32, i32, i32, i32) {
    %c0_i32 = arith.constant 0 : i32
    %0 = arith.addi %c0_i32, %arg0 : i32
    %c0_i32_0 = arith.constant 0 : i32
    %c0_i32_1 = arith.constant 0 : i32
    %c0_i32_2 = arith.constant 0 : i32
    %c0_i32_3 = arith.constant 0 : i32
    return %0, %c0_i32_0, %c0_i32_1, %c0_i32_2 : i32, i32, i32, i32
  }
  func.func @transform_1(%arg0: i32) -> (i32, i32, i32, i32) {
    %c0_i32 = arith.constant 0 : i32
    %0 = arith.addi %c0_i32, %arg0 : i32
    %c0_i32_0 = arith.constant 0 : i32
    %c0_i32_1 = arith.constant 0 : i32
    %c0_i32_2 = arith.constant 0 : i32
    %c0_i32_3 = arith.constant 0 : i32
    return %0, %c0_i32_0, %c0_i32_1, %c0_i32_2 : i32, i32, i32, i32
  }
  func.func @transform_2(%arg0: i32) -> (i32, i32, i32, i32) {
    %c2_i32 = arith.constant 2 : i32
    %0 = arith.addi %c2_i32, %arg0 : i32
    %c0_i32 = arith.constant 0 : i32
    %c0_i32_0 = arith.constant 0 : i32
    %c0_i32_1 = arith.constant 0 : i32
    %c0_i32_2 = arith.constant 0 : i32
    return %0, %c0_i32, %c0_i32_0, %c0_i32_1 : i32, i32, i32, i32
  }
  func.func @transform_3(%arg0: i32) -> (i32, i32, i32, i32) {
    %c0_i32 = arith.constant 0 : i32
    %c0_i32_0 = arith.constant 0 : i32
    %c0_i32_1 = arith.constant 0 : i32
    %c0_i32_2 = arith.constant 0 : i32
    return %arg0, %c0_i32, %c0_i32_0, %c0_i32_1 : i32, i32, i32, i32
  }
  func.func @transform_4(%arg0: i32) -> (i32, i32, i32, i32) {
    %c0_i32 = arith.constant 0 : i32
    %c0_i32_0 = arith.constant 0 : i32
    %c0_i32_1 = arith.constant 0 : i32
    %c0_i32_2 = arith.constant 0 : i32
    return %arg0, %c0_i32, %c0_i32_0, %c0_i32_1 : i32, i32, i32, i32
  }
}

module attributes {stable_mosaic.version = 11 : i64} {
  func.func @_linear_kernel(%arg0: i32, %arg1: i32, %arg2: i32, %arg3: i32, %arg4: memref<16x32xbf16, #tpu.memory_space<vmem>>, %arg5: memref<1x32x64xbf16, #tpu.memory_space<vmem>>, %arg6: memref<1x1x64xf32, #tpu.memory_space<vmem>>, %arg7: memref<1x16x64xf32, #tpu.memory_space<vmem>>, %arg8: memref<16x64xf32, #tpu.memory_space<vmem>>) attributes {dimension_semantics = [#tpu.dimension_semantics<parallel>, #tpu.dimension_semantics<parallel>, #tpu.dimension_semantics<parallel>, #tpu.dimension_semantics<arbitrary>], iteration_bounds = array<i64: 1, 1, 1, 1>, scalar_prefetch = 0 : i64, scratch_operands = 1 : i64, tpu.core_type = #tpu.core_type<tc>, window_params = [{transform_indices = @transform_0, window_bounds = array<i64: 16, 32>}, {transform_indices = @transform_1, window_bounds = array<i64: 1, 32, 64>}, {transform_indices = @transform_2, window_bounds = array<i64: 1, 1, 64>}, {transform_indices = @transform_3, window_bounds = array<i64: 1, 16, 64>}]} {
    %c0_i32 = arith.constant 0 : i32
    %0 = arith.cmpi eq, %arg3, %c0_i32 : i32
    %1 = arith.extui %0 : i1 to i32
    %c0_i32_0 = arith.constant 0 : i32
    %2 = arith.cmpi ne, %1, %c0_i32_0 : i32
    scf.if %2 {
      %cst_11 = arith.constant 0.000000e+00 : f32
      %13 = vector.broadcast %cst_11 : f32 to vector<16x64xf32>
      %c0_12 = arith.constant 0 : index
      %c0_13 = arith.constant 0 : index
      %14 = vector.load %arg8[%c0_12, %c0_13] : memref<16x64xf32, #tpu.memory_space<vmem>>, vector<16x64xf32>
      tpu.vector_store %arg8[%c0_12, %c0_13], %13 {strides = array<i32>} : memref<16x64xf32, #tpu.memory_space<vmem>>, vector<16x64xf32>,
    } else {
    }
    %c0 = arith.constant 0 : index
    %c0_1 = arith.constant 0 : index
    %3 = vector.load %arg8[%c0, %c0_1] : memref<16x64xf32, #tpu.memory_space<vmem>>, vector<16x64xf32>
    %c0_2 = arith.constant 0 : index
    %c0_3 = arith.constant 0 : index
    %4 = vector.load %arg4[%c0_2, %c0_3] : memref<16x32xbf16, #tpu.memory_space<vmem>>, vector<16x32xbf16>
    %c0_4 = arith.constant 0 : index
    %c0_5 = arith.constant 0 : index
    %c0_6 = arith.constant 0 : index
    %5 = vector.load %arg5[%c0_4, %c0_5, %c0_6] : memref<1x32x64xbf16, #tpu.memory_space<vmem>>, vector<1x32x64xbf16>
    %6 = vector.shape_cast %5 : vector<1x32x64xbf16> to vector<32x64xbf16>
    %cst = arith.constant dense<0.000000e+00> : vector<16x64xf32>
    %7 = tpu.matmul %4, %6, %cst {dimension_numbers = #tpu.dot_dimension_numbers<[1], [0], [0], [1], [0, 0, 1, 1], [], []>} : vector<16x32xbf16>, vector<32x64xbf16>, vector<16x64xf32> -> vector<16x64xf32>
    %8 = arith.addf %3, %7 : vector<16x64xf32>
    %c0_7 = arith.constant 0 : index
    %c0_8 = arith.constant 0 : index
    %9 = vector.load %arg8[%c0_7, %c0_8] : memref<16x64xf32, #tpu.memory_space<vmem>>, vector<16x64xf32>
    tpu.vector_store %arg8[%c0_7, %c0_8], %8 {strides = array<i32>} : memref<16x64xf32, #tpu.memory_space<vmem>>, vector<16x64xf32>,
    %c0_i32_9 = arith.constant 0 : i32
    %10 = arith.cmpi eq, %arg3, %c0_i32_9 : i32
    %11 = arith.extui %10 : i1 to i32
    %c0_i32_10 = arith.constant 0 : i32
    %12 = arith.cmpi ne, %11, %c0_i32_10 : i32
    scf.if %12 {
      %c0_11 = arith.constant 0 : index
      %c0_12 = arith.constant 0 : index
      %13 = vector.load %arg8[%c0_11, %c0_12] : memref<16x64xf32, #tpu.memory_space<vmem>>, vector<16x64xf32>
      %c0_13 = arith.constant 0 : index
      %c0_14 = arith.constant 0 : index
      %c0_15 = arith.constant 0 : index
      %14 = vector.load %arg6[%c0_13, %c0_14, %c0_15] : memref<1x1x64xf32, #tpu.memory_space<vmem>>, vector<1x1x64xf32>
      %15 = vector.shape_cast %14 : vector<1x1x64xf32> to vector<1x64xf32>
      %16 = vector.broadcast %15 : vector<1x64xf32> to vector<16x64xf32>
      %17 = arith.addf %13, %16 : vector<16x64xf32>
      %cst_16 = arith.constant 0.000000e+00 : f32
      %18 = vector.broadcast %cst_16 : f32 to vector<16x64xf32>
      %19 = arith.maximumf %17, %18 : vector<16x64xf32>
      %c0_17 = arith.constant 0 : index
      %c0_18 = arith.constant 0 : index
      %c0_19 = arith.constant 0 : index
      %20 = vector.load %arg7[%c0_17, %c0_18, %c0_19] : memref<1x16x64xf32, #tpu.memory_space<vmem>>, vector<1x16x64xf32>
      %21 = vector.shape_cast %20 : vector<1x16x64xf32> to vector<16x64xf32>
      %22 = vector.shape_cast %19 : vector<16x64xf32> to vector<1x16x64xf32>
      tpu.vector_store %arg7[%c0_17, %c0_18, %c0_19], %22 {strides = array<i32>} : memref<1x16x64xf32, #tpu.memory_space<vmem>>, vector<1x16x64xf32>,
    } else {
    }
    return
  }
  func.func @transform_0(%arg0: i32, %arg1: i32, %arg2: i32, %arg3: i32) -> (i32, i32) {
    %c0_i32 = arith.constant 0 : i32
    return %arg1, %arg3 : i32, i32
  }
  func.func @transform_1(%arg0: i32, %arg1: i32, %arg2: i32, %arg3: i32) -> (i32, i32, i32) {
    %c0_i32 = arith.constant 0 : i32
    return %arg0, %arg3, %arg2 : i32, i32, i32
  }
  func.func @transform_2(%arg0: i32, %arg1: i32, %arg2: i32, %arg3: i32) -> (i32, i32, i32) {
    %c0_i32 = arith.constant 0 : i32
    %c0_i32_0 = arith.constant 0 : i32
    return %arg0, %c0_i32, %arg2 : i32, i32, i32
  }
  func.func @transform_3(%arg0: i32, %arg1: i32, %arg2: i32, %arg3: i32) -> (i32, i32, i32) {
    %c0_i32 = arith.constant 0 : i32
    return %arg0, %arg1, %arg2 : i32, i32, i32
  }
}

module attributes {stable_mosaic.version = 11 : i64} {
  func.func @_linear_kernel(%arg0: i32, %arg1: i32, %arg2: i32, %arg3: i32, %arg4: memref<16x64xbf16, #tpu.memory_space<vmem>>, %arg5: memref<1x64x32xbf16, #tpu.memory_space<vmem>>, %arg6: memref<1x1x32xf32, #tpu.memory_space<vmem>>, %arg7: memref<1x16x32xf32, #tpu.memory_space<vmem>>, %arg8: memref<16x32xf32, #tpu.memory_space<vmem>>) attributes {dimension_semantics = [#tpu.dimension_semantics<parallel>, #tpu.dimension_semantics<parallel>, #tpu.dimension_semantics<parallel>, #tpu.dimension_semantics<arbitrary>], iteration_bounds = array<i64: 1, 1, 1, 1>, scalar_prefetch = 0 : i64, scratch_operands = 1 : i64, tpu.core_type = #tpu.core_type<tc>, window_params = [{transform_indices = @transform_0, window_bounds = array<i64: 16, 64>}, {transform_indices = @transform_1, window_bounds = array<i64: 1, 64, 32>}, {transform_indices = @transform_2, window_bounds = array<i64: 1, 1, 32>}, {transform_indices = @transform_3, window_bounds = array<i64: 1, 16, 32>}]} {
    %c0_i32 = arith.constant 0 : i32
    %0 = arith.cmpi eq, %arg3, %c0_i32 : i32
    %1 = arith.extui %0 : i1 to i32
    %c0_i32_0 = arith.constant 0 : i32
    %2 = arith.cmpi ne, %1, %c0_i32_0 : i32
    scf.if %2 {
      %cst_11 = arith.constant 0.000000e+00 : f32
      %13 = vector.broadcast %cst_11 : f32 to vector<16x32xf32>
      %c0_12 = arith.constant 0 : index
      %c0_13 = arith.constant 0 : index
      %14 = vector.load %arg8[%c0_12, %c0_13] : memref<16x32xf32, #tpu.memory_space<vmem>>, vector<16x32xf32>
      tpu.vector_store %arg8[%c0_12, %c0_13], %13 {strides = array<i32>} : memref<16x32xf32, #tpu.memory_space<vmem>>, vector<16x32xf32>,
    } else {
    }
    %c0 = arith.constant 0 : index
    %c0_1 = arith.constant 0 : index
    %3 = vector.load %arg8[%c0, %c0_1] : memref<16x32xf32, #tpu.memory_space<vmem>>, vector<16x32xf32>
    %c0_2 = arith.constant 0 : index
    %c0_3 = arith.constant 0 : index
    %4 = vector.load %arg4[%c0_2, %c0_3] : memref<16x64xbf16, #tpu.memory_space<vmem>>, vector<16x64xbf16>
    %c0_4 = arith.constant 0 : index
    %c0_5 = arith.constant 0 : index
    %c0_6 = arith.constant 0 : index
    %5 = vector.load %arg5[%c0_4, %c0_5, %c0_6] : memref<1x64x32xbf16, #tpu.memory_space<vmem>>, vector<1x64x32xbf16>
    %6 = vector.shape_cast %5 : vector<1x64x32xbf16> to vector<64x32xbf16>
    %cst = arith.constant dense<0.000000e+00> : vector<16x32xf32>
    %7 = tpu.matmul %4, %6, %cst {dimension_numbers = #tpu.dot_dimension_numbers<[1], [0], [0], [1], [0, 0, 1, 1], [], []>} : vector<16x64xbf16>, vector<64x32xbf16>, vector<16x32xf32> -> vector<16x32xf32>
    %8 = arith.addf %3, %7 : vector<16x32xf32>
    %c0_7 = arith.constant 0 : index
    %c0_8 = arith.constant 0 : index
    %9 = vector.load %arg8[%c0_7, %c0_8] : memref<16x32xf32, #tpu.memory_space<vmem>>, vector<16x32xf32>
    tpu.vector_store %arg8[%c0_7, %c0_8], %8 {strides = array<i32>} : memref<16x32xf32, #tpu.memory_space<vmem>>, vector<16x32xf32>,
    %c0_i32_9 = arith.constant 0 : i32
    %10 = arith.cmpi eq, %arg3, %c0_i32_9 : i32
    %11 = arith.extui %10 : i1 to i32
    %c0_i32_10 = arith.constant 0 : i32
    %12 = arith.cmpi ne, %11, %c0_i32_10 : i32
    scf.if %12 {
      %c0_11 = arith.constant 0 : index
      %c0_12 = arith.constant 0 : index
      %13 = vector.load %arg8[%c0_11, %c0_12] : memref<16x32xf32, #tpu.memory_space<vmem>>, vector<16x32xf32>
      %c0_13 = arith.constant 0 : index
      %c0_14 = arith.constant 0 : index
      %c0_15 = arith.constant 0 : index
      %14 = vector.load %arg6[%c0_13, %c0_14, %c0_15] : memref<1x1x32xf32, #tpu.memory_space<vmem>>, vector<1x1x32xf32>
      %15 = vector.shape_cast %14 : vector<1x1x32xf32> to vector<1x32xf32>
      %16 = vector.broadcast %15 : vector<1x32xf32> to vector<16x32xf32>
      %17 = arith.addf %13, %16 : vector<16x32xf32>
      %c0_16 = arith.constant 0 : index
      %c0_17 = arith.constant 0 : index
      %c0_18 = arith.constant 0 : index
      %18 = vector.load %arg7[%c0_16, %c0_17, %c0_18] : memref<1x16x32xf32, #tpu.memory_space<vmem>>, vector<1x16x32xf32>
      %19 = vector.shape_cast %18 : vector<1x16x32xf32> to vector<16x32xf32>
      %20 = vector.shape_cast %17 : vector<16x32xf32> to vector<1x16x32xf32>
      tpu.vector_store %arg7[%c0_16, %c0_17, %c0_18], %20 {strides = array<i32>} : memref<1x16x32xf32, #tpu.memory_space<vmem>>, vector<1x16x32xf32>,
    } else {
    }
    return
  }
  func.func @transform_0(%arg0: i32, %arg1: i32, %arg2: i32, %arg3: i32) -> (i32, i32) {
    %c0_i32 = arith.constant 0 : i32
    return %arg1, %arg3 : i32, i32
  }
  func.func @transform_1(%arg0: i32, %arg1: i32, %arg2: i32, %arg3: i32) -> (i32, i32, i32) {
    %c0_i32 = arith.constant 0 : i32
    return %arg0, %arg3, %arg2 : i32, i32, i32
  }
  func.func @transform_2(%arg0: i32, %arg1: i32, %arg2: i32, %arg3: i32) -> (i32, i32, i32) {
    %c0_i32 = arith.constant 0 : i32
    %c0_i32_0 = arith.constant 0 : i32
    return %arg0, %c0_i32, %arg2 : i32, i32, i32
  }
  func.func @transform_3(%arg0: i32, %arg1: i32, %arg2: i32, %arg3: i32) -> (i32, i32, i32) {
    %c0_i32 = arith.constant 0 : i32
    return %arg0, %arg1, %arg2 : i32, i32, i32
  }
}

module attributes {stable_mosaic.version = 11 : i64} {
  func.func @_mha_kernel(%arg0: i32, %arg1: memref<1x4x8x8xf32, #tpu.memory_space<vmem>>, %arg2: memref<1x4x8x8xf32, #tpu.memory_space<vmem>>, %arg3: memref<1x4x8x8xf32, #tpu.memory_space<vmem>>, %arg4: memref<1x1x8x8xf32, #tpu.memory_space<vmem>>, %arg5: memref<1x4x8x8xf32, #tpu.memory_space<vmem>>, %arg6: memref<1x4x8x8xf32, #tpu.memory_space<vmem>>) attributes {dimension_semantics = [#tpu.dimension_semantics<parallel>], iteration_bounds = array<i64: 2>, scalar_prefetch = 0 : i64, scratch_operands = 0 : i64, tpu.core_type = #tpu.core_type<tc>, window_params = [{transform_indices = @transform_0, window_bounds = array<i64: 1, 4, 8, 8>}, {transform_indices = @transform_1, window_bounds = array<i64: 1, 4, 8, 8>}, {transform_indices = @transform_2, window_bounds = array<i64: 1, 4, 8, 8>}, {transform_indices = @transform_3, window_bounds = array<i64: 1, 1, 8, 8>}, {transform_indices = @transform_4, window_bounds = array<i64: 1, 4, 8, 8>}, {transform_indices = @transform_5, window_bounds = array<i64: 1, 4, 8, 8>}]} {
    %c0 = arith.constant 0 : index
    %c0_0 = arith.constant 0 : index
    %c0_1 = arith.constant 0 : index
    %c0_2 = arith.constant 0 : index
    %0 = vector.load %arg1[%c0, %c0_0, %c0_1, %c0_2] : memref<1x4x8x8xf32, #tpu.memory_space<vmem>>, vector<1x4x8x8xf32>
    %1 = vector.shape_cast %0 : vector<1x4x8x8xf32> to vector<4x8x8xf32>
    %c0_3 = arith.constant 0 : index
    %c0_4 = arith.constant 0 : index
    %c0_5 = arith.constant 0 : index
    %c0_6 = arith.constant 0 : index
    %2 = vector.load %arg2[%c0_3, %c0_4, %c0_5, %c0_6] : memref<1x4x8x8xf32, #tpu.memory_space<vmem>>, vector<1x4x8x8xf32>
    %3 = vector.shape_cast %2 : vector<1x4x8x8xf32> to vector<4x8x8xf32>
    %c0_7 = arith.constant 0 : index
    %c0_8 = arith.constant 0 : index
    %c0_9 = arith.constant 0 : index
    %c0_10 = arith.constant 0 : index
    %4 = vector.load %arg3[%c0_7, %c0_8, %c0_9, %c0_10] : memref<1x4x8x8xf32, #tpu.memory_space<vmem>>, vector<1x4x8x8xf32>
    %5 = vector.shape_cast %4 : vector<1x4x8x8xf32> to vector<4x8x8xf32>
    %c0_11 = arith.constant 0 : index
    %c0_12 = arith.constant 0 : index
    %c0_13 = arith.constant 0 : index
    %c0_14 = arith.constant 0 : index
    %6 = vector.load %arg4[%c0_11, %c0_12, %c0_13, %c0_14] : memref<1x1x8x8xf32, #tpu.memory_space<vmem>>, vector<1x1x8x8xf32>
    %7 = vector.shape_cast %6 : vector<1x1x8x8xf32> to vector<8x8xf32>
    %cst = arith.constant 0.353553385 : f32
    %8 = vector.broadcast %cst : f32 to vector<4x8x8xf32>
    %9 = arith.mulf %1, %8 : vector<4x8x8xf32>
    %10 = arith.truncf %9 : vector<4x8x8xf32> to vector<4x8x8xbf16>
    %11 = arith.truncf %3 : vector<4x8x8xf32> to vector<4x8x8xbf16>
    %12 = arith.truncf %5 : vector<4x8x8xf32> to vector<4x8x8xbf16>
    "tpu.trace_start"() <{level = 10 : i32, message = "hqd,hkd->hqk"}> : () -> ()
    %cst_15 = arith.constant dense<0.000000e+00> : vector<4x8x8xf32>
    %13 = tpu.matmul %10, %11, %cst_15 {dimension_numbers = #tpu.dot_dimension_numbers<[2], [2], [1], [1], [0, 0, 0, 1, 1, 1], [0], [0]>} : vector<4x8x8xbf16>, vector<4x8x8xbf16>, vector<4x8x8xf32> -> vector<4x8x8xf32>
    "tpu.trace_stop"() : () -> ()
    %14 = vector.shape_cast %7 : vector<8x8xf32> to vector<1x8x8xf32>
    %cst_16 = arith.constant 5.000000e-01 : f32
    %15 = vector.broadcast %cst_16 : f32 to vector<1x8x8xf32>
    %16 = arith.cmpf olt, %14, %15 : vector<1x8x8xf32>
    %cst_17 = arith.constant -1.000000e+10 : f32
    %17 = vector.shape_cast %16 : vector<1x8x8xi1> to vector<1x8x8xi1>
    %18 = vector.broadcast %17 : vector<1x8x8xi1> to vector<4x8x8xi1>
    %19 = vector.broadcast %cst_17 : f32 to vector<4x8x8xf32>
    %20 = arith.select %18, %19, %13 : vector<4x8x8xi1>, vector<4x8x8xf32>
    %cst_18 = arith.constant dense<0xFF800000> : vector<4x8xf32>
    %21 = vector.multi_reduction <maximumf>, %20, %cst_18 [2] : vector<4x8x8xf32> to vector<4x8xf32>
    %22 = vector.shape_cast %21 : vector<4x8xf32> to vector<4x8x1xf32>
    %23 = vector.broadcast %22 : vector<4x8x1xf32> to vector<4x8x8xf32>
    %24 = arith.subf %20, %23 : vector<4x8x8xf32>
    %25 = math.exp %24 : vector<4x8x8xf32>
    %cst_19 = arith.constant dense<0.000000e+00> : vector<4x8xf32>
    %26 = vector.multi_reduction <add>, %25, %cst_19 [2] : vector<4x8x8xf32> to vector<4x8xf32>
    %27 = vector.shape_cast %26 : vector<4x8xf32> to vector<4x8x1xf32>
    %28 = tpu.reciprocal %27 {approx = true} : vector<4x8x1xf32> -> vector<4x8x1xf32>
    %29 = vector.broadcast %28 : vector<4x8x1xf32> to vector<4x8x8xf32>
    %30 = arith.mulf %25, %29 : vector<4x8x8xf32>
    %31 = arith.truncf %30 : vector<4x8x8xf32> to vector<4x8x8xbf16>
    "tpu.trace_start"() <{level = 10 : i32, message = "hqk,hkd->hqd"}> : () -> ()
    %cst_20 = arith.constant dense<0.000000e+00> : vector<4x8x8xf32>
    %32 = tpu.matmul %31, %12, %cst_20 {dimension_numbers = #tpu.dot_dimension_numbers<[2], [1], [1], [2], [0, 0, 0, 1, 1, 2], [0], [0]>} : vector<4x8x8xbf16>, vector<4x8x8xbf16>, vector<4x8x8xf32> -> vector<4x8x8xf32>
    "tpu.trace_stop"() : () -> ()
    %c0_21 = arith.constant 0 : index
    %c0_22 = arith.constant 0 : index
    %c0_23 = arith.constant 0 : index
    %c0_24 = arith.constant 0 : index
    %33 = vector.load %arg5[%c0_21, %c0_22, %c0_23, %c0_24] : memref<1x4x8x8xf32, #tpu.memory_space<vmem>>, vector<1x4x8x8xf32>
    %34 = vector.shape_cast %33 : vector<1x4x8x8xf32> to vector<4x8x8xf32>
    %35 = vector.shape_cast %32 : vector<4x8x8xf32> to vector<1x4x8x8xf32>
    tpu.vector_store %arg5[%c0_21, %c0_22, %c0_23, %c0_24], %35 {strides = array<i32>} : memref<1x4x8x8xf32, #tpu.memory_space<vmem>>, vector<1x4x8x8xf32>,
    %c0_25 = arith.constant 0 : index
    %c0_26 = arith.constant 0 : index
    %c0_27 = arith.constant 0 : index
    %c0_28 = arith.constant 0 : index
    %36 = vector.load %arg6[%c0_25, %c0_26, %c0_27, %c0_28] : memref<1x4x8x8xf32, #tpu.memory_space<vmem>>, vector<1x4x8x8xf32>
    %37 = vector.shape_cast %36 : vector<1x4x8x8xf32> to vector<4x8x8xf32>
    %38 = vector.shape_cast %30 : vector<4x8x8xf32> to vector<1x4x8x8xf32>
    tpu.vector_store %arg6[%c0_25, %c0_26, %c0_27, %c0_28], %38 {strides = array<i32>} : memref<1x4x8x8xf32, #tpu.memory_space<vmem>>, vector<1x4x8x8xf32>,
    return
  }
  func.func @transform_0(%arg0: i32) -> (i32, i32, i32, i32) {
    %c0_i32 = arith.constant 0 : i32
    %0 = arith.addi %c0_i32, %arg0 : i32
    %c0_i32_0 = arith.constant 0 : i32
    %c0_i32_1 = arith.constant 0 : i32
    %c0_i32_2 = arith.constant 0 : i32
    %c0_i32_3 = arith.constant 0 : i32
    return %0, %c0_i32_0, %c0_i32_1, %c0_i32_2 : i32, i32, i32, i32
  }
  func.func @transform_1(%arg0: i32) -> (i32, i32, i32, i32) {
    %c0_i32 = arith.constant 0 : i32
    %0 = arith.addi %c0_i32, %arg0 : i32
    %c0_i32_0 = arith.constant 0 : i32
    %c0_i32_1 = arith.constant 0 : i32
    %c0_i32_2 = arith.constant 0 : i32
    %c0_i32_3 = arith.constant 0 : i32
    return %0, %c0_i32_0, %c0_i32_1, %c0_i32_2 : i32, i32, i32, i32
  }
  func.func @transform_2(%arg0: i32) -> (i32, i32, i32, i32) {
    %c2_i32 = arith.constant 2 : i32
    %0 = arith.addi %c2_i32, %arg0 : i32
    %c0_i32 = arith.constant 0 : i32
    %c0_i32_0 = arith.constant 0 : i32
    %c0_i32_1 = arith.constant 0 : i32
    %c0_i32_2 = arith.constant 0 : i32
    return %0, %c0_i32, %c0_i32_0, %c0_i32_1 : i32, i32, i32, i32
  }
  func.func @transform_3(%arg0: i32) -> (i32, i32, i32, i32) {
    %c0_i32 = arith.constant 0 : i32
    %c0_i32_0 = arith.constant 0 : i32
    %c0_i32_1 = arith.constant 0 : i32
    %c0_i32_2 = arith.constant 0 : i32
    return %arg0, %c0_i32, %c0_i32_0, %c0_i32_1 : i32, i32, i32, i32
  }
  func.func @transform_4(%arg0: i32) -> (i32, i32, i32, i32) {
    %c0_i32 = arith.constant 0 : i32
    %c0_i32_0 = arith.constant 0 : i32
    %c0_i32_1 = arith.constant 0 : i32
    %c0_i32_2 = arith.constant 0 : i32
    return %arg0, %c0_i32, %c0_i32_0, %c0_i32_1 : i32, i32, i32, i32
  }
  func.func @transform_5(%arg0: i32) -> (i32, i32, i32, i32) {
    %c0_i32 = arith.constant 0 : i32
    %c0_i32_0 = arith.constant 0 : i32
    %c0_i32_1 = arith.constant 0 : i32
    %c0_i32_2 = arith.constant 0 : i32
    return %arg0, %c0_i32, %c0_i32_0, %c0_i32_1 : i32, i32, i32, i32
  }
}

module attributes {stable_mosaic.version = 11 : i64} {
  func.func @_linear_kernel(%arg0: i32, %arg1: i32, %arg2: i32, %arg3: i32, %arg4: memref<16x32xbf16, #tpu.memory_space<vmem>>, %arg5: memref<1x32x50xbf16, #tpu.memory_space<vmem>>, %arg6: memref<1x1x50xf32, #tpu.memory_space<vmem>>, %arg7: memref<1x16x50xf32, #tpu.memory_space<vmem>>, %arg8: memref<16x50xf32, #tpu.memory_space<vmem>>) attributes {dimension_semantics = [#tpu.dimension_semantics<parallel>, #tpu.dimension_semantics<parallel>, #tpu.dimension_semantics<parallel>, #tpu.dimension_semantics<arbitrary>], iteration_bounds = array<i64: 1, 1, 1, 1>, scalar_prefetch = 0 : i64, scratch_operands = 1 : i64, tpu.core_type = #tpu.core_type<tc>, window_params = [{transform_indices = @transform_0, window_bounds = array<i64: 16, 32>}, {transform_indices = @transform_1, window_bounds = array<i64: 1, 32, 50>}, {transform_indices = @transform_2, window_bounds = array<i64: 1, 1, 50>}, {transform_indices = @transform_3, window_bounds = array<i64: 1, 16, 50>}]} {
    %c0_i32 = arith.constant 0 : i32
    %0 = arith.cmpi eq, %arg3, %c0_i32 : i32
    %1 = arith.extui %0 : i1 to i32
    %c0_i32_0 = arith.constant 0 : i32
    %2 = arith.cmpi ne, %1, %c0_i32_0 : i32
    scf.if %2 {
      %cst_11 = arith.constant 0.000000e+00 : f32
      %13 = vector.broadcast %cst_11 : f32 to vector<16x50xf32>
      %c0_12 = arith.constant 0 : index
      %c0_13 = arith.constant 0 : index
      %14 = vector.load %arg8[%c0_12, %c0_13] : memref<16x50xf32, #tpu.memory_space<vmem>>, vector<16x50xf32>
      tpu.vector_store %arg8[%c0_12, %c0_13], %13 {strides = array<i32>} : memref<16x50xf32, #tpu.memory_space<vmem>>, vector<16x50xf32>,
    } else {
    }
    %c0 = arith.constant 0 : index
    %c0_1 = arith.constant 0 : index
    %3 = vector.load %arg8[%c0, %c0_1] : memref<16x50xf32, #tpu.memory_space<vmem>>, vector<16x50xf32>
    %c0_2 = arith.constant 0 : index
    %c0_3 = arith.constant 0 : index
    %4 = vector.load %arg4[%c0_2, %c0_3] : memref<16x32xbf16, #tpu.memory_space<vmem>>, vector<16x32xbf16>
    %c0_4 = arith.constant 0 : index
    %c0_5 = arith.constant 0 : index
    %c0_6 = arith.constant 0 : index
    %5 = vector.load %arg5[%c0_4, %c0_5, %c0_6] : memref<1x32x50xbf16, #tpu.memory_space<vmem>>, vector<1x32x50xbf16>
    %6 = vector.shape_cast %5 : vector<1x32x50xbf16> to vector<32x50xbf16>
    %cst = arith.constant dense<0.000000e+00> : vector<16x50xf32>
    %7 = tpu.matmul %4, %6, %cst {dimension_numbers = #tpu.dot_dimension_numbers<[1], [0], [0], [1], [0, 0, 1, 1], [], []>} : vector<16x32xbf16>, vector<32x50xbf16>, vector<16x50xf32> -> vector<16x50xf32>
    %8 = arith.addf %3, %7 : vector<16x50xf32>
    %c0_7 = arith.constant 0 : index
    %c0_8 = arith.constant 0 : index
    %9 = vector.load %arg8[%c0_7, %c0_8] : memref<16x50xf32, #tpu.memory_space<vmem>>, vector<16x50xf32>
    tpu.vector_store %arg8[%c0_7, %c0_8], %8 {strides = array<i32>} : memref<16x50xf32, #tpu.memory_space<vmem>>, vector<16x50xf32>,
    %c0_i32_9 = arith.constant 0 : i32
    %10 = arith.cmpi eq, %arg3, %c0_i32_9 : i32
    %11 = arith.extui %10 : i1 to i32
    %c0_i32_10 = arith.constant 0 : i32
    %12 = arith.cmpi ne, %11, %c0_i32_10 : i32
    scf.if %12 {
      %c0_11 = arith.constant 0 : index
      %c0_12 = arith.constant 0 : index
      %13 = vector.load %arg8[%c0_11, %c0_12] : memref<16x50xf32, #tpu.memory_space<vmem>>, vector<16x50xf32>
      %c0_13 = arith.constant 0 : index
      %c0_14 = arith.constant 0 : index
      %c0_15 = arith.constant 0 : index
      %14 = vector.load %arg6[%c0_13, %c0_14, %c0_15] : memref<1x1x50xf32, #tpu.memory_space<vmem>>, vector<1x1x50xf32>
      %15 = vector.shape_cast %14 : vector<1x1x50xf32> to vector<1x50xf32>
      %16 = vector.broadcast %15 : vector<1x50xf32> to vector<16x50xf32>
      %17 = arith.addf %13, %16 : vector<16x50xf32>
      %c0_16 = arith.constant 0 : index
      %c0_17 = arith.constant 0 : index
      %c0_18 = arith.constant 0 : index
      %18 = vector.load %arg7[%c0_16, %c0_17, %c0_18] : memref<1x16x50xf32, #tpu.memory_space<vmem>>, vector<1x16x50xf32>
      %19 = vector.shape_cast %18 : vector<1x16x50xf32> to vector<16x50xf32>
      %20 = vector.shape_cast %17 : vector<16x50xf32> to vector<1x16x50xf32>
      tpu.vector_store %arg7[%c0_16, %c0_17, %c0_18], %20 {strides = array<i32>} : memref<1x16x50xf32, #tpu.memory_space<vmem>>, vector<1x16x50xf32>,
    } else {
    }
    return
  }
  func.func @transform_0(%arg0: i32, %arg1: i32, %arg2: i32, %arg3: i32) -> (i32, i32) {
    %c0_i32 = arith.constant 0 : i32
    return %arg1, %arg3 : i32, i32
  }
  func.func @transform_1(%arg0: i32, %arg1: i32, %arg2: i32, %arg3: i32) -> (i32, i32, i32) {
    %c0_i32 = arith.constant 0 : i32
    return %arg0, %arg3, %arg2 : i32, i32, i32
  }
  func.func @transform_2(%arg0: i32, %arg1: i32, %arg2: i32, %arg3: i32) -> (i32, i32, i32) {
    %c0_i32 = arith.constant 0 : i32
    %c0_i32_0 = arith.constant 0 : i32
    return %arg0, %c0_i32, %arg2 : i32, i32, i32
  }
  func.func @transform_3(%arg0: i32, %arg1: i32, %arg2: i32, %arg3: i32) -> (i32, i32, i32) {
    %c0_i32 = arith.constant 0 : i32
    return %arg0, %arg1, %arg2 : i32, i32, i32
  }
}

</mosaic_0001>

<llo_original>
// kernel: transformer_decoder_forward.25
$region0: #{transformer_decoder_forward.25}
  #allocation0 [shape = 'u32[]', space=smem, size = 0x4, offset = 0x4, fixed_abs, tag = 'smem constant byte address 0x4 - core index']
  #allocation1 [shape = 'u32[72,128]{1,0:T(1,128)}', space=vmem, size = 0x9000, scoped, tag = 'internal scratch']
  #allocation2 [shape = 'f32[16,32]{1,0:T(8,128)}', space=vmem, size = 0x2000, scoped, tag = 'scratch operand']
  %s0 = inlined_call_operand.vmem [shape: bf16[16,32], index: 0, kind: input, shape index: {}]
  %s1 = inlined_call_operand.vmem [shape: bf16[3,32,32], index: 1, kind: input, shape index: {}]
  %s2 = inlined_call_operand.vmem [shape: f32[3,1,32], index: 2, kind: input, shape index: {}]
  %s3 = inlined_call_operand.vmem [shape: f32[3,16,32], index: 3, kind: output, shape index: {}]
  %s4 = sld [smem:[#allocation0]]
  $region53: #{transformer_decoder_forward.25} parent=0
    _
  %s6 = ssub.s32 1, %s4
  %s7 = scalar_select 0, %s6, %s4
  loop: start=0, step=1, limit=5
  $region2: #{transformer_decoder_forward.25} parent=0 // loop_pre_header
    _
  $region3: #{transformer_decoder_forward.25} parent=0 // loop_header
    %s9 = sphi 0, %s13
    %p10 = scmp.ge.s32.totalorder %s9, 5
    %s16 = sphi 0, %s42
    %s17 = sphi 0, %s38
    %s18 = sphi 0, %s34
    %s19 = sphi 0, %s30
    %s20 = sphi 0, %s16
    %s21 = sphi 0, %s17
    %s22 = sphi 0, %s18
    %s23 = sphi 0, %s19
    %s24 = sphi 0, %s20
    %s25 = sphi 0, %s21
    %s26 = sphi 0, %s22
    %s27 = sphi 0, %s23
    %s47 = sphi 0, %s49
    %s50 = sphi 0, %s47
    %s51 = sphi 0, %s50
    %s67 = sphi 0, %s51
    %s77 = sphi 0, %s79
    %s80 = sphi 0, %s77
    %s81 = sphi 0, %s80
    %s97 = sphi 0, %s81
    %s105 = sphi 0, %s107
    %s108 = sphi 0, %s105
    %s109 = sphi 0, %s108
    %s125 = sphi 0, %s109
    %s135 = sphi 0, %s137
    %s138 = sphi 0, %s135
    %s139 = sphi 0, %s138
    %s155 = sphi 0, %s139
  $region4: #{transformer_decoder_forward.25} parent=0 // loop_header_branch
    %12 = sbr.rel (%p10) target = $region8
  $region5: #{transformer_decoder_forward.25} parent=0 // loop_body
    %s14 = ssub.s32 %s9, 1
    %s15 = ssub.s32 %s9, 2
    %s28 = sadd.s32 1, %s19
    %p29 = scmp.ge.s32.totalorder %s28, 1
    %s30 = scalar_select %p29, 0, %s28
    %s31 = sadd.s32 1, %s18
    %s32 = scalar_select %p29, %s31, %s18
    %p33 = scmp.ge.s32.totalorder %s32, 1
    %s34 = scalar_select %p33, 0, %s32
    %s35 = sadd.s32 1, %s17
    %s36 = scalar_select %p33, %s35, %s17
    %p37 = scmp.ge.s32.totalorder %s36, 1
    %s38 = scalar_select %p37, 0, %s36
    %s39 = sadd.s32 1, %s16
    %s40 = scalar_select %p37, %s39, %s16
    %p41 = scmp.ge.s32.totalorder %s40, 3
    %s42 = scalar_select %p41, 0, %s40
    %s43 = ssub.s32 %s17, %s38
    %s44 = ssub.s32 %s19, %s30
    %s45 = sor.u32 %s43, %s44
    %p46 = scmp.eq.s32.totalorder %s45, 0
    %s48 = sadd.s32 %s47, 1
    %s49 = scalar_select %p46, %s47, %s48
    %p52 = pneg %p46
    %p53 = scmp.eq.s32.totalorder %s9, 2
    %p54 = por %p52, %p53
    %p55 = scmp.ne.s32.totalorder %s47, %s50
    %p56 = scmp.eq.s32.totalorder %s9, 0
    %p57 = por %p55, %p56
    %p58 = scmp.ne.s32.totalorder %s47, %s50
    %p59 = scmp.eq.s32.totalorder %s14, 2
    %p60 = por %p58, %p59
    %p61 = scmp.ne.s32.totalorder %s50, %s51
    %p62 = scmp.eq.s32.totalorder %s14, 0
    %p63 = por %p61, %p62
    %p64 = scmp.ne.s32.totalorder %s50, %s51
    %p65 = scmp.eq.s32.totalorder %s15, 2
    %p66 = por %p64, %p65
    %p68 = scmp.ne.s32.totalorder %s51, %s67
    %p69 = scmp.eq.s32.totalorder %s15, 0
    %p70 = por %p68, %p69
    %s71 = ssub.s32 %s16, %s42
    %s72 = ssub.s32 %s19, %s30
    %s73 = sor.u32 %s71, %s72
    %s74 = ssub.s32 %s18, %s34
    %s75 = sor.u32 %s73, %s74
    %p76 = scmp.eq.s32.totalorder %s75, 0
    %s78 = sadd.s32 %s77, 1
    %s79 = scalar_select %p76, %s77, %s78
    %p82 = pneg %p76
    %p83 = scmp.eq.s32.totalorder %s9, 2
    %p84 = por %p82, %p83
    %p85 = scmp.ne.s32.totalorder %s77, %s80
    %p86 = scmp.eq.s32.totalorder %s9, 0
    %p87 = por %p85, %p86
    %p88 = scmp.ne.s32.totalorder %s77, %s80
    %p89 = scmp.eq.s32.totalorder %s14, 2
    %p90 = por %p88, %p89
    %p91 = scmp.ne.s32.totalorder %s80, %s81
    %p92 = scmp.eq.s32.totalorder %s14, 0
    %p93 = por %p91, %p92
    %p94 = scmp.ne.s32.totalorder %s80, %s81
    %p95 = scmp.eq.s32.totalorder %s15, 2
    %p96 = por %p94, %p95
    %p98 = scmp.ne.s32.totalorder %s81, %s97
    %p99 = scmp.eq.s32.totalorder %s15, 0
    %p100 = por %p98, %p99
    %s101 = ssub.s32 %s16, %s42
    %s102 = ssub.s32 %s18, %s34
    %s103 = sor.u32 %s101, %s102
    %p104 = scmp.eq.s32.totalorder %s103, 0
    %s106 = sadd.s32 %s105, 1
    %s107 = scalar_select %p104, %s105, %s106
    %p110 = pneg %p104
    %p111 = scmp.eq.s32.totalorder %s9, 2
    %p112 = por %p110, %p111
    %p113 = scmp.ne.s32.totalorder %s105, %s108
    %p114 = scmp.eq.s32.totalorder %s9, 0
    %p115 = por %p113, %p114
    %p116 = scmp.ne.s32.totalorder %s105, %s108
    %p117 = scmp.eq.s32.totalorder %s14, 2
    %p118 = por %p116, %p117
    %p119 = scmp.ne.s32.totalorder %s108, %s109
    %p120 = scmp.eq.s32.totalorder %s14, 0
    %p121 = por %p119, %p120
    %p122 = scmp.ne.s32.totalorder %s108, %s109
    %p123 = scmp.eq.s32.totalorder %s15, 2
    %p124 = por %p122, %p123
    %p126 = scmp.ne.s32.totalorder %s109, %s125
    %p127 = scmp.eq.s32.totalorder %s15, 0
    %p128 = por %p126, %p127
    %s129 = ssub.s32 %s16, %s42
    %s130 = ssub.s32 %s17, %s38
    %s131 = sor.u32 %s129, %s130
    %s132 = ssub.s32 %s18, %s34
    %s133 = sor.u32 %s131, %s132
    %p134 = scmp.eq.s32.totalorder %s133, 0
    %s136 = sadd.s32 %s135, 1
    %s137 = scalar_select %p134, %s135, %s136
    %p140 = pneg %p134
    %p141 = scmp.eq.s32.totalorder %s9, 2
    %p142 = por %p140, %p141
    %p143 = scmp.ne.s32.totalorder %s135, %s138
    %p144 = scmp.eq.s32.totalorder %s9, 0
    %p145 = por %p143, %p144
    %p146 = scmp.ne.s32.totalorder %s135, %s138
    %p147 = scmp.eq.s32.totalorder %s14, 2
    %p148 = por %p146, %p147
    %p149 = scmp.ne.s32.totalorder %s138, %s139
    %p150 = scmp.eq.s32.totalorder %s14, 0
    %p151 = por %p149, %p150
    %p152 = scmp.ne.s32.totalorder %s138, %s139
    %p153 = scmp.eq.s32.totalorder %s15, 2
    %p154 = por %p152, %p153
    %p156 = scmp.ne.s32.totalorder %s139, %s155
    %p157 = scmp.eq.s32.totalorder %s15, 0
    %p158 = por %p156, %p157
    %p159 = scmp.le.s32.totalorder 1, %s9
    %p160 = scmp.lt.s32.totalorder %s9, 4
    %p161 = pnand %p159, %p160
    %p162 = pneg %p161
    // Predicated region
    $region9: #{transformer_decoder_forward.25} parent=5 // pred_check
      _
    $region10: #{transformer_decoder_forward.25} parent=5 // pred_check_branch
      %164 = sbr.rel (%p161) target = $region12
    $region11: #{transformer_decoder_forward.25} parent=5 // pred_region
      %s165 = ssub.s32 %s9, 1
      // Predicated region
      $region13: #{transformer_decoder_forward.25} parent=11 // pred_check
        %p166 = pneg %p63
      $region14: #{transformer_decoder_forward.25} parent=11 // pred_check_branch
        %168 = sbr.rel (%p166) target = $region16
      $region15: #{transformer_decoder_forward.25} parent=11 // pred_region
        %s169 = smul.u32 2, %s21
        %p170 = scmp.lt.s32.totalorder %s169, 1
        %s171 = scalar_select %p170, %s169, 1
        %p172 = scmp.lt.s32.totalorder %s23, 0
        %s173 = scalar_select %p172, %s23, 0
        %s174 = sadd.s32 %s173, %s171
        %s175 = smul.addr %s174, 4
        %s176 = scalar_lea.vmem %s0, %s175
        %s177 = smul.u32 2, %s21
      $region16: #{transformer_decoder_forward.25} parent=11 // pred_fallthru
        _
    $region12: #{transformer_decoder_forward.25} parent=5 // pred_fallthru
      _
    %p178 = scmp.lt.s32.totalorder %s9, 3
    // Predicated region
    $region17: #{transformer_decoder_forward.25} parent=5 // pred_check
      %p179 = pneg %p178
    $region18: #{transformer_decoder_forward.25} parent=5 // pred_check_branch
      %181 = sbr.rel (%p179) target = $region20
    $region19: #{transformer_decoder_forward.25} parent=5 // pred_region
      // Predicated region
      $region21: #{transformer_decoder_forward.25} parent=19 // pred_check
        %p182 = pneg %p87
      $region22: #{transformer_decoder_forward.25} parent=19 // pred_check_branch
        %184 = sbr.rel (%p182) target = $region24
      $region23: #{transformer_decoder_forward.25} parent=19 // pred_region
        %s185 = smul.u32 4, %s19
        %p186 = scmp.lt.s32.totalorder %s16, 2
        %s187 = scalar_select %p186, %s16, 2
        %p188 = scmp.lt.s32.totalorder %s185, 3
        %s189 = scalar_select %p188, %s185, 3
        %p190 = scmp.lt.s32.totalorder %s18, 0
        %s191 = scalar_select %p190, %s18, 0
        %s192 = sadd.s32 %s191, %s189
        %s193 = smul.addr %s187, 4
        %s194 = sadd.s32 %s192, %s193
        %s195 = smul.addr %s194, 4
        %s196 = scalar_lea.vmem %s1, %s195
        %s197 = smul.u32 4, %s19
      $region24: #{transformer_decoder_forward.25} parent=19 // pred_fallthru
        _
      // Predicated region
      $region25: #{transformer_decoder_forward.25} parent=19 // pred_check
        %p198 = pneg %p115
      $region26: #{transformer_decoder_forward.25} parent=19 // pred_check_branch
        %200 = sbr.rel (%p198) target = $region28
      $region27: #{transformer_decoder_forward.25} parent=19 // pred_region
        %p201 = scmp.lt.s32.totalorder %s16, 2
        %s202 = scalar_select %p201, %s16, 2
        %p203 = scmp.lt.s32.totalorder %s18, 0
        %s204 = scalar_select %p203, %s18, 0
        %s205 = sadd.s32 %s204, %s202
        %s206 = scalar_lea.vmem %s2, %s205
      $region28: #{transformer_decoder_forward.25} parent=19 // pred_fallthru
        _
    $region20: #{transformer_decoder_forward.25} parent=5 // pred_fallthru
      _
    %p207 = scmp.le.s32.totalorder 1, %s9
    %p208 = scmp.lt.s32.totalorder %s9, 4
    %p209 = pnand %p207, %p208
    %p210 = pneg %p209
    // Predicated region
    $region29: #{transformer_decoder_forward.25} parent=5 // pred_check
      _
    $region30: #{transformer_decoder_forward.25} parent=5 // pred_check_branch
      %212 = sbr.rel (%p209) target = $region32
    $region31: #{transformer_decoder_forward.25} parent=5 // pred_region
      %s213 = ssub.s32 %s9, 1
      %s214 = smul.u32 2, %s21
      %p215 = scmp.lt.s32.totalorder %s214, 1
      %s216 = scalar_select %p215, %s214, 1
      %p217 = scmp.lt.s32.totalorder %s23, 0
      %s218 = scalar_select %p217, %s23, 0
      %s219 = sadd.s32 %s218, %s216
      %s220 = smul.addr %s219, 4
      %s221 = scalar_lea.vmem %s0, %s220
      %p222 = pneg %p63
      %p223 = pneg %p60
      %s224 = smul.u32 4, %s23
      %p225 = scmp.lt.s32.totalorder %s20, 2
      %s226 = scalar_select %p225, %s20, 2
      %p227 = scmp.lt.s32.totalorder %s224, 3
      %s228 = scalar_select %p227, %s224, 3
      %p229 = scmp.lt.s32.totalorder %s22, 0
      %s230 = scalar_select %p229, %s22, 0
      %s231 = sadd.s32 %s230, %s228
      %s232 = smul.addr %s226, 4
      %s233 = sadd.s32 %s231, %s232
      %s234 = smul.addr %s233, 4
      %s235 = scalar_lea.vmem %s1, %s234
      %p236 = pneg %p93
      %p237 = pneg %p90
      %p238 = scmp.lt.s32.totalorder %s20, 2
      %s239 = scalar_select %p238, %s20, 2
      %p240 = scmp.lt.s32.totalorder %s22, 0
      %s241 = scalar_select %p240, %s22, 0
      %s242 = sadd.s32 %s241, %s239
      %s243 = scalar_lea.vmem %s2, %s242
      %p244 = pneg %p121
      %p245 = pneg %p118
      %p246 = pneg %p151
      %p247 = pneg %p148
      %s248 = smul.u32 2, %s21
      %p249 = scmp.lt.s32.totalorder %s20, 2
      %s250 = scalar_select %p249, %s20, 2
      %p251 = scmp.lt.s32.totalorder %s248, 1
      %s252 = scalar_select %p251, %s248, 1
      %p253 = scmp.lt.s32.totalorder %s22, 0
      %s254 = scalar_select %p253, %s22, 0
      %s255 = sadd.s32 %s254, %s252
      %s256 = smul.addr %s250, 2
      %s257 = sadd.s32 %s255, %s256
      %s258 = smul.addr %s257, 8
      %s259 = scalar_lea.vmem %s3, %s258
      %s260 = smul.u32 2, %s21
      %p261 = scmp.lt.s32.totalorder %s260, 1
      %s262 = scalar_select %p261, %s260, 1
      %p263 = scmp.lt.s32.totalorder %s23, 0
      %s264 = scalar_select %p263, %s23, 0
      %s265 = sadd.s32 %s264, %s262
      %s266 = smul.addr %s265, 4
      %s267 = scalar_lea.vmem %s0, %s266
      %s268 = smul.u32 2, %s21
      %s269 = smul.u32 4, %s23
      %p270 = scmp.lt.s32.totalorder %s20, 2
      %s271 = scalar_select %p270, %s20, 2
      %p272 = scmp.lt.s32.totalorder %s269, 3
      %s273 = scalar_select %p272, %s269, 3
      %p274 = scmp.lt.s32.totalorder %s22, 0
      %s275 = scalar_select %p274, %s22, 0
      %s276 = sadd.s32 %s275, %s273
      %s277 = smul.addr %s271, 4
      %s278 = sadd.s32 %s276, %s277
      %s279 = smul.addr %s278, 4
      %s280 = scalar_lea.vmem %s1, %s279
      %s281 = smul.u32 4, %s23
      %p282 = scmp.lt.s32.totalorder %s20, 2
      %s283 = scalar_select %p282, %s20, 2
      %p284 = scmp.lt.s32.totalorder %s22, 0
      %s285 = scalar_select %p284, %s22, 0
      %s286 = sadd.s32 %s285, %s283
      %s287 = scalar_lea.vmem %s2, %s286
      %s288 = smul.u32 2, %s21
      %p289 = scmp.lt.s32.totalorder %s20, 2
      %s290 = scalar_select %p289, %s20, 2
      %p291 = scmp.lt.s32.totalorder %s288, 1
      %s292 = scalar_select %p291, %s288, 1
      %p293 = scmp.lt.s32.totalorder %s22, 0
      %s294 = scalar_select %p293, %s22, 0
      %s295 = sadd.s32 %s294, %s292
      %s296 = smul.addr %s290, 2
      %s297 = sadd.s32 %s295, %s296
      %s298 = smul.addr %s297, 8
      %s299 = scalar_lea.vmem %s3, %s298
      %s300 = smul.u32 2, %s21
      %p302 = scmp.eq.s32.totalorder %s23, 0
      // Predicated region
      $region33: #{transformer_decoder_forward.25} parent=31 // pred_check
        %p303 = pneg %p302
      $region34: #{transformer_decoder_forward.25} parent=31 // pred_check_branch
        %305 = sbr.rel (%p303) target = $region36
      $region35: #{transformer_decoder_forward.25} parent=31 // pred_region
        %vm306 = vcmask 261120
        %307 = vst.msk [vmem:[#allocation2] sm:$0xff] %vm306, 0.0
        %308 = vst.msk [vmem:[#allocation2 + $0x8] sm:$0xff] %vm306, 0.0
      $region36: #{transformer_decoder_forward.25} parent=31 // pred_fallthru
        _
      %v309 = vld [vmem:[#allocation2] sm:$0xff]
      %v310 = vld [vmem:[#allocation2 + $0x8] sm:$0xff]
      %v311 = vld [vmem:[%s267] sm:$0xf]
      %v312 = vld [vmem:[%s267 + $0x4] sm:$0xf]
      %v313 = vld [vmem:[%s280] sm:$0xf]
      %v314 = vld [vmem:[%s280 + $0x4] sm:$0xf]
      %v315 = vld [vmem:[%s280 + $0x8] sm:$0xf]
      %v316 = vld [vmem:[%s280 + $0xc] sm:$0xf]
      %v319 = vunpack.c.l.b16 %v311
      %v320 = vunpack.c.l.b16 %v312
      %v321 = vpack.c.b16 %v320, %v319
      %v326 = vunpack.c.l.b16 %v313
      %v327 = vunpack.c.l.b16 %v314
      %v328 = vunpack.c.l.b16 %v315
      %v329 = vunpack.c.l.b16 %v316
      %v330 = vpack.c.b16 %v327, %v326
      %v331 = vpack.c.b16 %v329, %v328
      %vm334 = vcmask 261120
      %v336 = vsel %vm334, %v321, 0
      %338 = vmatpush.bf16.msra.mxu0 0
      %339 = vmatpush.bf16.msra.mxu0 0
      %340 = vmatpush.bf16.msra.mxu0 0
      %341 = vmatpush.bf16.msra.mxu0 0
      %342 = vmatpush.bf16.msra.mxu0 0
      %343 = vmatpush.bf16.msra.mxu0 0
      %344 = vmatpush.bf16.msra.mxu0 %v331
      %345 = vmatpush.bf16.msra.mxu0 %v330
      %346 = vmatmul.bf16.gmra.mxu0 %v336
      %v347 = vpop.f32.mrf.mxu0
      %v348 = vadd.f32 0.0, %v347
      %v349 = vpop.f32.mrf.mxu0
      %v350 = vadd.f32 0.0, %v349
      %351 = vdwg.mxu0
      %v352 = vadd.f32 %v309, %v348
      %v353 = vadd.f32 %v310, %v350
      %354 = vst.msk [vmem:[#allocation2] sm:$0xff] %vm334, %v352
      %355 = vst.msk [vmem:[#allocation2 + $0x8] sm:$0xff] %vm334, %v353
      // Predicated region
      $region37: #{transformer_decoder_forward.25} parent=31 // pred_check
        %p356 = pneg %p302
      $region38: #{transformer_decoder_forward.25} parent=31 // pred_check_branch
        %358 = sbr.rel (%p356) target = $region40
      $region39: #{transformer_decoder_forward.25} parent=31 // pred_region
        %v359 = vld [vmem:[#allocation2] sm:$0xff]
        %v360 = vld [vmem:[#allocation2 + $0x8] sm:$0xff]
        %v361 = vld [vmem:[%s287] sm:$0x1]
        %v363 = vperm.slane %v361, 0
        %v365 = vadd.f32 %v359, %v363
        %v366 = vadd.f32 %v360, %v363
        %367 = vst.msk [vmem:[%s299] sm:$0xff] %vm334, %v365
        %368 = vst.msk [vmem:[%s299 + $0x8] sm:$0xff] %vm334, %v366
      $region40: #{transformer_decoder_forward.25} parent=31 // pred_fallthru
        _
      %s369 = smul.u32 2, %s21
      %p370 = scmp.lt.s32.totalorder %s20, 2
      %s371 = scalar_select %p370, %s20, 2
      %p372 = scmp.lt.s32.totalorder %s369, 1
      %s373 = scalar_select %p372, %s369, 1
      %p374 = scmp.lt.s32.totalorder %s22, 0
      %s375 = scalar_select %p374, %s22, 0
      %s376 = sadd.s32 %s375, %s373
      %s377 = smul.addr %s371, 2
      %s378 = sadd.s32 %s376, %s377
      %s379 = smul.addr %s378, 8
      %s380 = scalar_lea.vmem %s3, %s379
      // Predicated region
      $region41: #{transformer_decoder_forward.25} parent=31 // pred_check
        %p381 = pneg %p148
      $region42: #{transformer_decoder_forward.25} parent=31 // pred_check_branch
        %383 = sbr.rel (%p381) target = $region44
      $region43: #{transformer_decoder_forward.25} parent=31 // pred_region
        %s384 = smul.u32 2, %s21
      $region44: #{transformer_decoder_forward.25} parent=31 // pred_fallthru
        _
    $region32: #{transformer_decoder_forward.25} parent=5 // pred_fallthru
      _
    %p385 = scmp.le.s32.totalorder 2, %s9
    // Predicated region
    $region45: #{transformer_decoder_forward.25} parent=5 // pred_check
      %p386 = pneg %p385
    $region46: #{transformer_decoder_forward.25} parent=5 // pred_check_branch
      %388 = sbr.rel (%p386) target = $region48
    $region47: #{transformer_decoder_forward.25} parent=5 // pred_region
      %s389 = ssub.s32 %s9, 2
      // Predicated region
      $region49: #{transformer_decoder_forward.25} parent=47 // pred_check
        %p390 = pneg %p154
      $region50: #{transformer_decoder_forward.25} parent=47 // pred_check_branch
        %392 = sbr.rel (%p390) target = $region52
      $region51: #{transformer_decoder_forward.25} parent=47 // pred_region
        %s393 = smul.u32 2, %s25
        %p394 = scmp.lt.s32.totalorder %s24, 2
        %s395 = scalar_select %p394, %s24, 2
        %p396 = scmp.lt.s32.totalorder %s393, 1
        %s397 = scalar_select %p396, %s393, 1
        %p398 = scmp.lt.s32.totalorder %s26, 0
        %s399 = scalar_select %p398, %s26, 0
        %s400 = sadd.s32 %s399, %s397
        %s401 = smul.addr %s395, 2
        %s402 = sadd.s32 %s400, %s401
        %s403 = smul.addr %s402, 8
        %s404 = scalar_lea.vmem %s3, %s403
      $region52: #{transformer_decoder_forward.25} parent=47 // pred_fallthru
        _
    $region48: #{transformer_decoder_forward.25} parent=5 // pred_fallthru
      _
  $region6: #{transformer_decoder_forward.25} parent=0 // loop_footer
    %s13 = sadd.s32 1, %s9
  $region7: #{transformer_decoder_forward.25} parent=0 // loop_footer_branch
    %8 = sbr.rel target = $region3
  $region8: #{transformer_decoder_forward.25} parent=0 // loop_exit
    _

// kernel: transformer_decoder_forward.27
$region0: #{transformer_decoder_forward.27}
  #allocation0 [shape = 'u32[]', space=smem, size = 0x4, offset = 0x4, fixed_abs, tag = 'smem constant byte address 0x4 - core index']
  #allocation1 [shape = 'u32[72,128]{1,0:T(1,128)}', space=vmem, size = 0x9000, scoped, tag = 'internal scratch']
  #allocation2 [shape = 'f32[16,32]{1,0:T(8,128)}', space=vmem, size = 0x2000, scoped, tag = 'scratch operand']
  %s0 = inlined_call_operand.vmem [shape: bf16[16,32], index: 0, kind: input, shape index: {}]
  %s1 = inlined_call_operand.vmem [shape: bf16[1,32,32], index: 1, kind: input, shape index: {}]
  %s2 = inlined_call_operand.vmem [shape: f32[1,1,32], index: 2, kind: input, shape index: {}]
  %s3 = inlined_call_operand.vmem [shape: f32[1,16,32], index: 3, kind: output, shape index: {}]
  %s4 = sld [smem:[#allocation0]]
  $region30: #{transformer_decoder_forward.27} parent=0
    _
  %s6 = ssub.s32 1, %s4
  %s7 = scalar_select 0, %s6, %s4
  // Predicated region
  $region2: #{transformer_decoder_forward.27} parent=0 // pred_check
    _
  $region3: #{transformer_decoder_forward.27} parent=0 // pred_check_branch
    %9 = sbr.rel (0) target = $region5
  $region4: #{transformer_decoder_forward.27} parent=0 // pred_region
    _
  $region5: #{transformer_decoder_forward.27} parent=0 // pred_fallthru
    _
  // Predicated region
  $region6: #{transformer_decoder_forward.27} parent=0 // pred_check
    _
  $region7: #{transformer_decoder_forward.27} parent=0 // pred_check_branch
    %11 = sbr.rel (0) target = $region9
  $region8: #{transformer_decoder_forward.27} parent=0 // pred_region
    _
  $region9: #{transformer_decoder_forward.27} parent=0 // pred_fallthru
    _
  // Predicated region
  $region10: #{transformer_decoder_forward.27} parent=0 // pred_check
    _
  $region11: #{transformer_decoder_forward.27} parent=0 // pred_check_branch
    %13 = sbr.rel (0) target = $region13
  $region12: #{transformer_decoder_forward.27} parent=0 // pred_region
    _
  $region13: #{transformer_decoder_forward.27} parent=0 // pred_fallthru
    _
  %p15 = scmp.eq.s32.totalorder 0, 0
  // Predicated region
  $region14: #{transformer_decoder_forward.27} parent=0 // pred_check
    %p16 = pneg %p15
  $region15: #{transformer_decoder_forward.27} parent=0 // pred_check_branch
    %18 = sbr.rel (%p16) target = $region17
  $region16: #{transformer_decoder_forward.27} parent=0 // pred_region
    %vm19 = vcmask 261120
    %20 = vst.msk [vmem:[#allocation2] sm:$0xff] %vm19, 0.0
    %21 = vst.msk [vmem:[#allocation2 + $0x8] sm:$0xff] %vm19, 0.0
  $region17: #{transformer_decoder_forward.27} parent=0 // pred_fallthru
    _
  %v22 = vld [vmem:[#allocation2] sm:$0xff]
  %v23 = vld [vmem:[#allocation2 + $0x8] sm:$0xff]
  %v24 = vld [vmem:[%s0] sm:$0xf]
  %v25 = vld [vmem:[%s0 + $0x4] sm:$0xf]
  %v26 = vld [vmem:[%s1] sm:$0xf]
  %v27 = vld [vmem:[%s1 + $0x4] sm:$0xf]
  %v28 = vld [vmem:[%s1 + $0x8] sm:$0xf]
  %v29 = vld [vmem:[%s1 + $0xc] sm:$0xf]
  %v32 = vunpack.c.l.b16 %v24
  %v33 = vunpack.c.l.b16 %v25
  %v34 = vpack.c.b16 %v33, %v32
  %v39 = vunpack.c.l.b16 %v26
  %v40 = vunpack.c.l.b16 %v27
  %v41 = vunpack.c.l.b16 %v28
  %v42 = vunpack.c.l.b16 %v29
  %v43 = vpack.c.b16 %v40, %v39
  %v44 = vpack.c.b16 %v42, %v41
  %vm47 = vcmask 261120
  %v49 = vsel %vm47, %v34, 0
  %51 = vmatpush.bf16.msra.mxu0 0
  %52 = vmatpush.bf16.msra.mxu0 0
  %53 = vmatpush.bf16.msra.mxu0 0
  %54 = vmatpush.bf16.msra.mxu0 0
  %55 = vmatpush.bf16.msra.mxu0 0
  %56 = vmatpush.bf16.msra.mxu0 0
  %57 = vmatpush.bf16.msra.mxu0 %v44
  %58 = vmatpush.bf16.msra.mxu0 %v43
  %59 = vmatmul.bf16.gmra.mxu0 %v49
  %v60 = vpop.f32.mrf.mxu0
  %v61 = vadd.f32 0.0, %v60
  %v62 = vpop.f32.mrf.mxu0
  %v63 = vadd.f32 0.0, %v62
  %64 = vdwg.mxu0
  %v65 = vadd.f32 %v22, %v61
  %v66 = vadd.f32 %v23, %v63
  %67 = vst.msk [vmem:[#allocation2] sm:$0xff] %vm47, %v65
  %68 = vst.msk [vmem:[#allocation2 + $0x8] sm:$0xff] %vm47, %v66
  // Predicated region
  $region18: #{transformer_decoder_forward.27} parent=0 // pred_check
    %p69 = pneg %p15
  $region19: #{transformer_decoder_forward.27} parent=0 // pred_check_branch
    %71 = sbr.rel (%p69) target = $region21
  $region20: #{transformer_decoder_forward.27} parent=0 // pred_region
    %v72 = vld [vmem:[#allocation2] sm:$0xff]
    %v73 = vld [vmem:[#allocation2 + $0x8] sm:$0xff]
    %v74 = vld [vmem:[%s2] sm:$0x1]
    %v76 = vperm.slane %v74, 0
    %v78 = vadd.f32 %v72, %v76
    %v79 = vadd.f32 %v73, %v76
    %80 = vst.msk [vmem:[%s3] sm:$0xff] %vm47, %v78
    %81 = vst.msk [vmem:[%s3 + $0x8] sm:$0xff] %vm47, %v79
  $region21: #{transformer_decoder_forward.27} parent=0 // pred_fallthru
    _
  // Predicated region
  $region22: #{transformer_decoder_forward.27} parent=0 // pred_check
    _
  $region23: #{transformer_decoder_forward.27} parent=0 // pred_check_branch
    %83 = sbr.rel (0) target = $region25
  $region24: #{transformer_decoder_forward.27} parent=0 // pred_region
    _
  $region25: #{transformer_decoder_forward.27} parent=0 // pred_fallthru
    _
  // Predicated region
  $region26: #{transformer_decoder_forward.27} parent=0 // pred_check
    _
  $region27: #{transformer_decoder_forward.27} parent=0 // pred_check_branch
    %85 = sbr.rel (0) target = $region29
  $region28: #{transformer_decoder_forward.27} parent=0 // pred_region
    _
  $region29: #{transformer_decoder_forward.27} parent=0 // pred_fallthru
    _

// kernel: transformer_decoder_forward.28
$region0: #{transformer_decoder_forward.28}
  #allocation0 [shape = 'u32[]', space=smem, size = 0x4, offset = 0x4, fixed_abs, tag = 'smem constant byte address 0x4 - core index']
  #allocation1 [shape = 'u32[72,128]{1,0:T(1,128)}', space=vmem, size = 0x9000, scoped, tag = 'internal scratch']
  %s0 = inlined_call_operand.vmem [shape: f32[16,32], index: 0, kind: input, shape index: {}]
  %s1 = inlined_call_operand.vmem [shape: f32[16,32], index: 1, kind: input, shape index: {}]
  %s2 = inlined_call_operand.vmem [shape: f32[1,32], index: 2, kind: input, shape index: {}]
  %s3 = inlined_call_operand.vmem [shape: f32[1,32], index: 3, kind: input, shape index: {}]
  %s4 = inlined_call_operand.vmem [shape: f32[16,32], index: 4, kind: output, shape index: {}]
  %s5 = sld [smem:[#allocation0]]
  $region26: #{transformer_decoder_forward.28} parent=0
    _
  %s7 = ssub.s32 1, %s5
  %s8 = scalar_select 0, %s7, %s5
  // Predicated region
  $region2: #{transformer_decoder_forward.28} parent=0 // pred_check
    _
  $region3: #{transformer_decoder_forward.28} parent=0 // pred_check_branch
    %10 = sbr.rel (0) target = $region5
  $region4: #{transformer_decoder_forward.28} parent=0 // pred_region
    _
  $region5: #{transformer_decoder_forward.28} parent=0 // pred_fallthru
    _
  // Predicated region
  $region6: #{transformer_decoder_forward.28} parent=0 // pred_check
    _
  $region7: #{transformer_decoder_forward.28} parent=0 // pred_check_branch
    %12 = sbr.rel (0) target = $region9
  $region8: #{transformer_decoder_forward.28} parent=0 // pred_region
    _
  $region9: #{transformer_decoder_forward.28} parent=0 // pred_fallthru
    _
  // Predicated region
  $region10: #{transformer_decoder_forward.28} parent=0 // pred_check
    _
  $region11: #{transformer_decoder_forward.28} parent=0 // pred_check_branch
    %14 = sbr.rel (0) target = $region13
  $region12: #{transformer_decoder_forward.28} parent=0 // pred_region
    _
  $region13: #{transformer_decoder_forward.28} parent=0 // pred_fallthru
    _
  // Predicated region
  $region14: #{transformer_decoder_forward.28} parent=0 // pred_check
    _
  $region15: #{transformer_decoder_forward.28} parent=0 // pred_check_branch
    %16 = sbr.rel (0) target = $region17
  $region16: #{transformer_decoder_forward.28} parent=0 // pred_region
    _
  $region17: #{transformer_decoder_forward.28} parent=0 // pred_fallthru
    _
  %v17 = vld [vmem:[%s0] sm:$0xff]
  %v18 = vld [vmem:[%s0 + $0x8] sm:$0xff]
  %v19 = vld [vmem:[%s1] sm:$0xff]
  %v20 = vld [vmem:[%s1 + $0x8] sm:$0xff]
  %v21 = vadd.f32 %v17, %v19
  %v22 = vadd.f32 %v18, %v20
  %vm23 = vcmask 261120
  %v24 = vsel %vm23, %v21, 0.0
  %25 = vadd.xlane.f32.xlu0 %v24
  %v26 = vpop.xlane.xlu0 %25
  %v27 = vsel %vm23, %v22, 0.0
  %28 = vadd.xlane.f32.xlu0 %v27
  %v29 = vpop.xlane.xlu0 %28
  %v30 = vrcp.pop 32.0
  %v31 = vmul.f32 32.0, %v30
  %v32 = vsub.f32 1.0, %v31
  %v33 = vmul.f32 %v30, %v32
  %v34 = vadd.f32 %v30, %v33
  %vm35 = vweird.f32 %v30
  %v36 = vsel %vm35, %v30, %v34
  %v37 = vmul.f32 %v26, %v36
  %v38 = vmul.f32 %v29, %v36
  %v39 = vsub.f32 %v21, %v37
  %v40 = vsub.f32 %v22, %v38
  %v41 = vmul.f32 %v39, %v39
  %v42 = vmul.f32 %v40, %v40
  %v43 = vsel %vm23, %v41, 0.0
  %44 = vadd.xlane.f32.xlu0 %v43
  %v45 = vpop.xlane.xlu0 %44
  %v46 = vsel %vm23, %v42, 0.0
  %47 = vadd.xlane.f32.xlu0 %v46
  %v48 = vpop.xlane.xlu0 %47
  %v49 = vmul.f32 %v45, %v36
  %v50 = vmul.f32 %v48, %v36
  %v51 = vadd.f32 %v49, 1e-05
  %v52 = vadd.f32 %v50, 1e-05
  %v53 = vrsqrt.pop %v51
  %v54 = vmul.f32 %v53, %v51
  %v55 = vmul.f32 %v54, %v53
  %v56 = vmul.f32 0.5, %v55
  %v57 = vsub.f32 1.5, %v56
  %v58 = vmul.f32 %v53, %v57
  %vm59 = vweird.f32 %v51
  %vm60 = vweird.f32 %v53
  %vm61 = vmor %vm59, %vm60
  %v62 = vsel %vm61, %v53, %v58
  %v63 = vrsqrt.pop %v52
  %v64 = vmul.f32 %v63, %v52
  %v65 = vmul.f32 %v64, %v63
  %v66 = vmul.f32 0.5, %v65
  %v67 = vsub.f32 1.5, %v66
  %v68 = vmul.f32 %v63, %v67
  %vm69 = vweird.f32 %v52
  %vm70 = vweird.f32 %v63
  %vm71 = vmor %vm69, %vm70
  %v72 = vsel %vm71, %v63, %v68
  %v73 = vmul.f32 %v39, %v62
  %v74 = vmul.f32 %v40, %v72
  %v75 = vld [vmem:[%s2] sm:$0x1]
  %v77 = vperm.slane %v75, 0
  %v79 = vmul.f32 %v73, %v77
  %v80 = vmul.f32 %v74, %v77
  %v81 = vld [vmem:[%s3] sm:$0x1]
  %v83 = vperm.slane %v81, 0
  %v85 = vadd.f32 %v79, %v83
  %v86 = vadd.f32 %v80, %v83
  %87 = vst.msk [vmem:[%s4] sm:$0xff] %vm23, %v85
  %88 = vst.msk [vmem:[%s4 + $0x8] sm:$0xff] %vm23, %v86
  // Predicated region
  $region18: #{transformer_decoder_forward.28} parent=0 // pred_check
    _
  $region19: #{transformer_decoder_forward.28} parent=0 // pred_check_branch
    %90 = sbr.rel (0) target = $region21
  $region20: #{transformer_decoder_forward.28} parent=0 // pred_region
    _
  $region21: #{transformer_decoder_forward.28} parent=0 // pred_fallthru
    _
  // Predicated region
  $region22: #{transformer_decoder_forward.28} parent=0 // pred_check
    _
  $region23: #{transformer_decoder_forward.28} parent=0 // pred_check_branch
    %92 = sbr.rel (0) target = $region25
  $region24: #{transformer_decoder_forward.28} parent=0 // pred_region
    _
  $region25: #{transformer_decoder_forward.28} parent=0 // pred_fallthru
    _

// kernel: transformer_decoder_forward.26
$region0: #{transformer_decoder_forward.26}
  #allocation0 [shape = 'u32[]', space=smem, size = 0x4, offset = 0x4, fixed_abs, tag = 'smem constant byte address 0x4 - core index']
  #allocation1 [shape = 'u32[72,128]{1,0:T(1,128)}', space=vmem, size = 0x9000, scoped, tag = 'internal scratch']
  %s0 = inlined_call_operand.vmem [shape: f32[6,4,8,8], index: 0, kind: input, shape index: {}, may-alias: {0,1,2}]
  %s1 = inlined_call_operand.vmem [shape: f32[6,4,8,8], index: 1, kind: input, shape index: {}, may-alias: {0,1,2}]
  %s2 = inlined_call_operand.vmem [shape: f32[6,4,8,8], index: 2, kind: input, shape index: {}, may-alias: {0,1,2}]
  %s3 = inlined_call_operand.vmem [shape: f32[2,1,8,8], index: 3, kind: input, shape index: {}]
  %s4 = inlined_call_operand.vmem [shape: f32[2,4,8,8], index: 4, kind: output, shape index: {}]
  %s5 = sld [smem:[#allocation0]]
  $region49: #{transformer_decoder_forward.26} parent=0
    _
  %s7 = ssub.s32 1, %s5
  %s8 = scalar_select 0, %s7, %s5
  loop: start=0, step=1, limit=4
  $region2: #{transformer_decoder_forward.26} parent=0 // loop_pre_header
    _
  $region3: #{transformer_decoder_forward.26} parent=0 // loop_header
    %s10 = sphi 0, %s14
    %p11 = scmp.ge.s32.totalorder %s10, 4
    %s20 = sphi 0, %s22
    %s23 = sphi 0, %s20
    %s24 = sphi 0, %s23
    %s40 = sphi 0, %s24
    %s48 = sphi 0, %s50
    %s51 = sphi 0, %s48
    %s52 = sphi 0, %s51
    %s68 = sphi 0, %s52
    %s76 = sphi 0, %s78
    %s79 = sphi 0, %s76
    %s80 = sphi 0, %s79
    %s96 = sphi 0, %s80
    %s102 = sphi 0, %s104
    %s105 = sphi 0, %s102
    %s106 = sphi 0, %s105
    %s122 = sphi 0, %s106
    %s128 = sphi 0, %s130
    %s131 = sphi 0, %s128
    %s132 = sphi 0, %s131
    %s148 = sphi 0, %s132
  $region4: #{transformer_decoder_forward.26} parent=0 // loop_header_branch
    %13 = sbr.rel (%p11) target = $region8
  $region5: #{transformer_decoder_forward.26} parent=0 // loop_body
    %s15 = ssub.s32 %s10, 1
    %s16 = ssub.s32 %s10, 2
    %s17 = sadd.s32 %s10, 1
    %s18 = ssub.s32 %s10, %s17
    %p19 = scmp.eq.s32.totalorder %s18, 0
    %s21 = sadd.s32 %s20, 1
    %s22 = scalar_select %p19, %s20, %s21
    %p25 = pneg %p19
    %p26 = scmp.eq.s32.totalorder %s10, 1
    %p27 = por %p25, %p26
    %p28 = scmp.ne.s32.totalorder %s20, %s23
    %p29 = scmp.eq.s32.totalorder %s10, 0
    %p30 = por %p28, %p29
    %p31 = scmp.ne.s32.totalorder %s20, %s23
    %p32 = scmp.eq.s32.totalorder %s15, 1
    %p33 = por %p31, %p32
    %p34 = scmp.ne.s32.totalorder %s23, %s24
    %p35 = scmp.eq.s32.totalorder %s15, 0
    %p36 = por %p34, %p35
    %p37 = scmp.ne.s32.totalorder %s23, %s24
    %p38 = scmp.eq.s32.totalorder %s16, 1
    %p39 = por %p37, %p38
    %p41 = scmp.ne.s32.totalorder %s24, %s40
    %p42 = scmp.eq.s32.totalorder %s16, 0
    %p43 = por %p41, %p42
    %s44 = sadd.s32 %s10, 2
    %s45 = sadd.s32 %s17, 2
    %s46 = ssub.s32 %s44, %s45
    %p47 = scmp.eq.s32.totalorder %s46, 0
    %s49 = sadd.s32 %s48, 1
    %s50 = scalar_select %p47, %s48, %s49
    %p53 = pneg %p47
    %p54 = scmp.eq.s32.totalorder %s10, 1
    %p55 = por %p53, %p54
    %p56 = scmp.ne.s32.totalorder %s48, %s51
    %p57 = scmp.eq.s32.totalorder %s10, 0
    %p58 = por %p56, %p57
    %p59 = scmp.ne.s32.totalorder %s48, %s51
    %p60 = scmp.eq.s32.totalorder %s15, 1
    %p61 = por %p59, %p60
    %p62 = scmp.ne.s32.totalorder %s51, %s52
    %p63 = scmp.eq.s32.totalorder %s15, 0
    %p64 = por %p62, %p63
    %p65 = scmp.ne.s32.totalorder %s51, %s52
    %p66 = scmp.eq.s32.totalorder %s16, 1
    %p67 = por %p65, %p66
    %p69 = scmp.ne.s32.totalorder %s52, %s68
    %p70 = scmp.eq.s32.totalorder %s16, 0
    %p71 = por %p69, %p70
    %s72 = sadd.s32 %s10, 4
    %s73 = sadd.s32 %s17, 4
    %s74 = ssub.s32 %s72, %s73
    %p75 = scmp.eq.s32.totalorder %s74, 0
    %s77 = sadd.s32 %s76, 1
    %s78 = scalar_select %p75, %s76, %s77
    %p81 = pneg %p75
    %p82 = scmp.eq.s32.totalorder %s10, 1
    %p83 = por %p81, %p82
    %p84 = scmp.ne.s32.totalorder %s76, %s79
    %p85 = scmp.eq.s32.totalorder %s10, 0
    %p86 = por %p84, %p85
    %p87 = scmp.ne.s32.totalorder %s76, %s79
    %p88 = scmp.eq.s32.totalorder %s15, 1
    %p89 = por %p87, %p88
    %p90 = scmp.ne.s32.totalorder %s79, %s80
    %p91 = scmp.eq.s32.totalorder %s15, 0
    %p92 = por %p90, %p91
    %p93 = scmp.ne.s32.totalorder %s79, %s80
    %p94 = scmp.eq.s32.totalorder %s16, 1
    %p95 = por %p93, %p94
    %p97 = scmp.ne.s32.totalorder %s80, %s96
    %p98 = scmp.eq.s32.totalorder %s16, 0
    %p99 = por %p97, %p98
    %s100 = ssub.s32 %s10, %s17
    %p101 = scmp.eq.s32.totalorder %s100, 0
    %s103 = sadd.s32 %s102, 1
    %s104 = scalar_select %p101, %s102, %s103
    %p107 = pneg %p101
    %p108 = scmp.eq.s32.totalorder %s10, 1
    %p109 = por %p107, %p108
    %p110 = scmp.ne.s32.totalorder %s102, %s105
    %p111 = scmp.eq.s32.totalorder %s10, 0
    %p112 = por %p110, %p111
    %p113 = scmp.ne.s32.totalorder %s102, %s105
    %p114 = scmp.eq.s32.totalorder %s15, 1
    %p115 = por %p113, %p114
    %p116 = scmp.ne.s32.totalorder %s105, %s106
    %p117 = scmp.eq.s32.totalorder %s15, 0
    %p118 = por %p116, %p117
    %p119 = scmp.ne.s32.totalorder %s105, %s106
    %p120 = scmp.eq.s32.totalorder %s16, 1
    %p121 = por %p119, %p120
    %p123 = scmp.ne.s32.totalorder %s106, %s122
    %p124 = scmp.eq.s32.totalorder %s16, 0
    %p125 = por %p123, %p124
    %s126 = ssub.s32 %s10, %s17
    %p127 = scmp.eq.s32.totalorder %s126, 0
    %s129 = sadd.s32 %s128, 1
    %s130 = scalar_select %p127, %s128, %s129
    %p133 = pneg %p127
    %p134 = scmp.eq.s32.totalorder %s10, 1
    %p135 = por %p133, %p134
    %p136 = scmp.ne.s32.totalorder %s128, %s131
    %p137 = scmp.eq.s32.totalorder %s10, 0
    %p138 = por %p136, %p137
    %p139 = scmp.ne.s32.totalorder %s128, %s131
    %p140 = scmp.eq.s32.totalorder %s15, 1
    %p141 = por %p139, %p140
    %p142 = scmp.ne.s32.totalorder %s131, %s132
    %p143 = scmp.eq.s32.totalorder %s15, 0
    %p144 = por %p142, %p143
    %p145 = scmp.ne.s32.totalorder %s131, %s132
    %p146 = scmp.eq.s32.totalorder %s16, 1
    %p147 = por %p145, %p146
    %p149 = scmp.ne.s32.totalorder %s132, %s148
    %p150 = scmp.eq.s32.totalorder %s16, 0
    %p151 = por %p149, %p150
    %p152 = scmp.le.s32.totalorder 1, %s10
    %p153 = scmp.lt.s32.totalorder %s10, 3
    %p154 = pnand %p152, %p153
    %p155 = pneg %p154
    // Predicated region
    $region9: #{transformer_decoder_forward.26} parent=5 // pred_check
      _
    $region10: #{transformer_decoder_forward.26} parent=5 // pred_check_branch
      %157 = sbr.rel (%p154) target = $region12
    $region11: #{transformer_decoder_forward.26} parent=5 // pred_region
      %s158 = ssub.s32 %s10, 1
    $region12: #{transformer_decoder_forward.26} parent=5 // pred_fallthru
      _
    %p159 = scmp.lt.s32.totalorder %s10, 2
    // Predicated region
    $region13: #{transformer_decoder_forward.26} parent=5 // pred_check
      %p160 = pneg %p159
    $region14: #{transformer_decoder_forward.26} parent=5 // pred_check_branch
      %162 = sbr.rel (%p160) target = $region16
    $region15: #{transformer_decoder_forward.26} parent=5 // pred_region
      // Predicated region
      $region17: #{transformer_decoder_forward.26} parent=15 // pred_check
        %p163 = pneg %p30
      $region18: #{transformer_decoder_forward.26} parent=15 // pred_check_branch
        %165 = sbr.rel (%p163) target = $region20
      $region19: #{transformer_decoder_forward.26} parent=15 // pred_region
        %p166 = scmp.lt.s32.totalorder %s10, 5
        %s167 = scalar_select %p166, %s10, 5
        %s168 = smul.addr %s167, 4
        %s169 = smul.addr %s168, 8
        %s170 = scalar_lea.vmem %s0, %s169
      $region20: #{transformer_decoder_forward.26} parent=15 // pred_fallthru
        _
      // Predicated region
      $region21: #{transformer_decoder_forward.26} parent=15 // pred_check
        %p171 = pneg %p58
      $region22: #{transformer_decoder_forward.26} parent=15 // pred_check_branch
        %173 = sbr.rel (%p171) target = $region24
      $region23: #{transformer_decoder_forward.26} parent=15 // pred_region
        %s174 = sadd.s32 %s10, 2
        %p175 = scmp.lt.s32.totalorder %s174, 5
        %s176 = scalar_select %p175, %s174, 5
        %s177 = smul.addr %s176, 4
        %s178 = smul.addr %s177, 8
        %s179 = scalar_lea.vmem %s1, %s178
        %s180 = sadd.s32 %s10, 2
      $region24: #{transformer_decoder_forward.26} parent=15 // pred_fallthru
        _
      // Predicated region
      $region25: #{transformer_decoder_forward.26} parent=15 // pred_check
        %p181 = pneg %p86
      $region26: #{transformer_decoder_forward.26} parent=15 // pred_check_branch
        %183 = sbr.rel (%p181) target = $region28
      $region27: #{transformer_decoder_forward.26} parent=15 // pred_region
        %s184 = sadd.s32 %s10, 4
        %p185 = scmp.lt.s32.totalorder %s184, 5
        %s186 = scalar_select %p185, %s184, 5
        %s187 = smul.addr %s186, 4
        %s188 = smul.addr %s187, 8
        %s189 = scalar_lea.vmem %s2, %s188
        %s190 = sadd.s32 %s10, 4
      $region28: #{transformer_decoder_forward.26} parent=15 // pred_fallthru
        _
      // Predicated region
      $region29: #{transformer_decoder_forward.26} parent=15 // pred_check
        %p191 = pneg %p112
      $region30: #{transformer_decoder_forward.26} parent=15 // pred_check_branch
        %193 = sbr.rel (%p191) target = $region32
      $region31: #{transformer_decoder_forward.26} parent=15 // pred_region
        %p194 = scmp.lt.s32.totalorder %s10, 1
        %s195 = scalar_select %p194, %s10, 1
        %s196 = smul.addr %s195, 8
        %s197 = scalar_lea.vmem %s3, %s196
      $region32: #{transformer_decoder_forward.26} parent=15 // pred_fallthru
        _
    $region16: #{transformer_decoder_forward.26} parent=5 // pred_fallthru
      _
    %p198 = scmp.le.s32.totalorder 1, %s10
    %p199 = scmp.lt.s32.totalorder %s10, 3
    %p200 = pnand %p198, %p199
    %p201 = pneg %p200
    // Predicated region
    $region33: #{transformer_decoder_forward.26} parent=5 // pred_check
      _
    $region34: #{transformer_decoder_forward.26} parent=5 // pred_check_branch
      %203 = sbr.rel (%p200) target = $region36
    $region35: #{transformer_decoder_forward.26} parent=5 // pred_region
      %s204 = ssub.s32 %s10, 1
      %p205 = scmp.lt.s32.totalorder %s15, 5
      %s206 = scalar_select %p205, %s15, 5
      %s207 = smul.addr %s206, 4
      %s208 = smul.addr %s207, 8
      %s209 = scalar_lea.vmem %s0, %s208
      %p210 = pneg %p36
      %p211 = pneg %p33
      %s212 = sadd.s32 %s15, 2
      %p213 = scmp.lt.s32.totalorder %s212, 5
      %s214 = scalar_select %p213, %s212, 5
      %s215 = smul.addr %s214, 4
      %s216 = smul.addr %s215, 8
      %s217 = scalar_lea.vmem %s1, %s216
      %p218 = pneg %p64
      %p219 = pneg %p61
      %s220 = sadd.s32 %s15, 4
      %p221 = scmp.lt.s32.totalorder %s220, 5
      %s222 = scalar_select %p221, %s220, 5
      %s223 = smul.addr %s222, 4
      %s224 = smul.addr %s223, 8
      %s225 = scalar_lea.vmem %s2, %s224
      %p226 = pneg %p92
      %p227 = pneg %p89
      %p228 = scmp.lt.s32.totalorder %s15, 1
      %s229 = scalar_select %p228, %s15, 1
      %s230 = smul.addr %s229, 8
      %s231 = scalar_lea.vmem %s3, %s230
      %p232 = pneg %p118
      %p233 = pneg %p115
      %p234 = pneg %p144
      %p235 = pneg %p141
      %p236 = scmp.lt.s32.totalorder %s15, 1
      %s237 = scalar_select %p236, %s15, 1
      %s238 = smul.addr %s237, 4
      %s239 = smul.addr %s238, 8
      %s240 = scalar_lea.vmem %s4, %s239
      %p241 = scmp.lt.s32.totalorder %s15, 5
      %s242 = scalar_select %p241, %s15, 5
      %s243 = smul.addr %s242, 4
      %s244 = smul.addr %s243, 8
      %s245 = scalar_lea.vmem %s0, %s244
      %s246 = sadd.s32 %s15, 2
      %p247 = scmp.lt.s32.totalorder %s246, 5
      %s248 = scalar_select %p247, %s246, 5
      %s249 = smul.addr %s248, 4
      %s250 = smul.addr %s249, 8
      %s251 = scalar_lea.vmem %s1, %s250
      %s252 = sadd.s32 %s15, 2
      %s253 = sadd.s32 %s15, 4
      %p254 = scmp.lt.s32.totalorder %s253, 5
      %s255 = scalar_select %p254, %s253, 5
      %s256 = smul.addr %s255, 4
      %s257 = smul.addr %s256, 8
      %s258 = scalar_lea.vmem %s2, %s257
      %s259 = sadd.s32 %s15, 4
      %p260 = scmp.lt.s32.totalorder %s15, 1
      %s261 = scalar_select %p260, %s15, 1
      %s262 = smul.addr %s261, 8
      %s263 = scalar_lea.vmem %s3, %s262
      %p264 = scmp.lt.s32.totalorder %s15, 1
      %s265 = scalar_select %p264, %s15, 1
      %s266 = smul.addr %s265, 4
      %s267 = smul.addr %s266, 8
      %s268 = scalar_lea.vmem %s4, %s267
      %v270 = vld [vmem:[%s245] sm:$0xff]
      %v271 = vld [vmem:[%s245 + $0x8] sm:$0xff]
      %v272 = vld [vmem:[%s245 + $0x10] sm:$0xff]
      %v273 = vld [vmem:[%s245 + $0x18] sm:$0xff]
      %v274 = vld [vmem:[%s251] sm:$0xff]
      %v275 = vld [vmem:[%s251 + $0x8] sm:$0xff]
      %v276 = vld [vmem:[%s251 + $0x10] sm:$0xff]
      %v277 = vld [vmem:[%s251 + $0x18] sm:$0xff]
      %v278 = vld [vmem:[%s258] sm:$0xff]
      %v279 = vld [vmem:[%s258 + $0x8] sm:$0xff]
      %v280 = vld [vmem:[%s258 + $0x10] sm:$0xff]
      %v281 = vld [vmem:[%s258 + $0x18] sm:$0xff]
      %v282 = vld [vmem:[%s263] sm:$0xff]
      %v283 = vmul.f32 %v270, 0.35355338
      %v284 = vmul.f32 %v271, 0.35355338
      %v285 = vmul.f32 %v272, 0.35355338
      %v286 = vmul.f32 %v273, 0.35355338
      %v287 = vpack.c.bf16 %v283, %v283
      %v288 = vpack.c.bf16 %v284, %v284
      %v289 = vpack.c.bf16 %v285, %v285
      %v290 = vpack.c.bf16 %v286, %v286
      %v291 = vpack.c.bf16 %v274, %v274
      %v292 = vpack.c.bf16 %v275, %v275
      %v293 = vpack.c.bf16 %v276, %v276
      %v294 = vpack.c.bf16 %v277, %v277
      %v295 = vpack.c.bf16 %v278, %v278
      %v296 = vpack.c.bf16 %v279, %v279
      %v297 = vpack.c.bf16 %v280, %v280
      %v298 = vpack.c.bf16 %v281, %v281
      %vm299 = vcmask 64512
      %v301 = vsel %vm299, %v287, 0
      %v304 = vsel %vm299, %v291, 0
      %306 = vmatpush.bf16.xpose.msra.mxu0 0
      %307 = vmatpush.bf16.xpose.msra.mxu0 0
      %308 = vmatpush.bf16.xpose.msra.mxu0 0
      %309 = vmatpush.bf16.xpose.msra.mxu0 0
      %310 = vmatpush.bf16.xpose.msra.mxu0 0
      %311 = vmatpush.bf16.xpose.msra.mxu0 0
      %312 = vmatpush.bf16.xpose.msra.mxu0 0
      %313 = vmatpush.bf16.xpose.msra.mxu0 %v304
      %314 = vmatmul.bf16.gmra.mxu0 %v301
      %v315 = vpop.f32.mrf.mxu0
      %v316 = vadd.f32 0.0, %v315
      %v317 = vpop.f32.mrf.mxu0
      %318 = vdwg.mxu0
      %v320 = vsel %vm299, %v288, 0
      %v323 = vsel %vm299, %v292, 0
      %325 = vmatpush.bf16.xpose.msra.mxu0 0
      %326 = vmatpush.bf16.xpose.msra.mxu0 0
      %327 = vmatpush.bf16.xpose.msra.mxu0 0
      %328 = vmatpush.bf16.xpose.msra.mxu0 0
      %329 = vmatpush.bf16.xpose.msra.mxu0 0
      %330 = vmatpush.bf16.xpose.msra.mxu0 0
      %331 = vmatpush.bf16.xpose.msra.mxu0 0
      %332 = vmatpush.bf16.xpose.msra.mxu0 %v323
      %333 = vmatmul.bf16.gmra.mxu0 %v320
      %v334 = vpop.f32.mrf.mxu0
      %v335 = vadd.f32 0.0, %v334
      %v336 = vpop.f32.mrf.mxu0
      %337 = vdwg.mxu0
      %v339 = vsel %vm299, %v289, 0
      %v342 = vsel %vm299, %v293, 0
      %344 = vmatpush.bf16.xpose.msra.mxu0 0
      %345 = vmatpush.bf16.xpose.msra.mxu0 0
      %346 = vmatpush.bf16.xpose.msra.mxu0 0
      %347 = vmatpush.bf16.xpose.msra.mxu0 0
      %348 = vmatpush.bf16.xpose.msra.mxu0 0
      %349 = vmatpush.bf16.xpose.msra.mxu0 0
      %350 = vmatpush.bf16.xpose.msra.mxu0 0
      %351 = vmatpush.bf16.xpose.msra.mxu0 %v342
      %352 = vmatmul.bf16.gmra.mxu0 %v339
      %v353 = vpop.f32.mrf.mxu0
      %v354 = vadd.f32 0.0, %v353
      %v355 = vpop.f32.mrf.mxu0
      %356 = vdwg.mxu0
      %v358 = vsel %vm299, %v290, 0
      %v361 = vsel %vm299, %v294, 0
      %363 = vmatpush.bf16.xpose.msra.mxu0 0
      %364 = vmatpush.bf16.xpose.msra.mxu0 0
      %365 = vmatpush.bf16.xpose.msra.mxu0 0
      %366 = vmatpush.bf16.xpose.msra.mxu0 0
      %367 = vmatpush.bf16.xpose.msra.mxu0 0
      %368 = vmatpush.bf16.xpose.msra.mxu0 0
      %369 = vmatpush.bf16.xpose.msra.mxu0 0
      %370 = vmatpush.bf16.xpose.msra.mxu0 %v361
      %371 = vmatmul.bf16.gmra.mxu0 %v358
      %v372 = vpop.f32.mrf.mxu0
      %v373 = vadd.f32 0.0, %v372
      %v374 = vpop.f32.mrf.mxu0
      %375 = vdwg.mxu0
      %vm376 = vcmp.lt.f32.partialorder %v282, 0.5
      %v377 = vsel %vm376, 1, 0
      %vm378 = vcmp.eq.s32.totalorder %v377, 1
      %v379 = vsel %vm378, -1e+10, %v316
      %v380 = vsel %vm378, -1e+10, %v335
      %v381 = vsel %vm378, -1e+10, %v354
      %v382 = vsel %vm378, -1e+10, %v373
      %v383 = vsel %vm299, %v379, -inf
      %384 = vmax.xlane.f32.xlu0 %v383
      %v385 = vpop.xlane.xlu0 %384
      %v386 = vsel %vm299, %v380, -inf
      %387 = vmax.xlane.f32.xlu0 %v386
      %v388 = vpop.xlane.xlu0 %387
      %v389 = vsel %vm299, %v381, -inf
      %390 = vmax.xlane.f32.xlu0 %v389
      %v391 = vpop.xlane.xlu0 %390
      %v392 = vsel %vm299, %v382, -inf
      %393 = vmax.xlane.f32.xlu0 %v392
      %v394 = vpop.xlane.xlu0 %393
      %v395 = vsub.f32 %v379, %v385
      %v396 = vsub.f32 %v380, %v388
      %v397 = vsub.f32 %v381, %v391
      %v398 = vsub.f32 %v382, %v394
      %v399 = vmul.f32 %v395, 1.442695
      %v400 = vpow.pop %v399
      %v401 = vmul.f32 %v396, 1.442695
      %v402 = vpow.pop %v401
      %v403 = vmul.f32 %v397, 1.442695
      %v404 = vpow.pop %v403
      %v405 = vmul.f32 %v398, 1.442695
      %v406 = vpow.pop %v405
      %v407 = vsel %vm299, %v400, 0.0
      %408 = vadd.xlane.f32.xlu0 %v407
      %v409 = vpop.xlane.xlu0 %408
      %v410 = vsel %vm299, %v402, 0.0
      %411 = vadd.xlane.f32.xlu0 %v410
      %v412 = vpop.xlane.xlu0 %411
      %v413 = vsel %vm299, %v404, 0.0
      %414 = vadd.xlane.f32.xlu0 %v413
      %v415 = vpop.xlane.xlu0 %414
      %v416 = vsel %vm299, %v406, 0.0
      %417 = vadd.xlane.f32.xlu0 %v416
      %v418 = vpop.xlane.xlu0 %417
      %v419 = vrcp.pop %v409
      %v420 = vrcp.pop %v412
      %v421 = vrcp.pop %v415
      %v422 = vrcp.pop %v418
      %v423 = vmul.f32 %v400, %v419
      %v424 = vmul.f32 %v402, %v420
      %v425 = vmul.f32 %v404, %v421
      %v426 = vmul.f32 %v406, %v422
      %v427 = vpack.c.bf16 %v423, %v423
      %v428 = vpack.c.bf16 %v424, %v424
      %v429 = vpack.c.bf16 %v425, %v425
      %v430 = vpack.c.bf16 %v426, %v426
      %v432 = vsel %vm299, %v427, 0
      %vm434 = vcmask 1043456
      %v436 = vsel %vm434, %v295, 0
      %438 = vmatpush.bf16.msra.mxu0 0
      %439 = vmatpush.bf16.msra.mxu0 0
      %440 = vmatpush.bf16.msra.mxu0 0
      %441 = vmatpush.bf16.msra.mxu0 0
      %442 = vmatpush.bf16.msra.mxu0 0
      %443 = vmatpush.bf16.msra.mxu0 0
      %444 = vmatpush.bf16.msra.mxu0 0
      %445 = vmatpush.bf16.msra.mxu0 %v436
      %446 = vmatmul.bf16.gmra.mxu0 %v432
      %v447 = vpop.f32.mrf.mxu0
      %v448 = vadd.f32 0.0, %v447
      %v449 = vpop.f32.mrf.mxu0
      %450 = vdwg.mxu0
      %v452 = vsel %vm299, %v428, 0
      %v455 = vsel %vm434, %v296, 0
      %457 = vmatpush.bf16.msra.mxu0 0
      %458 = vmatpush.bf16.msra.mxu0 0
      %459 = vmatpush.bf16.msra.mxu0 0
      %460 = vmatpush.bf16.msra.mxu0 0
      %461 = vmatpush.bf16.msra.mxu0 0
      %462 = vmatpush.bf16.msra.mxu0 0
      %463 = vmatpush.bf16.msra.mxu0 0
      %464 = vmatpush.bf16.msra.mxu0 %v455
      %465 = vmatmul.bf16.gmra.mxu0 %v452
      %v466 = vpop.f32.mrf.mxu0
      %v467 = vadd.f32 0.0, %v466
      %v468 = vpop.f32.mrf.mxu0
      %469 = vdwg.mxu0
      %v471 = vsel %vm299, %v429, 0
      %v474 = vsel %vm434, %v297, 0
      %476 = vmatpush.bf16.msra.mxu0 0
      %477 = vmatpush.bf16.msra.mxu0 0
      %478 = vmatpush.bf16.msra.mxu0 0
      %479 = vmatpush.bf16.msra.mxu0 0
      %480 = vmatpush.bf16.msra.mxu0 0
      %481 = vmatpush.bf16.msra.mxu0 0
      %482 = vmatpush.bf16.msra.mxu0 0
      %483 = vmatpush.bf16.msra.mxu0 %v474
      %484 = vmatmul.bf16.gmra.mxu0 %v471
      %v485 = vpop.f32.mrf.mxu0
      %v486 = vadd.f32 0.0, %v485
      %v487 = vpop.f32.mrf.mxu0
      %488 = vdwg.mxu0
      %v490 = vsel %vm299, %v430, 0
      %v493 = vsel %vm434, %v298, 0
      %495 = vmatpush.bf16.msra.mxu0 0
      %496 = vmatpush.bf16.msra.mxu0 0
      %497 = vmatpush.bf16.msra.mxu0 0
      %498 = vmatpush.bf16.msra.mxu0 0
      %499 = vmatpush.bf16.msra.mxu0 0
      %500 = vmatpush.bf16.msra.mxu0 0
      %501 = vmatpush.bf16.msra.mxu0 0
      %502 = vmatpush.bf16.msra.mxu0 %v493
      %503 = vmatmul.bf16.gmra.mxu0 %v490
      %v504 = vpop.f32.mrf.mxu0
      %v505 = vadd.f32 0.0, %v504
      %v506 = vpop.f32.mrf.mxu0
      %507 = vdwg.mxu0
      %508 = vst.msk [vmem:[%s268] sm:$0xff] %vm299, %v448
      %509 = vst.msk [vmem:[%s268 + $0x8] sm:$0xff] %vm299, %v467
      %510 = vst.msk [vmem:[%s268 + $0x10] sm:$0xff] %vm299, %v486
      %511 = vst.msk [vmem:[%s268 + $0x18] sm:$0xff] %vm299, %v505
      %p512 = scmp.lt.s32.totalorder %s15, 1
      %s513 = scalar_select %p512, %s15, 1
      %s514 = smul.addr %s513, 4
      %s515 = smul.addr %s514, 8
      %s516 = scalar_lea.vmem %s4, %s515
      // Predicated region
      $region37: #{transformer_decoder_forward.26} parent=35 // pred_check
        %p517 = pneg %p141
      $region38: #{transformer_decoder_forward.26} parent=35 // pred_check_branch
        %519 = sbr.rel (%p517) target = $region40
      $region39: #{transformer_decoder_forward.26} parent=35 // pred_region
        _
      $region40: #{transformer_decoder_forward.26} parent=35 // pred_fallthru
        _
    $region36: #{transformer_decoder_forward.26} parent=5 // pred_fallthru
      _
    %p520 = scmp.le.s32.totalorder 2, %s10
    // Predicated region
    $region41: #{transformer_decoder_forward.26} parent=5 // pred_check
      %p521 = pneg %p520
    $region42: #{transformer_decoder_forward.26} parent=5 // pred_check_branch
      %523 = sbr.rel (%p521) target = $region44
    $region43: #{transformer_decoder_forward.26} parent=5 // pred_region
      %s524 = ssub.s32 %s10, 2
      // Predicated region
      $region45: #{transformer_decoder_forward.26} parent=43 // pred_check
        %p525 = pneg %p147
      $region46: #{transformer_decoder_forward.26} parent=43 // pred_check_branch
        %527 = sbr.rel (%p525) target = $region48
      $region47: #{transformer_decoder_forward.26} parent=43 // pred_region
        %p528 = scmp.lt.s32.totalorder %s16, 1
        %s529 = scalar_select %p528, %s16, 1
        %s530 = smul.addr %s529, 4
        %s531 = smul.addr %s530, 8
        %s532 = scalar_lea.vmem %s4, %s531
      $region48: #{transformer_decoder_forward.26} parent=43 // pred_fallthru
        _
    $region44: #{transformer_decoder_forward.26} parent=5 // pred_fallthru
      _
  $region6: #{transformer_decoder_forward.26} parent=0 // loop_footer
    %s14 = sadd.s32 1, %s10
  $region7: #{transformer_decoder_forward.26} parent=0 // loop_footer_branch
    %9 = sbr.rel target = $region3
  $region8: #{transformer_decoder_forward.26} parent=0 // loop_exit
    _

// kernel: transformer_decoder_forward.30
$region0: #{transformer_decoder_forward.30}
  #allocation0 [shape = 'u32[]', space=smem, size = 0x4, offset = 0x4, fixed_abs, tag = 'smem constant byte address 0x4 - core index']
  #allocation1 [shape = 'u32[72,128]{1,0:T(1,128)}', space=vmem, size = 0x9000, scoped, tag = 'internal scratch']
  #allocation2 [shape = 'f32[16,32]{1,0:T(8,128)}', space=vmem, size = 0x2000, scoped, tag = 'scratch operand']
  %s0 = inlined_call_operand.vmem [shape: bf16[16,32], index: 0, kind: input, shape index: {}]
  %s1 = inlined_call_operand.vmem [shape: bf16[2,32,32], index: 1, kind: input, shape index: {}]
  %s2 = inlined_call_operand.vmem [shape: f32[2,1,32], index: 2, kind: input, shape index: {}]
  %s3 = inlined_call_operand.vmem [shape: f32[2,16,32], index: 3, kind: output, shape index: {}]
  %s4 = sld [smem:[#allocation0]]
  $region53: #{transformer_decoder_forward.30} parent=0
    _
  %s6 = ssub.s32 1, %s4
  %s7 = scalar_select 0, %s6, %s4
  loop: start=0, step=1, limit=4
  $region2: #{transformer_decoder_forward.30} parent=0 // loop_pre_header
    _
  $region3: #{transformer_decoder_forward.30} parent=0 // loop_header
    %s9 = sphi 0, %s13
    %p10 = scmp.ge.s32.totalorder %s9, 4
    %s16 = sphi 0, %s42
    %s17 = sphi 0, %s38
    %s18 = sphi 0, %s34
    %s19 = sphi 0, %s30
    %s20 = sphi 0, %s16
    %s21 = sphi 0, %s17
    %s22 = sphi 0, %s18
    %s23 = sphi 0, %s19
    %s24 = sphi 0, %s20
    %s25 = sphi 0, %s21
    %s26 = sphi 0, %s22
    %s27 = sphi 0, %s23
    %s47 = sphi 0, %s49
    %s50 = sphi 0, %s47
    %s51 = sphi 0, %s50
    %s67 = sphi 0, %s51
    %s77 = sphi 0, %s79
    %s80 = sphi 0, %s77
    %s81 = sphi 0, %s80
    %s97 = sphi 0, %s81
    %s105 = sphi 0, %s107
    %s108 = sphi 0, %s105
    %s109 = sphi 0, %s108
    %s125 = sphi 0, %s109
    %s135 = sphi 0, %s137
    %s138 = sphi 0, %s135
    %s139 = sphi 0, %s138
    %s155 = sphi 0, %s139
  $region4: #{transformer_decoder_forward.30} parent=0 // loop_header_branch
    %12 = sbr.rel (%p10) target = $region8
  $region5: #{transformer_decoder_forward.30} parent=0 // loop_body
    %s14 = ssub.s32 %s9, 1
    %s15 = ssub.s32 %s9, 2
    %s28 = sadd.s32 1, %s19
    %p29 = scmp.ge.s32.totalorder %s28, 1
    %s30 = scalar_select %p29, 0, %s28
    %s31 = sadd.s32 1, %s18
    %s32 = scalar_select %p29, %s31, %s18
    %p33 = scmp.ge.s32.totalorder %s32, 1
    %s34 = scalar_select %p33, 0, %s32
    %s35 = sadd.s32 1, %s17
    %s36 = scalar_select %p33, %s35, %s17
    %p37 = scmp.ge.s32.totalorder %s36, 1
    %s38 = scalar_select %p37, 0, %s36
    %s39 = sadd.s32 1, %s16
    %s40 = scalar_select %p37, %s39, %s16
    %p41 = scmp.ge.s32.totalorder %s40, 2
    %s42 = scalar_select %p41, 0, %s40
    %s43 = ssub.s32 %s17, %s38
    %s44 = ssub.s32 %s19, %s30
    %s45 = sor.u32 %s43, %s44
    %p46 = scmp.eq.s32.totalorder %s45, 0
    %s48 = sadd.s32 %s47, 1
    %s49 = scalar_select %p46, %s47, %s48
    %p52 = pneg %p46
    %p53 = scmp.eq.s32.totalorder %s9, 1
    %p54 = por %p52, %p53
    %p55 = scmp.ne.s32.totalorder %s47, %s50
    %p56 = scmp.eq.s32.totalorder %s9, 0
    %p57 = por %p55, %p56
    %p58 = scmp.ne.s32.totalorder %s47, %s50
    %p59 = scmp.eq.s32.totalorder %s14, 1
    %p60 = por %p58, %p59
    %p61 = scmp.ne.s32.totalorder %s50, %s51
    %p62 = scmp.eq.s32.totalorder %s14, 0
    %p63 = por %p61, %p62
    %p64 = scmp.ne.s32.totalorder %s50, %s51
    %p65 = scmp.eq.s32.totalorder %s15, 1
    %p66 = por %p64, %p65
    %p68 = scmp.ne.s32.totalorder %s51, %s67
    %p69 = scmp.eq.s32.totalorder %s15, 0
    %p70 = por %p68, %p69
    %s71 = ssub.s32 %s16, %s42
    %s72 = ssub.s32 %s19, %s30
    %s73 = sor.u32 %s71, %s72
    %s74 = ssub.s32 %s18, %s34
    %s75 = sor.u32 %s73, %s74
    %p76 = scmp.eq.s32.totalorder %s75, 0
    %s78 = sadd.s32 %s77, 1
    %s79 = scalar_select %p76, %s77, %s78
    %p82 = pneg %p76
    %p83 = scmp.eq.s32.totalorder %s9, 1
    %p84 = por %p82, %p83
    %p85 = scmp.ne.s32.totalorder %s77, %s80
    %p86 = scmp.eq.s32.totalorder %s9, 0
    %p87 = por %p85, %p86
    %p88 = scmp.ne.s32.totalorder %s77, %s80
    %p89 = scmp.eq.s32.totalorder %s14, 1
    %p90 = por %p88, %p89
    %p91 = scmp.ne.s32.totalorder %s80, %s81
    %p92 = scmp.eq.s32.totalorder %s14, 0
    %p93 = por %p91, %p92
    %p94 = scmp.ne.s32.totalorder %s80, %s81
    %p95 = scmp.eq.s32.totalorder %s15, 1
    %p96 = por %p94, %p95
    %p98 = scmp.ne.s32.totalorder %s81, %s97
    %p99 = scmp.eq.s32.totalorder %s15, 0
    %p100 = por %p98, %p99
    %s101 = ssub.s32 %s16, %s42
    %s102 = ssub.s32 %s18, %s34
    %s103 = sor.u32 %s101, %s102
    %p104 = scmp.eq.s32.totalorder %s103, 0
    %s106 = sadd.s32 %s105, 1
    %s107 = scalar_select %p104, %s105, %s106
    %p110 = pneg %p104
    %p111 = scmp.eq.s32.totalorder %s9, 1
    %p112 = por %p110, %p111
    %p113 = scmp.ne.s32.totalorder %s105, %s108
    %p114 = scmp.eq.s32.totalorder %s9, 0
    %p115 = por %p113, %p114
    %p116 = scmp.ne.s32.totalorder %s105, %s108
    %p117 = scmp.eq.s32.totalorder %s14, 1
    %p118 = por %p116, %p117
    %p119 = scmp.ne.s32.totalorder %s108, %s109
    %p120 = scmp.eq.s32.totalorder %s14, 0
    %p121 = por %p119, %p120
    %p122 = scmp.ne.s32.totalorder %s108, %s109
    %p123 = scmp.eq.s32.totalorder %s15, 1
    %p124 = por %p122, %p123
    %p126 = scmp.ne.s32.totalorder %s109, %s125
    %p127 = scmp.eq.s32.totalorder %s15, 0
    %p128 = por %p126, %p127
    %s129 = ssub.s32 %s16, %s42
    %s130 = ssub.s32 %s17, %s38
    %s131 = sor.u32 %s129, %s130
    %s132 = ssub.s32 %s18, %s34
    %s133 = sor.u32 %s131, %s132
    %p134 = scmp.eq.s32.totalorder %s133, 0
    %s136 = sadd.s32 %s135, 1
    %s137 = scalar_select %p134, %s135, %s136
    %p140 = pneg %p134
    %p141 = scmp.eq.s32.totalorder %s9, 1
    %p142 = por %p140, %p141
    %p143 = scmp.ne.s32.totalorder %s135, %s138
    %p144 = scmp.eq.s32.totalorder %s9, 0
    %p145 = por %p143, %p144
    %p146 = scmp.ne.s32.totalorder %s135, %s138
    %p147 = scmp.eq.s32.totalorder %s14, 1
    %p148 = por %p146, %p147
    %p149 = scmp.ne.s32.totalorder %s138, %s139
    %p150 = scmp.eq.s32.totalorder %s14, 0
    %p151 = por %p149, %p150
    %p152 = scmp.ne.s32.totalorder %s138, %s139
    %p153 = scmp.eq.s32.totalorder %s15, 1
    %p154 = por %p152, %p153
    %p156 = scmp.ne.s32.totalorder %s139, %s155
    %p157 = scmp.eq.s32.totalorder %s15, 0
    %p158 = por %p156, %p157
    %p159 = scmp.le.s32.totalorder 1, %s9
    %p160 = scmp.lt.s32.totalorder %s9, 3
    %p161 = pnand %p159, %p160
    %p162 = pneg %p161
    // Predicated region
    $region9: #{transformer_decoder_forward.30} parent=5 // pred_check
      _
    $region10: #{transformer_decoder_forward.30} parent=5 // pred_check_branch
      %164 = sbr.rel (%p161) target = $region12
    $region11: #{transformer_decoder_forward.30} parent=5 // pred_region
      %s165 = ssub.s32 %s9, 1
      // Predicated region
      $region13: #{transformer_decoder_forward.30} parent=11 // pred_check
        %p166 = pneg %p63
      $region14: #{transformer_decoder_forward.30} parent=11 // pred_check_branch
        %168 = sbr.rel (%p166) target = $region16
      $region15: #{transformer_decoder_forward.30} parent=11 // pred_region
        %s169 = smul.u32 2, %s21
        %p170 = scmp.lt.s32.totalorder %s169, 1
        %s171 = scalar_select %p170, %s169, 1
        %p172 = scmp.lt.s32.totalorder %s23, 0
        %s173 = scalar_select %p172, %s23, 0
        %s174 = sadd.s32 %s173, %s171
        %s175 = smul.addr %s174, 4
        %s176 = scalar_lea.vmem %s0, %s175
        %s177 = smul.u32 2, %s21
      $region16: #{transformer_decoder_forward.30} parent=11 // pred_fallthru
        _
    $region12: #{transformer_decoder_forward.30} parent=5 // pred_fallthru
      _
    %p178 = scmp.lt.s32.totalorder %s9, 2
    // Predicated region
    $region17: #{transformer_decoder_forward.30} parent=5 // pred_check
      %p179 = pneg %p178
    $region18: #{transformer_decoder_forward.30} parent=5 // pred_check_branch
      %181 = sbr.rel (%p179) target = $region20
    $region19: #{transformer_decoder_forward.30} parent=5 // pred_region
      // Predicated region
      $region21: #{transformer_decoder_forward.30} parent=19 // pred_check
        %p182 = pneg %p87
      $region22: #{transformer_decoder_forward.30} parent=19 // pred_check_branch
        %184 = sbr.rel (%p182) target = $region24
      $region23: #{transformer_decoder_forward.30} parent=19 // pred_region
        %s185 = smul.u32 4, %s19
        %p186 = scmp.lt.s32.totalorder %s16, 1
        %s187 = scalar_select %p186, %s16, 1
        %p188 = scmp.lt.s32.totalorder %s185, 3
        %s189 = scalar_select %p188, %s185, 3
        %p190 = scmp.lt.s32.totalorder %s18, 0
        %s191 = scalar_select %p190, %s18, 0
        %s192 = sadd.s32 %s191, %s189
        %s193 = smul.addr %s187, 4
        %s194 = sadd.s32 %s192, %s193
        %s195 = smul.addr %s194, 4
        %s196 = scalar_lea.vmem %s1, %s195
        %s197 = smul.u32 4, %s19
      $region24: #{transformer_decoder_forward.30} parent=19 // pred_fallthru
        _
      // Predicated region
      $region25: #{transformer_decoder_forward.30} parent=19 // pred_check
        %p198 = pneg %p115
      $region26: #{transformer_decoder_forward.30} parent=19 // pred_check_branch
        %200 = sbr.rel (%p198) target = $region28
      $region27: #{transformer_decoder_forward.30} parent=19 // pred_region
        %p201 = scmp.lt.s32.totalorder %s16, 1
        %s202 = scalar_select %p201, %s16, 1
        %p203 = scmp.lt.s32.totalorder %s18, 0
        %s204 = scalar_select %p203, %s18, 0
        %s205 = sadd.s32 %s204, %s202
        %s206 = scalar_lea.vmem %s2, %s205
      $region28: #{transformer_decoder_forward.30} parent=19 // pred_fallthru
        _
    $region20: #{transformer_decoder_forward.30} parent=5 // pred_fallthru
      _
    %p207 = scmp.le.s32.totalorder 1, %s9
    %p208 = scmp.lt.s32.totalorder %s9, 3
    %p209 = pnand %p207, %p208
    %p210 = pneg %p209
    // Predicated region
    $region29: #{transformer_decoder_forward.30} parent=5 // pred_check
      _
    $region30: #{transformer_decoder_forward.30} parent=5 // pred_check_branch
      %212 = sbr.rel (%p209) target = $region32
    $region31: #{transformer_decoder_forward.30} parent=5 // pred_region
      %s213 = ssub.s32 %s9, 1
      %s214 = smul.u32 2, %s21
      %p215 = scmp.lt.s32.totalorder %s214, 1
      %s216 = scalar_select %p215, %s214, 1
      %p217 = scmp.lt.s32.totalorder %s23, 0
      %s218 = scalar_select %p217, %s23, 0
      %s219 = sadd.s32 %s218, %s216
      %s220 = smul.addr %s219, 4
      %s221 = scalar_lea.vmem %s0, %s220
      %p222 = pneg %p63
      %p223 = pneg %p60
      %s224 = smul.u32 4, %s23
      %p225 = scmp.lt.s32.totalorder %s20, 1
      %s226 = scalar_select %p225, %s20, 1
      %p227 = scmp.lt.s32.totalorder %s224, 3
      %s228 = scalar_select %p227, %s224, 3
      %p229 = scmp.lt.s32.totalorder %s22, 0
      %s230 = scalar_select %p229, %s22, 0
      %s231 = sadd.s32 %s230, %s228
      %s232 = smul.addr %s226, 4
      %s233 = sadd.s32 %s231, %s232
      %s234 = smul.addr %s233, 4
      %s235 = scalar_lea.vmem %s1, %s234
      %p236 = pneg %p93
      %p237 = pneg %p90
      %p238 = scmp.lt.s32.totalorder %s20, 1
      %s239 = scalar_select %p238, %s20, 1
      %p240 = scmp.lt.s32.totalorder %s22, 0
      %s241 = scalar_select %p240, %s22, 0
      %s242 = sadd.s32 %s241, %s239
      %s243 = scalar_lea.vmem %s2, %s242
      %p244 = pneg %p121
      %p245 = pneg %p118
      %p246 = pneg %p151
      %p247 = pneg %p148
      %s248 = smul.u32 2, %s21
      %p249 = scmp.lt.s32.totalorder %s20, 1
      %s250 = scalar_select %p249, %s20, 1
      %p251 = scmp.lt.s32.totalorder %s248, 1
      %s252 = scalar_select %p251, %s248, 1
      %p253 = scmp.lt.s32.totalorder %s22, 0
      %s254 = scalar_select %p253, %s22, 0
      %s255 = sadd.s32 %s254, %s252
      %s256 = smul.addr %s250, 2
      %s257 = sadd.s32 %s255, %s256
      %s258 = smul.addr %s257, 8
      %s259 = scalar_lea.vmem %s3, %s258
      %s260 = smul.u32 2, %s21
      %p261 = scmp.lt.s32.totalorder %s260, 1
      %s262 = scalar_select %p261, %s260, 1
      %p263 = scmp.lt.s32.totalorder %s23, 0
      %s264 = scalar_select %p263, %s23, 0
      %s265 = sadd.s32 %s264, %s262
      %s266 = smul.addr %s265, 4
      %s267 = scalar_lea.vmem %s0, %s266
      %s268 = smul.u32 2, %s21
      %s269 = smul.u32 4, %s23
      %p270 = scmp.lt.s32.totalorder %s20, 1
      %s271 = scalar_select %p270, %s20, 1
      %p272 = scmp.lt.s32.totalorder %s269, 3
      %s273 = scalar_select %p272, %s269, 3
      %p274 = scmp.lt.s32.totalorder %s22, 0
      %s275 = scalar_select %p274, %s22, 0
      %s276 = sadd.s32 %s275, %s273
      %s277 = smul.addr %s271, 4
      %s278 = sadd.s32 %s276, %s277
      %s279 = smul.addr %s278, 4
      %s280 = scalar_lea.vmem %s1, %s279
      %s281 = smul.u32 4, %s23
      %p282 = scmp.lt.s32.totalorder %s20, 1
      %s283 = scalar_select %p282, %s20, 1
      %p284 = scmp.lt.s32.totalorder %s22, 0
      %s285 = scalar_select %p284, %s22, 0
      %s286 = sadd.s32 %s285, %s283
      %s287 = scalar_lea.vmem %s2, %s286
      %s288 = smul.u32 2, %s21
      %p289 = scmp.lt.s32.totalorder %s20, 1
      %s290 = scalar_select %p289, %s20, 1
      %p291 = scmp.lt.s32.totalorder %s288, 1
      %s292 = scalar_select %p291, %s288, 1
      %p293 = scmp.lt.s32.totalorder %s22, 0
      %s294 = scalar_select %p293, %s22, 0
      %s295 = sadd.s32 %s294, %s292
      %s296 = smul.addr %s290, 2
      %s297 = sadd.s32 %s295, %s296
      %s298 = smul.addr %s297, 8
      %s299 = scalar_lea.vmem %s3, %s298
      %s300 = smul.u32 2, %s21
      %p302 = scmp.eq.s32.totalorder %s23, 0
      // Predicated region
      $region33: #{transformer_decoder_forward.30} parent=31 // pred_check
        %p303 = pneg %p302
      $region34: #{transformer_decoder_forward.30} parent=31 // pred_check_branch
        %305 = sbr.rel (%p303) target = $region36
      $region35: #{transformer_decoder_forward.30} parent=31 // pred_region
        %vm306 = vcmask 261120
        %307 = vst.msk [vmem:[#allocation2] sm:$0xff] %vm306, 0.0
        %308 = vst.msk [vmem:[#allocation2 + $0x8] sm:$0xff] %vm306, 0.0
      $region36: #{transformer_decoder_forward.30} parent=31 // pred_fallthru
        _
      %v309 = vld [vmem:[#allocation2] sm:$0xff]
      %v310 = vld [vmem:[#allocation2 + $0x8] sm:$0xff]
      %v311 = vld [vmem:[%s267] sm:$0xf]
      %v312 = vld [vmem:[%s267 + $0x4] sm:$0xf]
      %v313 = vld [vmem:[%s280] sm:$0xf]
      %v314 = vld [vmem:[%s280 + $0x4] sm:$0xf]
      %v315 = vld [vmem:[%s280 + $0x8] sm:$0xf]
      %v316 = vld [vmem:[%s280 + $0xc] sm:$0xf]
      %v319 = vunpack.c.l.b16 %v311
      %v320 = vunpack.c.l.b16 %v312
      %v321 = vpack.c.b16 %v320, %v319
      %v326 = vunpack.c.l.b16 %v313
      %v327 = vunpack.c.l.b16 %v314
      %v328 = vunpack.c.l.b16 %v315
      %v329 = vunpack.c.l.b16 %v316
      %v330 = vpack.c.b16 %v327, %v326
      %v331 = vpack.c.b16 %v329, %v328
      %vm334 = vcmask 261120
      %v336 = vsel %vm334, %v321, 0
      %338 = vmatpush.bf16.msra.mxu0 0
      %339 = vmatpush.bf16.msra.mxu0 0
      %340 = vmatpush.bf16.msra.mxu0 0
      %341 = vmatpush.bf16.msra.mxu0 0
      %342 = vmatpush.bf16.msra.mxu0 0
      %343 = vmatpush.bf16.msra.mxu0 0
      %344 = vmatpush.bf16.msra.mxu0 %v331
      %345 = vmatpush.bf16.msra.mxu0 %v330
      %346 = vmatmul.bf16.gmra.mxu0 %v336
      %v347 = vpop.f32.mrf.mxu0
      %v348 = vadd.f32 0.0, %v347
      %v349 = vpop.f32.mrf.mxu0
      %v350 = vadd.f32 0.0, %v349
      %351 = vdwg.mxu0
      %v352 = vadd.f32 %v309, %v348
      %v353 = vadd.f32 %v310, %v350
      %354 = vst.msk [vmem:[#allocation2] sm:$0xff] %vm334, %v352
      %355 = vst.msk [vmem:[#allocation2 + $0x8] sm:$0xff] %vm334, %v353
      // Predicated region
      $region37: #{transformer_decoder_forward.30} parent=31 // pred_check
        %p356 = pneg %p302
      $region38: #{transformer_decoder_forward.30} parent=31 // pred_check_branch
        %358 = sbr.rel (%p356) target = $region40
      $region39: #{transformer_decoder_forward.30} parent=31 // pred_region
        %v359 = vld [vmem:[#allocation2] sm:$0xff]
        %v360 = vld [vmem:[#allocation2 + $0x8] sm:$0xff]
        %v361 = vld [vmem:[%s287] sm:$0x1]
        %v363 = vperm.slane %v361, 0
        %v365 = vadd.f32 %v359, %v363
        %v366 = vadd.f32 %v360, %v363
        %367 = vst.msk [vmem:[%s299] sm:$0xff] %vm334, %v365
        %368 = vst.msk [vmem:[%s299 + $0x8] sm:$0xff] %vm334, %v366
      $region40: #{transformer_decoder_forward.30} parent=31 // pred_fallthru
        _
      %s369 = smul.u32 2, %s21
      %p370 = scmp.lt.s32.totalorder %s20, 1
      %s371 = scalar_select %p370, %s20, 1
      %p372 = scmp.lt.s32.totalorder %s369, 1
      %s373 = scalar_select %p372, %s369, 1
      %p374 = scmp.lt.s32.totalorder %s22, 0
      %s375 = scalar_select %p374, %s22, 0
      %s376 = sadd.s32 %s375, %s373
      %s377 = smul.addr %s371, 2
      %s378 = sadd.s32 %s376, %s377
      %s379 = smul.addr %s378, 8
      %s380 = scalar_lea.vmem %s3, %s379
      // Predicated region
      $region41: #{transformer_decoder_forward.30} parent=31 // pred_check
        %p381 = pneg %p148
      $region42: #{transformer_decoder_forward.30} parent=31 // pred_check_branch
        %383 = sbr.rel (%p381) target = $region44
      $region43: #{transformer_decoder_forward.30} parent=31 // pred_region
        %s384 = smul.u32 2, %s21
      $region44: #{transformer_decoder_forward.30} parent=31 // pred_fallthru
        _
    $region32: #{transformer_decoder_forward.30} parent=5 // pred_fallthru
      _
    %p385 = scmp.le.s32.totalorder 2, %s9
    // Predicated region
    $region45: #{transformer_decoder_forward.30} parent=5 // pred_check
      %p386 = pneg %p385
    $region46: #{transformer_decoder_forward.30} parent=5 // pred_check_branch
      %388 = sbr.rel (%p386) target = $region48
    $region47: #{transformer_decoder_forward.30} parent=5 // pred_region
      %s389 = ssub.s32 %s9, 2
      // Predicated region
      $region49: #{transformer_decoder_forward.30} parent=47 // pred_check
        %p390 = pneg %p154
      $region50: #{transformer_decoder_forward.30} parent=47 // pred_check_branch
        %392 = sbr.rel (%p390) target = $region52
      $region51: #{transformer_decoder_forward.30} parent=47 // pred_region
        %s393 = smul.u32 2, %s25
        %p394 = scmp.lt.s32.totalorder %s24, 1
        %s395 = scalar_select %p394, %s24, 1
        %p396 = scmp.lt.s32.totalorder %s393, 1
        %s397 = scalar_select %p396, %s393, 1
        %p398 = scmp.lt.s32.totalorder %s26, 0
        %s399 = scalar_select %p398, %s26, 0
        %s400 = sadd.s32 %s399, %s397
        %s401 = smul.addr %s395, 2
        %s402 = sadd.s32 %s400, %s401
        %s403 = smul.addr %s402, 8
        %s404 = scalar_lea.vmem %s3, %s403
      $region52: #{transformer_decoder_forward.30} parent=47 // pred_fallthru
        _
    $region48: #{transformer_decoder_forward.30} parent=5 // pred_fallthru
      _
  $region6: #{transformer_decoder_forward.30} parent=0 // loop_footer
    %s13 = sadd.s32 1, %s9
  $region7: #{transformer_decoder_forward.30} parent=0 // loop_footer_branch
    %8 = sbr.rel target = $region3
  $region8: #{transformer_decoder_forward.30} parent=0 // loop_exit
    _

// kernel: transformer_decoder_forward.34
$region0: #{transformer_decoder_forward.34}
  #allocation0 [shape = 'u32[]', space=smem, size = 0x4, offset = 0x4, fixed_abs, tag = 'smem constant byte address 0x4 - core index']
  #allocation1 [shape = 'u32[72,128]{1,0:T(1,128)}', space=vmem, size = 0x9000, scoped, tag = 'internal scratch']
  #allocation2 [shape = 'f32[16,64]{1,0:T(8,128)}', space=vmem, size = 0x2000, scoped, tag = 'scratch operand']
  %s0 = inlined_call_operand.vmem [shape: bf16[16,32], index: 0, kind: input, shape index: {}]
  %s1 = inlined_call_operand.vmem [shape: bf16[1,32,64], index: 1, kind: input, shape index: {}]
  %s2 = inlined_call_operand.vmem [shape: f32[1,1,64], index: 2, kind: input, shape index: {}]
  %s3 = inlined_call_operand.vmem [shape: f32[1,16,64], index: 3, kind: output, shape index: {}]
  %s4 = sld [smem:[#allocation0]]
  $region30: #{transformer_decoder_forward.34} parent=0
    _
  %s6 = ssub.s32 1, %s4
  %s7 = scalar_select 0, %s6, %s4
  // Predicated region
  $region2: #{transformer_decoder_forward.34} parent=0 // pred_check
    _
  $region3: #{transformer_decoder_forward.34} parent=0 // pred_check_branch
    %9 = sbr.rel (0) target = $region5
  $region4: #{transformer_decoder_forward.34} parent=0 // pred_region
    _
  $region5: #{transformer_decoder_forward.34} parent=0 // pred_fallthru
    _
  // Predicated region
  $region6: #{transformer_decoder_forward.34} parent=0 // pred_check
    _
  $region7: #{transformer_decoder_forward.34} parent=0 // pred_check_branch
    %11 = sbr.rel (0) target = $region9
  $region8: #{transformer_decoder_forward.34} parent=0 // pred_region
    _
  $region9: #{transformer_decoder_forward.34} parent=0 // pred_fallthru
    _
  // Predicated region
  $region10: #{transformer_decoder_forward.34} parent=0 // pred_check
    _
  $region11: #{transformer_decoder_forward.34} parent=0 // pred_check_branch
    %13 = sbr.rel (0) target = $region13
  $region12: #{transformer_decoder_forward.34} parent=0 // pred_region
    _
  $region13: #{transformer_decoder_forward.34} parent=0 // pred_fallthru
    _
  %p15 = scmp.eq.s32.totalorder 0, 0
  // Predicated region
  $region14: #{transformer_decoder_forward.34} parent=0 // pred_check
    %p16 = pneg %p15
  $region15: #{transformer_decoder_forward.34} parent=0 // pred_check_branch
    %18 = sbr.rel (%p16) target = $region17
  $region16: #{transformer_decoder_forward.34} parent=0 // pred_region
    %vm19 = vcmask 523264
    %20 = vst.msk [vmem:[#allocation2] sm:$0xff] %vm19, 0.0
    %21 = vst.msk [vmem:[#allocation2 + $0x8] sm:$0xff] %vm19, 0.0
  $region17: #{transformer_decoder_forward.34} parent=0 // pred_fallthru
    _
  %v22 = vld [vmem:[#allocation2] sm:$0xff]
  %v23 = vld [vmem:[#allocation2 + $0x8] sm:$0xff]
  %v24 = vld [vmem:[%s0] sm:$0xf]
  %v25 = vld [vmem:[%s0 + $0x4] sm:$0xf]
  %v26 = vld [vmem:[%s1] sm:$0xf]
  %v27 = vld [vmem:[%s1 + $0x4] sm:$0xf]
  %v28 = vld [vmem:[%s1 + $0x8] sm:$0xf]
  %v29 = vld [vmem:[%s1 + $0xc] sm:$0xf]
  %v32 = vunpack.c.l.b16 %v24
  %v33 = vunpack.c.l.b16 %v25
  %v34 = vpack.c.b16 %v33, %v32
  %v39 = vunpack.c.l.b16 %v26
  %v40 = vunpack.c.l.b16 %v27
  %v41 = vunpack.c.l.b16 %v28
  %v42 = vunpack.c.l.b16 %v29
  %v43 = vpack.c.b16 %v40, %v39
  %v44 = vpack.c.b16 %v42, %v41
  %vm47 = vcmask 261120
  %v49 = vsel %vm47, %v34, 0
  %51 = vmatpush.bf16.msra.mxu0 0
  %52 = vmatpush.bf16.msra.mxu0 0
  %53 = vmatpush.bf16.msra.mxu0 0
  %54 = vmatpush.bf16.msra.mxu0 0
  %55 = vmatpush.bf16.msra.mxu0 0
  %56 = vmatpush.bf16.msra.mxu0 0
  %57 = vmatpush.bf16.msra.mxu0 %v44
  %58 = vmatpush.bf16.msra.mxu0 %v43
  %59 = vmatmul.bf16.gmra.mxu0 %v49
  %v60 = vpop.f32.mrf.mxu0
  %v61 = vadd.f32 0.0, %v60
  %v62 = vpop.f32.mrf.mxu0
  %v63 = vadd.f32 0.0, %v62
  %64 = vdwg.mxu0
  %v65 = vadd.f32 %v22, %v61
  %v66 = vadd.f32 %v23, %v63
  %vm67 = vcmask 523264
  %68 = vst.msk [vmem:[#allocation2] sm:$0xff] %vm67, %v65
  %69 = vst.msk [vmem:[#allocation2 + $0x8] sm:$0xff] %vm67, %v66
  // Predicated region
  $region18: #{transformer_decoder_forward.34} parent=0 // pred_check
    %p70 = pneg %p15
  $region19: #{transformer_decoder_forward.34} parent=0 // pred_check_branch
    %72 = sbr.rel (%p70) target = $region21
  $region20: #{transformer_decoder_forward.34} parent=0 // pred_region
    %v73 = vld [vmem:[#allocation2] sm:$0xff]
    %v74 = vld [vmem:[#allocation2 + $0x8] sm:$0xff]
    %v75 = vld [vmem:[%s2] sm:$0x1]
    %v77 = vperm.slane %v75, 0
    %v79 = vadd.f32 %v73, %v77
    %v80 = vadd.f32 %v74, %v77
    %v81 = vmax.f32 %v79, 0.0
    %v82 = vmax.f32 %v80, 0.0
    %83 = vst.msk [vmem:[%s3] sm:$0xff] %vm67, %v81
    %84 = vst.msk [vmem:[%s3 + $0x8] sm:$0xff] %vm67, %v82
  $region21: #{transformer_decoder_forward.34} parent=0 // pred_fallthru
    _
  // Predicated region
  $region22: #{transformer_decoder_forward.34} parent=0 // pred_check
    _
  $region23: #{transformer_decoder_forward.34} parent=0 // pred_check_branch
    %86 = sbr.rel (0) target = $region25
  $region24: #{transformer_decoder_forward.34} parent=0 // pred_region
    _
  $region25: #{transformer_decoder_forward.34} parent=0 // pred_fallthru
    _
  // Predicated region
  $region26: #{transformer_decoder_forward.34} parent=0 // pred_check
    _
  $region27: #{transformer_decoder_forward.34} parent=0 // pred_check_branch
    %88 = sbr.rel (0) target = $region29
  $region28: #{transformer_decoder_forward.34} parent=0 // pred_region
    _
  $region29: #{transformer_decoder_forward.34} parent=0 // pred_fallthru
    _

// kernel: transformer_decoder_forward.31
$region0: #{transformer_decoder_forward.31}
  #allocation0 [shape = 'u32[]', space=smem, size = 0x4, offset = 0x4, fixed_abs, tag = 'smem constant byte address 0x4 - core index']
  #allocation1 [shape = 'u32[72,128]{1,0:T(1,128)}', space=vmem, size = 0x9000, scoped, tag = 'internal scratch']
  %s0 = inlined_call_operand.vmem [shape: f32[2,4,8,8], index: 0, kind: input, shape index: {}]
  %s1 = inlined_call_operand.vmem [shape: f32[4,4,8,8], index: 1, kind: input, shape index: {}, may-alias: {1,2}]
  %s2 = inlined_call_operand.vmem [shape: f32[4,4,8,8], index: 2, kind: input, shape index: {}, may-alias: {1,2}]
  %s3 = inlined_call_operand.vmem [shape: f32[2,1,8,8], index: 3, kind: input, shape index: {}]
  %s4 = inlined_call_operand.vmem [shape: f32[2,4,8,8], index: 4, kind: output, shape index: {}]
  %s5 = sld [smem:[#allocation0]]
  $region49: #{transformer_decoder_forward.31} parent=0
    _
  %s7 = ssub.s32 1, %s5
  %s8 = scalar_select 0, %s7, %s5
  loop: start=0, step=1, limit=4
  $region2: #{transformer_decoder_forward.31} parent=0 // loop_pre_header
    _
  $region3: #{transformer_decoder_forward.31} parent=0 // loop_header
    %s10 = sphi 0, %s14
    %p11 = scmp.ge.s32.totalorder %s10, 4
    %s20 = sphi 0, %s22
    %s23 = sphi 0, %s20
    %s24 = sphi 0, %s23
    %s40 = sphi 0, %s24
    %s46 = sphi 0, %s48
    %s49 = sphi 0, %s46
    %s50 = sphi 0, %s49
    %s66 = sphi 0, %s50
    %s74 = sphi 0, %s76
    %s77 = sphi 0, %s74
    %s78 = sphi 0, %s77
    %s94 = sphi 0, %s78
    %s100 = sphi 0, %s102
    %s103 = sphi 0, %s100
    %s104 = sphi 0, %s103
    %s120 = sphi 0, %s104
    %s126 = sphi 0, %s128
    %s129 = sphi 0, %s126
    %s130 = sphi 0, %s129
    %s146 = sphi 0, %s130
  $region4: #{transformer_decoder_forward.31} parent=0 // loop_header_branch
    %13 = sbr.rel (%p11) target = $region8
  $region5: #{transformer_decoder_forward.31} parent=0 // loop_body
    %s15 = ssub.s32 %s10, 1
    %s16 = ssub.s32 %s10, 2
    %s17 = sadd.s32 %s10, 1
    %s18 = ssub.s32 %s10, %s17
    %p19 = scmp.eq.s32.totalorder %s18, 0
    %s21 = sadd.s32 %s20, 1
    %s22 = scalar_select %p19, %s20, %s21
    %p25 = pneg %p19
    %p26 = scmp.eq.s32.totalorder %s10, 1
    %p27 = por %p25, %p26
    %p28 = scmp.ne.s32.totalorder %s20, %s23
    %p29 = scmp.eq.s32.totalorder %s10, 0
    %p30 = por %p28, %p29
    %p31 = scmp.ne.s32.totalorder %s20, %s23
    %p32 = scmp.eq.s32.totalorder %s15, 1
    %p33 = por %p31, %p32
    %p34 = scmp.ne.s32.totalorder %s23, %s24
    %p35 = scmp.eq.s32.totalorder %s15, 0
    %p36 = por %p34, %p35
    %p37 = scmp.ne.s32.totalorder %s23, %s24
    %p38 = scmp.eq.s32.totalorder %s16, 1
    %p39 = por %p37, %p38
    %p41 = scmp.ne.s32.totalorder %s24, %s40
    %p42 = scmp.eq.s32.totalorder %s16, 0
    %p43 = por %p41, %p42
    %s44 = ssub.s32 %s10, %s17
    %p45 = scmp.eq.s32.totalorder %s44, 0
    %s47 = sadd.s32 %s46, 1
    %s48 = scalar_select %p45, %s46, %s47
    %p51 = pneg %p45
    %p52 = scmp.eq.s32.totalorder %s10, 1
    %p53 = por %p51, %p52
    %p54 = scmp.ne.s32.totalorder %s46, %s49
    %p55 = scmp.eq.s32.totalorder %s10, 0
    %p56 = por %p54, %p55
    %p57 = scmp.ne.s32.totalorder %s46, %s49
    %p58 = scmp.eq.s32.totalorder %s15, 1
    %p59 = por %p57, %p58
    %p60 = scmp.ne.s32.totalorder %s49, %s50
    %p61 = scmp.eq.s32.totalorder %s15, 0
    %p62 = por %p60, %p61
    %p63 = scmp.ne.s32.totalorder %s49, %s50
    %p64 = scmp.eq.s32.totalorder %s16, 1
    %p65 = por %p63, %p64
    %p67 = scmp.ne.s32.totalorder %s50, %s66
    %p68 = scmp.eq.s32.totalorder %s16, 0
    %p69 = por %p67, %p68
    %s70 = sadd.s32 %s10, 2
    %s71 = sadd.s32 %s17, 2
    %s72 = ssub.s32 %s70, %s71
    %p73 = scmp.eq.s32.totalorder %s72, 0
    %s75 = sadd.s32 %s74, 1
    %s76 = scalar_select %p73, %s74, %s75
    %p79 = pneg %p73
    %p80 = scmp.eq.s32.totalorder %s10, 1
    %p81 = por %p79, %p80
    %p82 = scmp.ne.s32.totalorder %s74, %s77
    %p83 = scmp.eq.s32.totalorder %s10, 0
    %p84 = por %p82, %p83
    %p85 = scmp.ne.s32.totalorder %s74, %s77
    %p86 = scmp.eq.s32.totalorder %s15, 1
    %p87 = por %p85, %p86
    %p88 = scmp.ne.s32.totalorder %s77, %s78
    %p89 = scmp.eq.s32.totalorder %s15, 0
    %p90 = por %p88, %p89
    %p91 = scmp.ne.s32.totalorder %s77, %s78
    %p92 = scmp.eq.s32.totalorder %s16, 1
    %p93 = por %p91, %p92
    %p95 = scmp.ne.s32.totalorder %s78, %s94
    %p96 = scmp.eq.s32.totalorder %s16, 0
    %p97 = por %p95, %p96
    %s98 = ssub.s32 %s10, %s17
    %p99 = scmp.eq.s32.totalorder %s98, 0
    %s101 = sadd.s32 %s100, 1
    %s102 = scalar_select %p99, %s100, %s101
    %p105 = pneg %p99
    %p106 = scmp.eq.s32.totalorder %s10, 1
    %p107 = por %p105, %p106
    %p108 = scmp.ne.s32.totalorder %s100, %s103
    %p109 = scmp.eq.s32.totalorder %s10, 0
    %p110 = por %p108, %p109
    %p111 = scmp.ne.s32.totalorder %s100, %s103
    %p112 = scmp.eq.s32.totalorder %s15, 1
    %p113 = por %p111, %p112
    %p114 = scmp.ne.s32.totalorder %s103, %s104
    %p115 = scmp.eq.s32.totalorder %s15, 0
    %p116 = por %p114, %p115
    %p117 = scmp.ne.s32.totalorder %s103, %s104
    %p118 = scmp.eq.s32.totalorder %s16, 1
    %p119 = por %p117, %p118
    %p121 = scmp.ne.s32.totalorder %s104, %s120
    %p122 = scmp.eq.s32.totalorder %s16, 0
    %p123 = por %p121, %p122
    %s124 = ssub.s32 %s10, %s17
    %p125 = scmp.eq.s32.totalorder %s124, 0
    %s127 = sadd.s32 %s126, 1
    %s128 = scalar_select %p125, %s126, %s127
    %p131 = pneg %p125
    %p132 = scmp.eq.s32.totalorder %s10, 1
    %p133 = por %p131, %p132
    %p134 = scmp.ne.s32.totalorder %s126, %s129
    %p135 = scmp.eq.s32.totalorder %s10, 0
    %p136 = por %p134, %p135
    %p137 = scmp.ne.s32.totalorder %s126, %s129
    %p138 = scmp.eq.s32.totalorder %s15, 1
    %p139 = por %p137, %p138
    %p140 = scmp.ne.s32.totalorder %s129, %s130
    %p141 = scmp.eq.s32.totalorder %s15, 0
    %p142 = por %p140, %p141
    %p143 = scmp.ne.s32.totalorder %s129, %s130
    %p144 = scmp.eq.s32.totalorder %s16, 1
    %p145 = por %p143, %p144
    %p147 = scmp.ne.s32.totalorder %s130, %s146
    %p148 = scmp.eq.s32.totalorder %s16, 0
    %p149 = por %p147, %p148
    %p150 = scmp.le.s32.totalorder 1, %s10
    %p151 = scmp.lt.s32.totalorder %s10, 3
    %p152 = pnand %p150, %p151
    %p153 = pneg %p152
    // Predicated region
    $region9: #{transformer_decoder_forward.31} parent=5 // pred_check
      _
    $region10: #{transformer_decoder_forward.31} parent=5 // pred_check_branch
      %155 = sbr.rel (%p152) target = $region12
    $region11: #{transformer_decoder_forward.31} parent=5 // pred_region
      %s156 = ssub.s32 %s10, 1
    $region12: #{transformer_decoder_forward.31} parent=5 // pred_fallthru
      _
    %p157 = scmp.lt.s32.totalorder %s10, 2
    // Predicated region
    $region13: #{transformer_decoder_forward.31} parent=5 // pred_check
      %p158 = pneg %p157
    $region14: #{transformer_decoder_forward.31} parent=5 // pred_check_branch
      %160 = sbr.rel (%p158) target = $region16
    $region15: #{transformer_decoder_forward.31} parent=5 // pred_region
      // Predicated region
      $region17: #{transformer_decoder_forward.31} parent=15 // pred_check
        %p161 = pneg %p30
      $region18: #{transformer_decoder_forward.31} parent=15 // pred_check_branch
        %163 = sbr.rel (%p161) target = $region20
      $region19: #{transformer_decoder_forward.31} parent=15 // pred_region
        %p164 = scmp.lt.s32.totalorder %s10, 1
        %s165 = scalar_select %p164, %s10, 1
        %s166 = smul.addr %s165, 4
        %s167 = smul.addr %s166, 8
        %s168 = scalar_lea.vmem %s0, %s167
      $region20: #{transformer_decoder_forward.31} parent=15 // pred_fallthru
        _
      // Predicated region
      $region21: #{transformer_decoder_forward.31} parent=15 // pred_check
        %p169 = pneg %p56
      $region22: #{transformer_decoder_forward.31} parent=15 // pred_check_branch
        %171 = sbr.rel (%p169) target = $region24
      $region23: #{transformer_decoder_forward.31} parent=15 // pred_region
        %p172 = scmp.lt.s32.totalorder %s10, 3
        %s173 = scalar_select %p172, %s10, 3
        %s174 = smul.addr %s173, 4
        %s175 = smul.addr %s174, 8
        %s176 = scalar_lea.vmem %s1, %s175
      $region24: #{transformer_decoder_forward.31} parent=15 // pred_fallthru
        _
      // Predicated region
      $region25: #{transformer_decoder_forward.31} parent=15 // pred_check
        %p177 = pneg %p84
      $region26: #{transformer_decoder_forward.31} parent=15 // pred_check_branch
        %179 = sbr.rel (%p177) target = $region28
      $region27: #{transformer_decoder_forward.31} parent=15 // pred_region
        %s180 = sadd.s32 %s10, 2
        %p181 = scmp.lt.s32.totalorder %s180, 3
        %s182 = scalar_select %p181, %s180, 3
        %s183 = smul.addr %s182, 4
        %s184 = smul.addr %s183, 8
        %s185 = scalar_lea.vmem %s2, %s184
        %s186 = sadd.s32 %s10, 2
      $region28: #{transformer_decoder_forward.31} parent=15 // pred_fallthru
        _
      // Predicated region
      $region29: #{transformer_decoder_forward.31} parent=15 // pred_check
        %p187 = pneg %p110
      $region30: #{transformer_decoder_forward.31} parent=15 // pred_check_branch
        %189 = sbr.rel (%p187) target = $region32
      $region31: #{transformer_decoder_forward.31} parent=15 // pred_region
        %p190 = scmp.lt.s32.totalorder %s10, 1
        %s191 = scalar_select %p190, %s10, 1
        %s192 = smul.addr %s191, 8
        %s193 = scalar_lea.vmem %s3, %s192
      $region32: #{transformer_decoder_forward.31} parent=15 // pred_fallthru
        _
    $region16: #{transformer_decoder_forward.31} parent=5 // pred_fallthru
      _
    %p194 = scmp.le.s32.totalorder 1, %s10
    %p195 = scmp.lt.s32.totalorder %s10, 3
    %p196 = pnand %p194, %p195
    %p197 = pneg %p196
    // Predicated region
    $region33: #{transformer_decoder_forward.31} parent=5 // pred_check
      _
    $region34: #{transformer_decoder_forward.31} parent=5 // pred_check_branch
      %199 = sbr.rel (%p196) target = $region36
    $region35: #{transformer_decoder_forward.31} parent=5 // pred_region
      %s200 = ssub.s32 %s10, 1
      %p201 = scmp.lt.s32.totalorder %s15, 1
      %s202 = scalar_select %p201, %s15, 1
      %s203 = smul.addr %s202, 4
      %s204 = smul.addr %s203, 8
      %s205 = scalar_lea.vmem %s0, %s204
      %p206 = pneg %p36
      %p207 = pneg %p33
      %p208 = scmp.lt.s32.totalorder %s15, 3
      %s209 = scalar_select %p208, %s15, 3
      %s210 = smul.addr %s209, 4
      %s211 = smul.addr %s210, 8
      %s212 = scalar_lea.vmem %s1, %s211
      %p213 = pneg %p62
      %p214 = pneg %p59
      %s215 = sadd.s32 %s15, 2
      %p216 = scmp.lt.s32.totalorder %s215, 3
      %s217 = scalar_select %p216, %s215, 3
      %s218 = smul.addr %s217, 4
      %s219 = smul.addr %s218, 8
      %s220 = scalar_lea.vmem %s2, %s219
      %p221 = pneg %p90
      %p222 = pneg %p87
      %p223 = scmp.lt.s32.totalorder %s15, 1
      %s224 = scalar_select %p223, %s15, 1
      %s225 = smul.addr %s224, 8
      %s226 = scalar_lea.vmem %s3, %s225
      %p227 = pneg %p116
      %p228 = pneg %p113
      %p229 = pneg %p142
      %p230 = pneg %p139
      %p231 = scmp.lt.s32.totalorder %s15, 1
      %s232 = scalar_select %p231, %s15, 1
      %s233 = smul.addr %s232, 4
      %s234 = smul.addr %s233, 8
      %s235 = scalar_lea.vmem %s4, %s234
      %p236 = scmp.lt.s32.totalorder %s15, 1
      %s237 = scalar_select %p236, %s15, 1
      %s238 = smul.addr %s237, 4
      %s239 = smul.addr %s238, 8
      %s240 = scalar_lea.vmem %s0, %s239
      %p241 = scmp.lt.s32.totalorder %s15, 3
      %s242 = scalar_select %p241, %s15, 3
      %s243 = smul.addr %s242, 4
      %s244 = smul.addr %s243, 8
      %s245 = scalar_lea.vmem %s1, %s244
      %s246 = sadd.s32 %s15, 2
      %p247 = scmp.lt.s32.totalorder %s246, 3
      %s248 = scalar_select %p247, %s246, 3
      %s249 = smul.addr %s248, 4
      %s250 = smul.addr %s249, 8
      %s251 = scalar_lea.vmem %s2, %s250
      %s252 = sadd.s32 %s15, 2
      %p253 = scmp.lt.s32.totalorder %s15, 1
      %s254 = scalar_select %p253, %s15, 1
      %s255 = smul.addr %s254, 8
      %s256 = scalar_lea.vmem %s3, %s255
      %p257 = scmp.lt.s32.totalorder %s15, 1
      %s258 = scalar_select %p257, %s15, 1
      %s259 = smul.addr %s258, 4
      %s260 = smul.addr %s259, 8
      %s261 = scalar_lea.vmem %s4, %s260
      %v263 = vld [vmem:[%s240] sm:$0xff]
      %v264 = vld [vmem:[%s240 + $0x8] sm:$0xff]
      %v265 = vld [vmem:[%s240 + $0x10] sm:$0xff]
      %v266 = vld [vmem:[%s240 + $0x18] sm:$0xff]
      %v267 = vld [vmem:[%s245] sm:$0xff]
      %v268 = vld [vmem:[%s245 + $0x8] sm:$0xff]
      %v269 = vld [vmem:[%s245 + $0x10] sm:$0xff]
      %v270 = vld [vmem:[%s245 + $0x18] sm:$0xff]
      %v271 = vld [vmem:[%s251] sm:$0xff]
      %v272 = vld [vmem:[%s251 + $0x8] sm:$0xff]
      %v273 = vld [vmem:[%s251 + $0x10] sm:$0xff]
      %v274 = vld [vmem:[%s251 + $0x18] sm:$0xff]
      %v275 = vld [vmem:[%s256] sm:$0xff]
      %v276 = vmul.f32 %v263, 0.35355338
      %v277 = vmul.f32 %v264, 0.35355338
      %v278 = vmul.f32 %v265, 0.35355338
      %v279 = vmul.f32 %v266, 0.35355338
      %v280 = vpack.c.bf16 %v276, %v276
      %v281 = vpack.c.bf16 %v277, %v277
      %v282 = vpack.c.bf16 %v278, %v278
      %v283 = vpack.c.bf16 %v279, %v279
      %v284 = vpack.c.bf16 %v267, %v267
      %v285 = vpack.c.bf16 %v268, %v268
      %v286 = vpack.c.bf16 %v269, %v269
      %v287 = vpack.c.bf16 %v270, %v270
      %v288 = vpack.c.bf16 %v271, %v271
      %v289 = vpack.c.bf16 %v272, %v272
      %v290 = vpack.c.bf16 %v273, %v273
      %v291 = vpack.c.bf16 %v274, %v274
      %vm292 = vcmask 64512
      %v294 = vsel %vm292, %v280, 0
      %v297 = vsel %vm292, %v284, 0
      %299 = vmatpush.bf16.xpose.msra.mxu0 0
      %300 = vmatpush.bf16.xpose.msra.mxu0 0
      %301 = vmatpush.bf16.xpose.msra.mxu0 0
      %302 = vmatpush.bf16.xpose.msra.mxu0 0
      %303 = vmatpush.bf16.xpose.msra.mxu0 0
      %304 = vmatpush.bf16.xpose.msra.mxu0 0
      %305 = vmatpush.bf16.xpose.msra.mxu0 0
      %306 = vmatpush.bf16.xpose.msra.mxu0 %v297
      %307 = vmatmul.bf16.gmra.mxu0 %v294
      %v308 = vpop.f32.mrf.mxu0
      %v309 = vadd.f32 0.0, %v308
      %v310 = vpop.f32.mrf.mxu0
      %311 = vdwg.mxu0
      %v313 = vsel %vm292, %v281, 0
      %v316 = vsel %vm292, %v285, 0
      %318 = vmatpush.bf16.xpose.msra.mxu0 0
      %319 = vmatpush.bf16.xpose.msra.mxu0 0
      %320 = vmatpush.bf16.xpose.msra.mxu0 0
      %321 = vmatpush.bf16.xpose.msra.mxu0 0
      %322 = vmatpush.bf16.xpose.msra.mxu0 0
      %323 = vmatpush.bf16.xpose.msra.mxu0 0
      %324 = vmatpush.bf16.xpose.msra.mxu0 0
      %325 = vmatpush.bf16.xpose.msra.mxu0 %v316
      %326 = vmatmul.bf16.gmra.mxu0 %v313
      %v327 = vpop.f32.mrf.mxu0
      %v328 = vadd.f32 0.0, %v327
      %v329 = vpop.f32.mrf.mxu0
      %330 = vdwg.mxu0
      %v332 = vsel %vm292, %v282, 0
      %v335 = vsel %vm292, %v286, 0
      %337 = vmatpush.bf16.xpose.msra.mxu0 0
      %338 = vmatpush.bf16.xpose.msra.mxu0 0
      %339 = vmatpush.bf16.xpose.msra.mxu0 0
      %340 = vmatpush.bf16.xpose.msra.mxu0 0
      %341 = vmatpush.bf16.xpose.msra.mxu0 0
      %342 = vmatpush.bf16.xpose.msra.mxu0 0
      %343 = vmatpush.bf16.xpose.msra.mxu0 0
      %344 = vmatpush.bf16.xpose.msra.mxu0 %v335
      %345 = vmatmul.bf16.gmra.mxu0 %v332
      %v346 = vpop.f32.mrf.mxu0
      %v347 = vadd.f32 0.0, %v346
      %v348 = vpop.f32.mrf.mxu0
      %349 = vdwg.mxu0
      %v351 = vsel %vm292, %v283, 0
      %v354 = vsel %vm292, %v287, 0
      %356 = vmatpush.bf16.xpose.msra.mxu0 0
      %357 = vmatpush.bf16.xpose.msra.mxu0 0
      %358 = vmatpush.bf16.xpose.msra.mxu0 0
      %359 = vmatpush.bf16.xpose.msra.mxu0 0
      %360 = vmatpush.bf16.xpose.msra.mxu0 0
      %361 = vmatpush.bf16.xpose.msra.mxu0 0
      %362 = vmatpush.bf16.xpose.msra.mxu0 0
      %363 = vmatpush.bf16.xpose.msra.mxu0 %v354
      %364 = vmatmul.bf16.gmra.mxu0 %v351
      %v365 = vpop.f32.mrf.mxu0
      %v366 = vadd.f32 0.0, %v365
      %v367 = vpop.f32.mrf.mxu0
      %368 = vdwg.mxu0
      %vm369 = vcmp.lt.f32.partialorder %v275, 0.5
      %v370 = vsel %vm369, 1, 0
      %vm371 = vcmp.eq.s32.totalorder %v370, 1
      %v372 = vsel %vm371, -1e+10, %v309
      %v373 = vsel %vm371, -1e+10, %v328
      %v374 = vsel %vm371, -1e+10, %v347
      %v375 = vsel %vm371, -1e+10, %v366
      %v376 = vsel %vm292, %v372, -inf
      %377 = vmax.xlane.f32.xlu0 %v376
      %v378 = vpop.xlane.xlu0 %377
      %v379 = vsel %vm292, %v373, -inf
      %380 = vmax.xlane.f32.xlu0 %v379
      %v381 = vpop.xlane.xlu0 %380
      %v382 = vsel %vm292, %v374, -inf
      %383 = vmax.xlane.f32.xlu0 %v382
      %v384 = vpop.xlane.xlu0 %383
      %v385 = vsel %vm292, %v375, -inf
      %386 = vmax.xlane.f32.xlu0 %v385
      %v387 = vpop.xlane.xlu0 %386
      %v388 = vsub.f32 %v372, %v378
      %v389 = vsub.f32 %v373, %v381
      %v390 = vsub.f32 %v374, %v384
      %v391 = vsub.f32 %v375, %v387
      %v392 = vmul.f32 %v388, 1.442695
      %v393 = vpow.pop %v392
      %v394 = vmul.f32 %v389, 1.442695
      %v395 = vpow.pop %v394
      %v396 = vmul.f32 %v390, 1.442695
      %v397 = vpow.pop %v396
      %v398 = vmul.f32 %v391, 1.442695
      %v399 = vpow.pop %v398
      %v400 = vsel %vm292, %v393, 0.0
      %401 = vadd.xlane.f32.xlu0 %v400
      %v402 = vpop.xlane.xlu0 %401
      %v403 = vsel %vm292, %v395, 0.0
      %404 = vadd.xlane.f32.xlu0 %v403
      %v405 = vpop.xlane.xlu0 %404
      %v406 = vsel %vm292, %v397, 0.0
      %407 = vadd.xlane.f32.xlu0 %v406
      %v408 = vpop.xlane.xlu0 %407
      %v409 = vsel %vm292, %v399, 0.0
      %410 = vadd.xlane.f32.xlu0 %v409
      %v411 = vpop.xlane.xlu0 %410
      %v412 = vrcp.pop %v402
      %v413 = vrcp.pop %v405
      %v414 = vrcp.pop %v408
      %v415 = vrcp.pop %v411
      %v416 = vmul.f32 %v393, %v412
      %v417 = vmul.f32 %v395, %v413
      %v418 = vmul.f32 %v397, %v414
      %v419 = vmul.f32 %v399, %v415
      %v420 = vpack.c.bf16 %v416, %v416
      %v421 = vpack.c.bf16 %v417, %v417
      %v422 = vpack.c.bf16 %v418, %v418
      %v423 = vpack.c.bf16 %v419, %v419
      %v425 = vsel %vm292, %v420, 0
      %vm427 = vcmask 1043456
      %v429 = vsel %vm427, %v288, 0
      %431 = vmatpush.bf16.msra.mxu0 0
      %432 = vmatpush.bf16.msra.mxu0 0
      %433 = vmatpush.bf16.msra.mxu0 0
      %434 = vmatpush.bf16.msra.mxu0 0
      %435 = vmatpush.bf16.msra.mxu0 0
      %436 = vmatpush.bf16.msra.mxu0 0
      %437 = vmatpush.bf16.msra.mxu0 0
      %438 = vmatpush.bf16.msra.mxu0 %v429
      %439 = vmatmul.bf16.gmra.mxu0 %v425
      %v440 = vpop.f32.mrf.mxu0
      %v441 = vadd.f32 0.0, %v440
      %v442 = vpop.f32.mrf.mxu0
      %443 = vdwg.mxu0
      %v445 = vsel %vm292, %v421, 0
      %v448 = vsel %vm427, %v289, 0
      %450 = vmatpush.bf16.msra.mxu0 0
      %451 = vmatpush.bf16.msra.mxu0 0
      %452 = vmatpush.bf16.msra.mxu0 0
      %453 = vmatpush.bf16.msra.mxu0 0
      %454 = vmatpush.bf16.msra.mxu0 0
      %455 = vmatpush.bf16.msra.mxu0 0
      %456 = vmatpush.bf16.msra.mxu0 0
      %457 = vmatpush.bf16.msra.mxu0 %v448
      %458 = vmatmul.bf16.gmra.mxu0 %v445
      %v459 = vpop.f32.mrf.mxu0
      %v460 = vadd.f32 0.0, %v459
      %v461 = vpop.f32.mrf.mxu0
      %462 = vdwg.mxu0
      %v464 = vsel %vm292, %v422, 0
      %v467 = vsel %vm427, %v290, 0
      %469 = vmatpush.bf16.msra.mxu0 0
      %470 = vmatpush.bf16.msra.mxu0 0
      %471 = vmatpush.bf16.msra.mxu0 0
      %472 = vmatpush.bf16.msra.mxu0 0
      %473 = vmatpush.bf16.msra.mxu0 0
      %474 = vmatpush.bf16.msra.mxu0 0
      %475 = vmatpush.bf16.msra.mxu0 0
      %476 = vmatpush.bf16.msra.mxu0 %v467
      %477 = vmatmul.bf16.gmra.mxu0 %v464
      %v478 = vpop.f32.mrf.mxu0
      %v479 = vadd.f32 0.0, %v478
      %v480 = vpop.f32.mrf.mxu0
      %481 = vdwg.mxu0
      %v483 = vsel %vm292, %v423, 0
      %v486 = vsel %vm427, %v291, 0
      %488 = vmatpush.bf16.msra.mxu0 0
      %489 = vmatpush.bf16.msra.mxu0 0
      %490 = vmatpush.bf16.msra.mxu0 0
      %491 = vmatpush.bf16.msra.mxu0 0
      %492 = vmatpush.bf16.msra.mxu0 0
      %493 = vmatpush.bf16.msra.mxu0 0
      %494 = vmatpush.bf16.msra.mxu0 0
      %495 = vmatpush.bf16.msra.mxu0 %v486
      %496 = vmatmul.bf16.gmra.mxu0 %v483
      %v497 = vpop.f32.mrf.mxu0
      %v498 = vadd.f32 0.0, %v497
      %v499 = vpop.f32.mrf.mxu0
      %500 = vdwg.mxu0
      %501 = vst.msk [vmem:[%s261] sm:$0xff] %vm292, %v441
      %502 = vst.msk [vmem:[%s261 + $0x8] sm:$0xff] %vm292, %v460
      %503 = vst.msk [vmem:[%s261 + $0x10] sm:$0xff] %vm292, %v479
      %504 = vst.msk [vmem:[%s261 + $0x18] sm:$0xff] %vm292, %v498
      %p505 = scmp.lt.s32.totalorder %s15, 1
      %s506 = scalar_select %p505, %s15, 1
      %s507 = smul.addr %s506, 4
      %s508 = smul.addr %s507, 8
      %s509 = scalar_lea.vmem %s4, %s508
      // Predicated region
      $region37: #{transformer_decoder_forward.31} parent=35 // pred_check
        %p510 = pneg %p139
      $region38: #{transformer_decoder_forward.31} parent=35 // pred_check_branch
        %512 = sbr.rel (%p510) target = $region40
      $region39: #{transformer_decoder_forward.31} parent=35 // pred_region
        _
      $region40: #{transformer_decoder_forward.31} parent=35 // pred_fallthru
        _
    $region36: #{transformer_decoder_forward.31} parent=5 // pred_fallthru
      _
    %p513 = scmp.le.s32.totalorder 2, %s10
    // Predicated region
    $region41: #{transformer_decoder_forward.31} parent=5 // pred_check
      %p514 = pneg %p513
    $region42: #{transformer_decoder_forward.31} parent=5 // pred_check_branch
      %516 = sbr.rel (%p514) target = $region44
    $region43: #{transformer_decoder_forward.31} parent=5 // pred_region
      %s517 = ssub.s32 %s10, 2
      // Predicated region
      $region45: #{transformer_decoder_forward.31} parent=43 // pred_check
        %p518 = pneg %p145
      $region46: #{transformer_decoder_forward.31} parent=43 // pred_check_branch
        %520 = sbr.rel (%p518) target = $region48
      $region47: #{transformer_decoder_forward.31} parent=43 // pred_region
        %p521 = scmp.lt.s32.totalorder %s16, 1
        %s522 = scalar_select %p521, %s16, 1
        %s523 = smul.addr %s522, 4
        %s524 = smul.addr %s523, 8
        %s525 = scalar_lea.vmem %s4, %s524
      $region48: #{transformer_decoder_forward.31} parent=43 // pred_fallthru
        _
    $region44: #{transformer_decoder_forward.31} parent=5 // pred_fallthru
      _
  $region6: #{transformer_decoder_forward.31} parent=0 // loop_footer
    %s14 = sadd.s32 1, %s10
  $region7: #{transformer_decoder_forward.31} parent=0 // loop_footer_branch
    %9 = sbr.rel target = $region3
  $region8: #{transformer_decoder_forward.31} parent=0 // loop_exit
    _

// kernel: transformer_decoder_forward.35
$region0: #{transformer_decoder_forward.35}
  #allocation0 [shape = 'u32[]', space=smem, size = 0x4, offset = 0x4, fixed_abs, tag = 'smem constant byte address 0x4 - core index']
  #allocation1 [shape = 'u32[72,128]{1,0:T(1,128)}', space=vmem, size = 0x9000, scoped, tag = 'internal scratch']
  #allocation2 [shape = 'f32[16,32]{1,0:T(8,128)}', space=vmem, size = 0x2000, scoped, tag = 'scratch operand']
  %s0 = inlined_call_operand.vmem [shape: bf16[16,64], index: 0, kind: input, shape index: {}]
  %s1 = inlined_call_operand.vmem [shape: bf16[1,64,32], index: 1, kind: input, shape index: {}]
  %s2 = inlined_call_operand.vmem [shape: f32[1,1,32], index: 2, kind: input, shape index: {}]
  %s3 = inlined_call_operand.vmem [shape: f32[1,16,32], index: 3, kind: output, shape index: {}]
  %s4 = sld [smem:[#allocation0]]
  $region30: #{transformer_decoder_forward.35} parent=0
    _
  %s6 = ssub.s32 1, %s4
  %s7 = scalar_select 0, %s6, %s4
  // Predicated region
  $region2: #{transformer_decoder_forward.35} parent=0 // pred_check
    _
  $region3: #{transformer_decoder_forward.35} parent=0 // pred_check_branch
    %9 = sbr.rel (0) target = $region5
  $region4: #{transformer_decoder_forward.35} parent=0 // pred_region
    _
  $region5: #{transformer_decoder_forward.35} parent=0 // pred_fallthru
    _
  // Predicated region
  $region6: #{transformer_decoder_forward.35} parent=0 // pred_check
    _
  $region7: #{transformer_decoder_forward.35} parent=0 // pred_check_branch
    %11 = sbr.rel (0) target = $region9
  $region8: #{transformer_decoder_forward.35} parent=0 // pred_region
    _
  $region9: #{transformer_decoder_forward.35} parent=0 // pred_fallthru
    _
  // Predicated region
  $region10: #{transformer_decoder_forward.35} parent=0 // pred_check
    _
  $region11: #{transformer_decoder_forward.35} parent=0 // pred_check_branch
    %13 = sbr.rel (0) target = $region13
  $region12: #{transformer_decoder_forward.35} parent=0 // pred_region
    _
  $region13: #{transformer_decoder_forward.35} parent=0 // pred_fallthru
    _
  %p15 = scmp.eq.s32.totalorder 0, 0
  // Predicated region
  $region14: #{transformer_decoder_forward.35} parent=0 // pred_check
    %p16 = pneg %p15
  $region15: #{transformer_decoder_forward.35} parent=0 // pred_check_branch
    %18 = sbr.rel (%p16) target = $region17
  $region16: #{transformer_decoder_forward.35} parent=0 // pred_region
    %vm19 = vcmask 261120
    %20 = vst.msk [vmem:[#allocation2] sm:$0xff] %vm19, 0.0
    %21 = vst.msk [vmem:[#allocation2 + $0x8] sm:$0xff] %vm19, 0.0
  $region17: #{transformer_decoder_forward.35} parent=0 // pred_fallthru
    _
  %v22 = vld [vmem:[#allocation2] sm:$0xff]
  %v23 = vld [vmem:[#allocation2 + $0x8] sm:$0xff]
  %v24 = vld [vmem:[%s0] sm:$0xf]
  %v25 = vld [vmem:[%s0 + $0x4] sm:$0xf]
  %v26 = vld [vmem:[%s1] sm:$0xf]
  %v27 = vld [vmem:[%s1 + $0x4] sm:$0xf]
  %v28 = vld [vmem:[%s1 + $0x8] sm:$0xf]
  %v29 = vld [vmem:[%s1 + $0xc] sm:$0xf]
  %v30 = vld [vmem:[%s1 + $0x10] sm:$0xf]
  %v31 = vld [vmem:[%s1 + $0x14] sm:$0xf]
  %v32 = vld [vmem:[%s1 + $0x18] sm:$0xf]
  %v33 = vld [vmem:[%s1 + $0x1c] sm:$0xf]
  %v36 = vunpack.c.l.b16 %v24
  %v37 = vunpack.c.l.b16 %v25
  %v38 = vpack.c.b16 %v37, %v36
  %v47 = vunpack.c.l.b16 %v26
  %v48 = vunpack.c.l.b16 %v27
  %v49 = vunpack.c.l.b16 %v28
  %v50 = vunpack.c.l.b16 %v29
  %v51 = vunpack.c.l.b16 %v30
  %v52 = vunpack.c.l.b16 %v31
  %v53 = vunpack.c.l.b16 %v32
  %v54 = vunpack.c.l.b16 %v33
  %v55 = vpack.c.b16 %v48, %v47
  %v56 = vpack.c.b16 %v50, %v49
  %v57 = vpack.c.b16 %v52, %v51
  %v58 = vpack.c.b16 %v54, %v53
  %vm63 = vcmask 523264
  %v65 = vsel %vm63, %v38, 0
  %67 = vmatpush.bf16.msra.mxu0 0
  %68 = vmatpush.bf16.msra.mxu0 0
  %69 = vmatpush.bf16.msra.mxu0 0
  %70 = vmatpush.bf16.msra.mxu0 0
  %71 = vmatpush.bf16.msra.mxu0 %v58
  %72 = vmatpush.bf16.msra.mxu0 %v57
  %73 = vmatpush.bf16.msra.mxu0 %v56
  %74 = vmatpush.bf16.msra.mxu0 %v55
  %75 = vmatmul.bf16.gmra.mxu0 %v65
  %v76 = vpop.f32.mrf.mxu0
  %v77 = vadd.f32 0.0, %v76
  %v78 = vpop.f32.mrf.mxu0
  %v79 = vadd.f32 0.0, %v78
  %80 = vdwg.mxu0
  %v81 = vadd.f32 %v22, %v77
  %v82 = vadd.f32 %v23, %v79
  %vm83 = vcmask 261120
  %84 = vst.msk [vmem:[#allocation2] sm:$0xff] %vm83, %v81
  %85 = vst.msk [vmem:[#allocation2 + $0x8] sm:$0xff] %vm83, %v82
  // Predicated region
  $region18: #{transformer_decoder_forward.35} parent=0 // pred_check
    %p86 = pneg %p15
  $region19: #{transformer_decoder_forward.35} parent=0 // pred_check_branch
    %88 = sbr.rel (%p86) target = $region21
  $region20: #{transformer_decoder_forward.35} parent=0 // pred_region
    %v89 = vld [vmem:[#allocation2] sm:$0xff]
    %v90 = vld [vmem:[#allocation2 + $0x8] sm:$0xff]
    %v91 = vld [vmem:[%s2] sm:$0x1]
    %v93 = vperm.slane %v91, 0
    %v95 = vadd.f32 %v89, %v93
    %v96 = vadd.f32 %v90, %v93
    %97 = vst.msk [vmem:[%s3] sm:$0xff] %vm83, %v95
    %98 = vst.msk [vmem:[%s3 + $0x8] sm:$0xff] %vm83, %v96
  $region21: #{transformer_decoder_forward.35} parent=0 // pred_fallthru
    _
  // Predicated region
  $region22: #{transformer_decoder_forward.35} parent=0 // pred_check
    _
  $region23: #{transformer_decoder_forward.35} parent=0 // pred_check_branch
    %100 = sbr.rel (0) target = $region25
  $region24: #{transformer_decoder_forward.35} parent=0 // pred_region
    _
  $region25: #{transformer_decoder_forward.35} parent=0 // pred_fallthru
    _
  // Predicated region
  $region26: #{transformer_decoder_forward.35} parent=0 // pred_check
    _
  $region27: #{transformer_decoder_forward.35} parent=0 // pred_check_branch
    %102 = sbr.rel (0) target = $region29
  $region28: #{transformer_decoder_forward.35} parent=0 // pred_region
    _
  $region29: #{transformer_decoder_forward.35} parent=0 // pred_fallthru
    _

// kernel: transformer_decoder_forward.49
$region0: #{transformer_decoder_forward.49}
  #allocation0 [shape = 'u32[]', space=smem, size = 0x4, offset = 0x4, fixed_abs, tag = 'smem constant byte address 0x4 - core index']
  #allocation1 [shape = 'u32[72,128]{1,0:T(1,128)}', space=vmem, size = 0x9000, scoped, tag = 'internal scratch']
  #allocation2 [shape = 'f32[16,50]{1,0:T(8,128)}', space=vmem, size = 0x2000, scoped, tag = 'scratch operand']
  %s0 = inlined_call_operand.vmem [shape: bf16[16,32], index: 0, kind: input, shape index: {}]
  %s1 = inlined_call_operand.vmem [shape: bf16[1,32,50], index: 1, kind: input, shape index: {}]
  %s2 = inlined_call_operand.vmem [shape: f32[1,1,50], index: 2, kind: input, shape index: {}]
  %s3 = inlined_call_operand.hbm [shape: f32[1,16,50], index: 3, kind: output, shape index: {}]
  %s4 = sld [smem:[#allocation0]]
  $region30: #{transformer_decoder_forward.49} parent=0
    _
  %s6 = ssub.s32 1, %s4
  %s7 = scalar_select 0, %s6, %s4
  $region1: #{transformer_decoder_forward.49} parent=0
    #allocation3 [shape = 'u8[8192]{0}', space=vmem, size = 0x2000, scoped, tag = 'output window, operand 0, single buffered']
    #allocation4 [shape = 's32[1]{0}', space=sflag, size = 0x4, scoped, tag = 'scoped memory for transformer_decoder_forward.49']
    %8 = vsyncpa [#allocation4], 0
    // Predicated region
    $region2: #{transformer_decoder_forward.49} parent=1 // pred_check
      _
    $region3: #{transformer_decoder_forward.49} parent=1 // pred_check_branch
      %10 = sbr.rel (0) target = $region5
    $region4: #{transformer_decoder_forward.49} parent=1 // pred_region
      _
    $region5: #{transformer_decoder_forward.49} parent=1 // pred_fallthru
      _
    // Predicated region
    $region6: #{transformer_decoder_forward.49} parent=1 // pred_check
      _
    $region7: #{transformer_decoder_forward.49} parent=1 // pred_check_branch
      %12 = sbr.rel (0) target = $region9
    $region8: #{transformer_decoder_forward.49} parent=1 // pred_region
      _
    $region9: #{transformer_decoder_forward.49} parent=1 // pred_fallthru
      _
    // Predicated region
    $region10: #{transformer_decoder_forward.49} parent=1 // pred_check
      _
    $region11: #{transformer_decoder_forward.49} parent=1 // pred_check_branch
      %14 = sbr.rel (0) target = $region13
    $region12: #{transformer_decoder_forward.49} parent=1 // pred_region
      _
    $region13: #{transformer_decoder_forward.49} parent=1 // pred_fallthru
      _
    %p16 = scmp.eq.s32.totalorder 0, 0
    // Predicated region
    $region14: #{transformer_decoder_forward.49} parent=1 // pred_check
      %p17 = pneg %p16
    $region15: #{transformer_decoder_forward.49} parent=1 // pred_check_branch
      %19 = sbr.rel (%p17) target = $region17
    $region16: #{transformer_decoder_forward.49} parent=1 // pred_region
      %vm20 = vcmask 408576
      %21 = vst.msk [vmem:[#allocation2] sm:$0xff] %vm20, 0.0
      %22 = vst.msk [vmem:[#allocation2 + $0x8] sm:$0xff] %vm20, 0.0
    $region17: #{transformer_decoder_forward.49} parent=1 // pred_fallthru
      _
    %v23 = vld [vmem:[#allocation2] sm:$0xff]
    %v24 = vld [vmem:[#allocation2 + $0x8] sm:$0xff]
    %v25 = vld [vmem:[%s0] sm:$0xf]
    %v26 = vld [vmem:[%s0 + $0x4] sm:$0xf]
    %v27 = vld [vmem:[%s1] sm:$0xf]
    %v28 = vld [vmem:[%s1 + $0x4] sm:$0xf]
    %v29 = vld [vmem:[%s1 + $0x8] sm:$0xf]
    %v30 = vld [vmem:[%s1 + $0xc] sm:$0xf]
    %v33 = vunpack.c.l.b16 %v25
    %v34 = vunpack.c.l.b16 %v26
    %v35 = vpack.c.b16 %v34, %v33
    %v40 = vunpack.c.l.b16 %v27
    %v41 = vunpack.c.l.b16 %v28
    %v42 = vunpack.c.l.b16 %v29
    %v43 = vunpack.c.l.b16 %v30
    %v44 = vpack.c.b16 %v41, %v40
    %v45 = vpack.c.b16 %v43, %v42
    %vm48 = vcmask 261120
    %v50 = vsel %vm48, %v35, 0
    %52 = vmatpush.bf16.msra.mxu0 0
    %53 = vmatpush.bf16.msra.mxu0 0
    %54 = vmatpush.bf16.msra.mxu0 0
    %55 = vmatpush.bf16.msra.mxu0 0
    %56 = vmatpush.bf16.msra.mxu0 0
    %57 = vmatpush.bf16.msra.mxu0 0
    %58 = vmatpush.bf16.msra.mxu0 %v45
    %59 = vmatpush.bf16.msra.mxu0 %v44
    %60 = vmatmul.bf16.gmra.mxu0 %v50
    %v61 = vpop.f32.mrf.mxu0
    %v62 = vadd.f32 0.0, %v61
    %v63 = vpop.f32.mrf.mxu0
    %v64 = vadd.f32 0.0, %v63
    %65 = vdwg.mxu0
    %v66 = vadd.f32 %v23, %v62
    %v67 = vadd.f32 %v24, %v64
    %vm68 = vcmask 408576
    %69 = vst.msk [vmem:[#allocation2] sm:$0xff] %vm68, %v66
    %70 = vst.msk [vmem:[#allocation2 + $0x8] sm:$0xff] %vm68, %v67
    // Predicated region
    $region18: #{transformer_decoder_forward.49} parent=1 // pred_check
      %p71 = pneg %p16
    $region19: #{transformer_decoder_forward.49} parent=1 // pred_check_branch
      %73 = sbr.rel (%p71) target = $region21
    $region20: #{transformer_decoder_forward.49} parent=1 // pred_region
      %v74 = vld [vmem:[#allocation2] sm:$0xff]
      %v75 = vld [vmem:[#allocation2 + $0x8] sm:$0xff]
      %v76 = vld [vmem:[%s2] sm:$0x1]
      %v78 = vperm.slane %v76, 0
      %v80 = vadd.f32 %v74, %v78
      %v81 = vadd.f32 %v75, %v78
      %82 = vst.msk [vmem:[#allocation3] sm:$0xff] %vm68, %v80
      %83 = vst.msk [vmem:[#allocation3 + $0x8] sm:$0xff] %vm68, %v81
    $region21: #{transformer_decoder_forward.49} parent=1 // pred_fallthru
      _
    // Predicated region
    $region22: #{transformer_decoder_forward.49} parent=1 // pred_check
      _
    $region23: #{transformer_decoder_forward.49} parent=1 // pred_check_branch
      %85 = sbr.rel (0) target = $region25
    $region24: #{transformer_decoder_forward.49} parent=1 // pred_region
      %87 = vsyncadd [#allocation4], 0
      %s88 = sshll.u32 [#allocation3], 4
      %s89 = int_to_ptr.vmem [resolvable:$true] %s88
      %s90 = sshll.u32 %s3, 4
      %s91 = int_to_ptr.hbm [resolvable:$true] %s90
      %96 = dma.vmem_to_hbm [thread:$0]  %s89, 256, %s91, [#allocation4], 128, 128, 8
    $region25: #{transformer_decoder_forward.49} parent=1 // pred_fallthru
      _
    // Predicated region
    $region26: #{transformer_decoder_forward.49} parent=1 // pred_check
      _
    $region27: #{transformer_decoder_forward.49} parent=1 // pred_check_branch
      %98 = sbr.rel (0) target = $region29
    $region28: #{transformer_decoder_forward.49} parent=1 // pred_region
      %100 = dma.done [#allocation4], 256
    $region29: #{transformer_decoder_forward.49} parent=1 // pred_fallthru
      _
    %101 = vsyncpa [#allocation4], 1

// kernel: transformer_decoder_forward.43
$region0: #{transformer_decoder_forward.43}
  #allocation0 [shape = 'u32[]', space=smem, size = 0x4, offset = 0x4, fixed_abs, tag = 'smem constant byte address 0x4 - core index']
  #allocation1 [shape = 'u32[72,128]{1,0:T(1,128)}', space=vmem, size = 0x9000, scoped, tag = 'internal scratch']
  %s0 = inlined_call_operand.vmem [shape: f32[2,4,8,8], index: 0, kind: input, shape index: {}]
  %s1 = inlined_call_operand.vmem [shape: f32[4,4,8,8], index: 1, kind: input, shape index: {}, may-alias: {1,2}]
  %s2 = inlined_call_operand.vmem [shape: f32[4,4,8,8], index: 2, kind: input, shape index: {}, may-alias: {1,2}]
  %s3 = inlined_call_operand.vmem [shape: f32[2,1,8,8], index: 3, kind: input, shape index: {}]
  %s4 = inlined_call_operand.vmem [shape: f32[2,4,8,8], index: 4, kind: output, shape index: {0}]
  %s5 = inlined_call_operand.hbm [shape: f32[2,4,8,8], index: 5, kind: output, shape index: {1}]
  %6 = xla_tuple %s4, %s5
  %s7 = sld [smem:[#allocation0]]
  $region57: #{transformer_decoder_forward.43} parent=0
    _
  %s9 = ssub.s32 1, %s7
  %s10 = scalar_select 0, %s9, %s7
  $region1: #{transformer_decoder_forward.43} parent=0
    #allocation2 [shape = 'u8[32768]{0}', space=vmem, size = 0x8000, scoped, tag = 'output window, operand 1']
    #allocation3 [shape = 's32[2]{0}', space=sflag, size = 0x8, scoped, tag = 'scoped memory for transformer_decoder_forward.43']
    %11 = vsyncpa [#allocation3], 0
    %s12 = scalar_lea.sflag [#allocation3], 1
    %13 = vsyncpa %s12, 0
    loop: start=0, step=1, limit=4
    $region2: #{transformer_decoder_forward.43} parent=1 // loop_pre_header
      _
    $region3: #{transformer_decoder_forward.43} parent=1 // loop_header
      %s15 = sphi 0, %s19
      %p16 = scmp.ge.s32.totalorder %s15, 4
      %s25 = sphi 0, %s27
      %s28 = sphi 0, %s25
      %s29 = sphi 0, %s28
      %s45 = sphi 0, %s29
      %s51 = sphi 0, %s53
      %s54 = sphi 0, %s51
      %s55 = sphi 0, %s54
      %s71 = sphi 0, %s55
      %s79 = sphi 0, %s81
      %s82 = sphi 0, %s79
      %s83 = sphi 0, %s82
      %s99 = sphi 0, %s83
      %s105 = sphi 0, %s107
      %s108 = sphi 0, %s105
      %s109 = sphi 0, %s108
      %s125 = sphi 0, %s109
      %s131 = sphi 0, %s133
      %s134 = sphi 0, %s131
      %s135 = sphi 0, %s134
      %s151 = sphi 0, %s135
      %s157 = sphi 0, %s159
      %s160 = sphi 0, %s157
      %s161 = sphi 0, %s160
      %s177 = sphi 0, %s161
    $region4: #{transformer_decoder_forward.43} parent=1 // loop_header_branch
      %18 = sbr.rel (%p16) target = $region8
    $region5: #{transformer_decoder_forward.43} parent=1 // loop_body
      %s20 = ssub.s32 %s15, 1
      %s21 = ssub.s32 %s15, 2
      %s22 = sadd.s32 %s15, 1
      %s23 = ssub.s32 %s15, %s22
      %p24 = scmp.eq.s32.totalorder %s23, 0
      %s26 = sadd.s32 %s25, 1
      %s27 = scalar_select %p24, %s25, %s26
      %p30 = pneg %p24
      %p31 = scmp.eq.s32.totalorder %s15, 1
      %p32 = por %p30, %p31
      %p33 = scmp.ne.s32.totalorder %s25, %s28
      %p34 = scmp.eq.s32.totalorder %s15, 0
      %p35 = por %p33, %p34
      %p36 = scmp.ne.s32.totalorder %s25, %s28
      %p37 = scmp.eq.s32.totalorder %s20, 1
      %p38 = por %p36, %p37
      %p39 = scmp.ne.s32.totalorder %s28, %s29
      %p40 = scmp.eq.s32.totalorder %s20, 0
      %p41 = por %p39, %p40
      %p42 = scmp.ne.s32.totalorder %s28, %s29
      %p43 = scmp.eq.s32.totalorder %s21, 1
      %p44 = por %p42, %p43
      %p46 = scmp.ne.s32.totalorder %s29, %s45
      %p47 = scmp.eq.s32.totalorder %s21, 0
      %p48 = por %p46, %p47
      %s49 = ssub.s32 %s15, %s22
      %p50 = scmp.eq.s32.totalorder %s49, 0
      %s52 = sadd.s32 %s51, 1
      %s53 = scalar_select %p50, %s51, %s52
      %p56 = pneg %p50
      %p57 = scmp.eq.s32.totalorder %s15, 1
      %p58 = por %p56, %p57
      %p59 = scmp.ne.s32.totalorder %s51, %s54
      %p60 = scmp.eq.s32.totalorder %s15, 0
      %p61 = por %p59, %p60
      %p62 = scmp.ne.s32.totalorder %s51, %s54
      %p63 = scmp.eq.s32.totalorder %s20, 1
      %p64 = por %p62, %p63
      %p65 = scmp.ne.s32.totalorder %s54, %s55
      %p66 = scmp.eq.s32.totalorder %s20, 0
      %p67 = por %p65, %p66
      %p68 = scmp.ne.s32.totalorder %s54, %s55
      %p69 = scmp.eq.s32.totalorder %s21, 1
      %p70 = por %p68, %p69
      %p72 = scmp.ne.s32.totalorder %s55, %s71
      %p73 = scmp.eq.s32.totalorder %s21, 0
      %p74 = por %p72, %p73
      %s75 = sadd.s32 %s15, 2
      %s76 = sadd.s32 %s22, 2
      %s77 = ssub.s32 %s75, %s76
      %p78 = scmp.eq.s32.totalorder %s77, 0
      %s80 = sadd.s32 %s79, 1
      %s81 = scalar_select %p78, %s79, %s80
      %p84 = pneg %p78
      %p85 = scmp.eq.s32.totalorder %s15, 1
      %p86 = por %p84, %p85
      %p87 = scmp.ne.s32.totalorder %s79, %s82
      %p88 = scmp.eq.s32.totalorder %s15, 0
      %p89 = por %p87, %p88
      %p90 = scmp.ne.s32.totalorder %s79, %s82
      %p91 = scmp.eq.s32.totalorder %s20, 1
      %p92 = por %p90, %p91
      %p93 = scmp.ne.s32.totalorder %s82, %s83
      %p94 = scmp.eq.s32.totalorder %s20, 0
      %p95 = por %p93, %p94
      %p96 = scmp.ne.s32.totalorder %s82, %s83
      %p97 = scmp.eq.s32.totalorder %s21, 1
      %p98 = por %p96, %p97
      %p100 = scmp.ne.s32.totalorder %s83, %s99
      %p101 = scmp.eq.s32.totalorder %s21, 0
      %p102 = por %p100, %p101
      %s103 = ssub.s32 %s15, %s22
      %p104 = scmp.eq.s32.totalorder %s103, 0
      %s106 = sadd.s32 %s105, 1
      %s107 = scalar_select %p104, %s105, %s106
      %p110 = pneg %p104
      %p111 = scmp.eq.s32.totalorder %s15, 1
      %p112 = por %p110, %p111
      %p113 = scmp.ne.s32.totalorder %s105, %s108
      %p114 = scmp.eq.s32.totalorder %s15, 0
      %p115 = por %p113, %p114
      %p116 = scmp.ne.s32.totalorder %s105, %s108
      %p117 = scmp.eq.s32.totalorder %s20, 1
      %p118 = por %p116, %p117
      %p119 = scmp.ne.s32.totalorder %s108, %s109
      %p120 = scmp.eq.s32.totalorder %s20, 0
      %p121 = por %p119, %p120
      %p122 = scmp.ne.s32.totalorder %s108, %s109
      %p123 = scmp.eq.s32.totalorder %s21, 1
      %p124 = por %p122, %p123
      %p126 = scmp.ne.s32.totalorder %s109, %s125
      %p127 = scmp.eq.s32.totalorder %s21, 0
      %p128 = por %p126, %p127
      %s129 = ssub.s32 %s15, %s22
      %p130 = scmp.eq.s32.totalorder %s129, 0
      %s132 = sadd.s32 %s131, 1
      %s133 = scalar_select %p130, %s131, %s132
      %p136 = pneg %p130
      %p137 = scmp.eq.s32.totalorder %s15, 1
      %p138 = por %p136, %p137
      %p139 = scmp.ne.s32.totalorder %s131, %s134
      %p140 = scmp.eq.s32.totalorder %s15, 0
      %p141 = por %p139, %p140
      %p142 = scmp.ne.s32.totalorder %s131, %s134
      %p143 = scmp.eq.s32.totalorder %s20, 1
      %p144 = por %p142, %p143
      %p145 = scmp.ne.s32.totalorder %s134, %s135
      %p146 = scmp.eq.s32.totalorder %s20, 0
      %p147 = por %p145, %p146
      %p148 = scmp.ne.s32.totalorder %s134, %s135
      %p149 = scmp.eq.s32.totalorder %s21, 1
      %p150 = por %p148, %p149
      %p152 = scmp.ne.s32.totalorder %s135, %s151
      %p153 = scmp.eq.s32.totalorder %s21, 0
      %p154 = por %p152, %p153
      %s155 = ssub.s32 %s15, %s22
      %p156 = scmp.eq.s32.totalorder %s155, 0
      %s158 = sadd.s32 %s157, 1
      %s159 = scalar_select %p156, %s157, %s158
      %p162 = pneg %p156
      %p163 = scmp.eq.s32.totalorder %s15, 1
      %p164 = por %p162, %p163
      %p165 = scmp.ne.s32.totalorder %s157, %s160
      %p166 = scmp.eq.s32.totalorder %s15, 0
      %p167 = por %p165, %p166
      %p168 = scmp.ne.s32.totalorder %s157, %s160
      %p169 = scmp.eq.s32.totalorder %s20, 1
      %p170 = por %p168, %p169
      %p171 = scmp.ne.s32.totalorder %s160, %s161
      %p172 = scmp.eq.s32.totalorder %s20, 0
      %p173 = por %p171, %p172
      %p174 = scmp.ne.s32.totalorder %s160, %s161
      %p175 = scmp.eq.s32.totalorder %s21, 1
      %p176 = por %p174, %p175
      %p178 = scmp.ne.s32.totalorder %s161, %s177
      %p179 = scmp.eq.s32.totalorder %s21, 0
      %p180 = por %p178, %p179
      %p181 = scmp.le.s32.totalorder 1, %s15
      %p182 = scmp.lt.s32.totalorder %s15, 3
      %p183 = pnand %p181, %p182
      %p184 = pneg %p183
      // Predicated region
      $region9: #{transformer_decoder_forward.43} parent=5 // pred_check
        _
      $region10: #{transformer_decoder_forward.43} parent=5 // pred_check_branch
        %186 = sbr.rel (%p183) target = $region12
      $region11: #{transformer_decoder_forward.43} parent=5 // pred_region
        %s187 = ssub.s32 %s15, 1
      $region12: #{transformer_decoder_forward.43} parent=5 // pred_fallthru
        _
      %p188 = scmp.lt.s32.totalorder %s15, 2
      // Predicated region
      $region13: #{transformer_decoder_forward.43} parent=5 // pred_check
        %p189 = pneg %p188
      $region14: #{transformer_decoder_forward.43} parent=5 // pred_check_branch
        %191 = sbr.rel (%p189) target = $region16
      $region15: #{transformer_decoder_forward.43} parent=5 // pred_region
        // Predicated region
        $region17: #{transformer_decoder_forward.43} parent=15 // pred_check
          %p192 = pneg %p35
        $region18: #{transformer_decoder_forward.43} parent=15 // pred_check_branch
          %194 = sbr.rel (%p192) target = $region20
        $region19: #{transformer_decoder_forward.43} parent=15 // pred_region
          %p195 = scmp.lt.s32.totalorder %s15, 1
          %s196 = scalar_select %p195, %s15, 1
          %s197 = smul.addr %s196, 4
          %s198 = smul.addr %s197, 8
          %s199 = scalar_lea.vmem %s0, %s198
        $region20: #{transformer_decoder_forward.43} parent=15 // pred_fallthru
          _
        // Predicated region
        $region21: #{transformer_decoder_forward.43} parent=15 // pred_check
          %p200 = pneg %p61
        $region22: #{transformer_decoder_forward.43} parent=15 // pred_check_branch
          %202 = sbr.rel (%p200) target = $region24
        $region23: #{transformer_decoder_forward.43} parent=15 // pred_region
          %p203 = scmp.lt.s32.totalorder %s15, 3
          %s204 = scalar_select %p203, %s15, 3
          %s205 = smul.addr %s204, 4
          %s206 = smul.addr %s205, 8
          %s207 = scalar_lea.vmem %s1, %s206
        $region24: #{transformer_decoder_forward.43} parent=15 // pred_fallthru
          _
        // Predicated region
        $region25: #{transformer_decoder_forward.43} parent=15 // pred_check
          %p208 = pneg %p89
        $region26: #{transformer_decoder_forward.43} parent=15 // pred_check_branch
          %210 = sbr.rel (%p208) target = $region28
        $region27: #{transformer_decoder_forward.43} parent=15 // pred_region
          %s211 = sadd.s32 %s15, 2
          %p212 = scmp.lt.s32.totalorder %s211, 3
          %s213 = scalar_select %p212, %s211, 3
          %s214 = smul.addr %s213, 4
          %s215 = smul.addr %s214, 8
          %s216 = scalar_lea.vmem %s2, %s215
          %s217 = sadd.s32 %s15, 2
        $region28: #{transformer_decoder_forward.43} parent=15 // pred_fallthru
          _
        // Predicated region
        $region29: #{transformer_decoder_forward.43} parent=15 // pred_check
          %p218 = pneg %p115
        $region30: #{transformer_decoder_forward.43} parent=15 // pred_check_branch
          %220 = sbr.rel (%p218) target = $region32
        $region31: #{transformer_decoder_forward.43} parent=15 // pred_region
          %p221 = scmp.lt.s32.totalorder %s15, 1
          %s222 = scalar_select %p221, %s15, 1
          %s223 = smul.addr %s222, 8
          %s224 = scalar_lea.vmem %s3, %s223
        $region32: #{transformer_decoder_forward.43} parent=15 // pred_fallthru
          _
      $region16: #{transformer_decoder_forward.43} parent=5 // pred_fallthru
        _
      %p225 = scmp.le.s32.totalorder 1, %s15
      %p226 = scmp.lt.s32.totalorder %s15, 3
      %p227 = pnand %p225, %p226
      %p228 = pneg %p227
      // Predicated region
      $region33: #{transformer_decoder_forward.43} parent=5 // pred_check
        _
      $region34: #{transformer_decoder_forward.43} parent=5 // pred_check_branch
        %230 = sbr.rel (%p227) target = $region36
      $region35: #{transformer_decoder_forward.43} parent=5 // pred_region
        %s231 = ssub.s32 %s15, 1
        %p232 = scmp.lt.s32.totalorder %s20, 1
        %s233 = scalar_select %p232, %s20, 1
        %s234 = smul.addr %s233, 4
        %s235 = smul.addr %s234, 8
        %s236 = scalar_lea.vmem %s0, %s235
        %p237 = pneg %p41
        %p238 = pneg %p38
        %p239 = scmp.lt.s32.totalorder %s20, 3
        %s240 = scalar_select %p239, %s20, 3
        %s241 = smul.addr %s240, 4
        %s242 = smul.addr %s241, 8
        %s243 = scalar_lea.vmem %s1, %s242
        %p244 = pneg %p67
        %p245 = pneg %p64
        %s246 = sadd.s32 %s20, 2
        %p247 = scmp.lt.s32.totalorder %s246, 3
        %s248 = scalar_select %p247, %s246, 3
        %s249 = smul.addr %s248, 4
        %s250 = smul.addr %s249, 8
        %s251 = scalar_lea.vmem %s2, %s250
        %p252 = pneg %p95
        %p253 = pneg %p92
        %p254 = scmp.lt.s32.totalorder %s20, 1
        %s255 = scalar_select %p254, %s20, 1
        %s256 = smul.addr %s255, 8
        %s257 = scalar_lea.vmem %s3, %s256
        %p258 = pneg %p121
        %p259 = pneg %p118
        %p260 = pneg %p147
        %p261 = pneg %p144
        %p262 = scmp.lt.s32.totalorder %s20, 1
        %s263 = scalar_select %p262, %s20, 1
        %s264 = smul.addr %s263, 4
        %s265 = smul.addr %s264, 8
        %s266 = scalar_lea.vmem %s4, %s265
        %p267 = pneg %p173
        %p268 = pneg %p170
        %s269 = sand.u32 %s160, 1
        %s270 = scalar_lea.sflag [#allocation3], %s269
        %s271 = sand.u32 %s160, 1
        %s272 = smul.addr %s271, 32
        %s273 = scalar_lea.vmem [#allocation2], %s272
        %p274 = scmp.lt.s32.totalorder %s20, 1
        %s275 = scalar_select %p274, %s20, 1
        %s276 = smul.addr %s275, 4
        %s277 = smul.addr %s276, 8
        %s278 = scalar_lea.vmem %s0, %s277
        %p279 = scmp.lt.s32.totalorder %s20, 3
        %s280 = scalar_select %p279, %s20, 3
        %s281 = smul.addr %s280, 4
        %s282 = smul.addr %s281, 8
        %s283 = scalar_lea.vmem %s1, %s282
        %s284 = sadd.s32 %s20, 2
        %p285 = scmp.lt.s32.totalorder %s284, 3
        %s286 = scalar_select %p285, %s284, 3
        %s287 = smul.addr %s286, 4
        %s288 = smul.addr %s287, 8
        %s289 = scalar_lea.vmem %s2, %s288
        %s290 = sadd.s32 %s20, 2
        %p291 = scmp.lt.s32.totalorder %s20, 1
        %s292 = scalar_select %p291, %s20, 1
        %s293 = smul.addr %s292, 8
        %s294 = scalar_lea.vmem %s3, %s293
        %p295 = scmp.lt.s32.totalorder %s20, 1
        %s296 = scalar_select %p295, %s20, 1
        %s297 = smul.addr %s296, 4
        %s298 = smul.addr %s297, 8
        %s299 = scalar_lea.vmem %s4, %s298
        %v301 = vld [vmem:[%s278] sm:$0xff]
        %v302 = vld [vmem:[%s278 + $0x8] sm:$0xff]
        %v303 = vld [vmem:[%s278 + $0x10] sm:$0xff]
        %v304 = vld [vmem:[%s278 + $0x18] sm:$0xff]
        %v305 = vld [vmem:[%s283] sm:$0xff]
        %v306 = vld [vmem:[%s283 + $0x8] sm:$0xff]
        %v307 = vld [vmem:[%s283 + $0x10] sm:$0xff]
        %v308 = vld [vmem:[%s283 + $0x18] sm:$0xff]
        %v309 = vld [vmem:[%s289] sm:$0xff]
        %v310 = vld [vmem:[%s289 + $0x8] sm:$0xff]
        %v311 = vld [vmem:[%s289 + $0x10] sm:$0xff]
        %v312 = vld [vmem:[%s289 + $0x18] sm:$0xff]
        %v313 = vld [vmem:[%s294] sm:$0xff]
        %v314 = vmul.f32 %v301, 0.35355338
        %v315 = vmul.f32 %v302, 0.35355338
        %v316 = vmul.f32 %v303, 0.35355338
        %v317 = vmul.f32 %v304, 0.35355338
        %v318 = vpack.c.bf16 %v314, %v314
        %v319 = vpack.c.bf16 %v315, %v315
        %v320 = vpack.c.bf16 %v316, %v316
        %v321 = vpack.c.bf16 %v317, %v317
        %v322 = vpack.c.bf16 %v305, %v305
        %v323 = vpack.c.bf16 %v306, %v306
        %v324 = vpack.c.bf16 %v307, %v307
        %v325 = vpack.c.bf16 %v308, %v308
        %v326 = vpack.c.bf16 %v309, %v309
        %v327 = vpack.c.bf16 %v310, %v310
        %v328 = vpack.c.bf16 %v311, %v311
        %v329 = vpack.c.bf16 %v312, %v312
        %vm330 = vcmask 64512
        %v332 = vsel %vm330, %v318, 0
        %v335 = vsel %vm330, %v322, 0
        %337 = vmatpush.bf16.xpose.msra.mxu0 0
        %338 = vmatpush.bf16.xpose.msra.mxu0 0
        %339 = vmatpush.bf16.xpose.msra.mxu0 0
        %340 = vmatpush.bf16.xpose.msra.mxu0 0
        %341 = vmatpush.bf16.xpose.msra.mxu0 0
        %342 = vmatpush.bf16.xpose.msra.mxu0 0
        %343 = vmatpush.bf16.xpose.msra.mxu0 0
        %344 = vmatpush.bf16.xpose.msra.mxu0 %v335
        %345 = vmatmul.bf16.gmra.mxu0 %v332
        %v346 = vpop.f32.mrf.mxu0
        %v347 = vadd.f32 0.0, %v346
        %v348 = vpop.f32.mrf.mxu0
        %349 = vdwg.mxu0
        %v351 = vsel %vm330, %v319, 0
        %v354 = vsel %vm330, %v323, 0
        %356 = vmatpush.bf16.xpose.msra.mxu0 0
        %357 = vmatpush.bf16.xpose.msra.mxu0 0
        %358 = vmatpush.bf16.xpose.msra.mxu0 0
        %359 = vmatpush.bf16.xpose.msra.mxu0 0
        %360 = vmatpush.bf16.xpose.msra.mxu0 0
        %361 = vmatpush.bf16.xpose.msra.mxu0 0
        %362 = vmatpush.bf16.xpose.msra.mxu0 0
        %363 = vmatpush.bf16.xpose.msra.mxu0 %v354
        %364 = vmatmul.bf16.gmra.mxu0 %v351
        %v365 = vpop.f32.mrf.mxu0
        %v366 = vadd.f32 0.0, %v365
        %v367 = vpop.f32.mrf.mxu0
        %368 = vdwg.mxu0
        %v370 = vsel %vm330, %v320, 0
        %v373 = vsel %vm330, %v324, 0
        %375 = vmatpush.bf16.xpose.msra.mxu0 0
        %376 = vmatpush.bf16.xpose.msra.mxu0 0
        %377 = vmatpush.bf16.xpose.msra.mxu0 0
        %378 = vmatpush.bf16.xpose.msra.mxu0 0
        %379 = vmatpush.bf16.xpose.msra.mxu0 0
        %380 = vmatpush.bf16.xpose.msra.mxu0 0
        %381 = vmatpush.bf16.xpose.msra.mxu0 0
        %382 = vmatpush.bf16.xpose.msra.mxu0 %v373
        %383 = vmatmul.bf16.gmra.mxu0 %v370
        %v384 = vpop.f32.mrf.mxu0
        %v385 = vadd.f32 0.0, %v384
        %v386 = vpop.f32.mrf.mxu0
        %387 = vdwg.mxu0
        %v389 = vsel %vm330, %v321, 0
        %v392 = vsel %vm330, %v325, 0
        %394 = vmatpush.bf16.xpose.msra.mxu0 0
        %395 = vmatpush.bf16.xpose.msra.mxu0 0
        %396 = vmatpush.bf16.xpose.msra.mxu0 0
        %397 = vmatpush.bf16.xpose.msra.mxu0 0
        %398 = vmatpush.bf16.xpose.msra.mxu0 0
        %399 = vmatpush.bf16.xpose.msra.mxu0 0
        %400 = vmatpush.bf16.xpose.msra.mxu0 0
        %401 = vmatpush.bf16.xpose.msra.mxu0 %v392
        %402 = vmatmul.bf16.gmra.mxu0 %v389
        %v403 = vpop.f32.mrf.mxu0
        %v404 = vadd.f32 0.0, %v403
        %v405 = vpop.f32.mrf.mxu0
        %406 = vdwg.mxu0
        %vm407 = vcmp.lt.f32.partialorder %v313, 0.5
        %v408 = vsel %vm407, 1, 0
        %vm409 = vcmp.eq.s32.totalorder %v408, 1
        %v410 = vsel %vm409, -1e+10, %v347
        %v411 = vsel %vm409, -1e+10, %v366
        %v412 = vsel %vm409, -1e+10, %v385
        %v413 = vsel %vm409, -1e+10, %v404
        %v414 = vsel %vm330, %v410, -inf
        %415 = vmax.xlane.f32.xlu0 %v414
        %v416 = vpop.xlane.xlu0 %415
        %v417 = vsel %vm330, %v411, -inf
        %418 = vmax.xlane.f32.xlu0 %v417
        %v419 = vpop.xlane.xlu0 %418
        %v420 = vsel %vm330, %v412, -inf
        %421 = vmax.xlane.f32.xlu0 %v420
        %v422 = vpop.xlane.xlu0 %421
        %v423 = vsel %vm330, %v413, -inf
        %424 = vmax.xlane.f32.xlu0 %v423
        %v425 = vpop.xlane.xlu0 %424
        %v426 = vsub.f32 %v410, %v416
        %v427 = vsub.f32 %v411, %v419
        %v428 = vsub.f32 %v412, %v422
        %v429 = vsub.f32 %v413, %v425
        %v430 = vmul.f32 %v426, 1.442695
        %v431 = vpow.pop %v430
        %v432 = vmul.f32 %v427, 1.442695
        %v433 = vpow.pop %v432
        %v434 = vmul.f32 %v428, 1.442695
        %v435 = vpow.pop %v434
        %v436 = vmul.f32 %v429, 1.442695
        %v437 = vpow.pop %v436
        %v438 = vsel %vm330, %v431, 0.0
        %439 = vadd.xlane.f32.xlu0 %v438
        %v440 = vpop.xlane.xlu0 %439
        %v441 = vsel %vm330, %v433, 0.0
        %442 = vadd.xlane.f32.xlu0 %v441
        %v443 = vpop.xlane.xlu0 %442
        %v444 = vsel %vm330, %v435, 0.0
        %445 = vadd.xlane.f32.xlu0 %v444
        %v446 = vpop.xlane.xlu0 %445
        %v447 = vsel %vm330, %v437, 0.0
        %448 = vadd.xlane.f32.xlu0 %v447
        %v449 = vpop.xlane.xlu0 %448
        %v450 = vrcp.pop %v440
        %v451 = vrcp.pop %v443
        %v452 = vrcp.pop %v446
        %v453 = vrcp.pop %v449
        %v454 = vmul.f32 %v431, %v450
        %v455 = vmul.f32 %v433, %v451
        %v456 = vmul.f32 %v435, %v452
        %v457 = vmul.f32 %v437, %v453
        %v458 = vpack.c.bf16 %v454, %v454
        %v459 = vpack.c.bf16 %v455, %v455
        %v460 = vpack.c.bf16 %v456, %v456
        %v461 = vpack.c.bf16 %v457, %v457
        %v463 = vsel %vm330, %v458, 0
        %vm465 = vcmask 1043456
        %v467 = vsel %vm465, %v326, 0
        %469 = vmatpush.bf16.msra.mxu0 0
        %470 = vmatpush.bf16.msra.mxu0 0
        %471 = vmatpush.bf16.msra.mxu0 0
        %472 = vmatpush.bf16.msra.mxu0 0
        %473 = vmatpush.bf16.msra.mxu0 0
        %474 = vmatpush.bf16.msra.mxu0 0
        %475 = vmatpush.bf16.msra.mxu0 0
        %476 = vmatpush.bf16.msra.mxu0 %v467
        %477 = vmatmul.bf16.gmra.mxu0 %v463
        %v478 = vpop.f32.mrf.mxu0
        %v479 = vadd.f32 0.0, %v478
        %v480 = vpop.f32.mrf.mxu0
        %481 = vdwg.mxu0
        %v483 = vsel %vm330, %v459, 0
        %v486 = vsel %vm465, %v327, 0
        %488 = vmatpush.bf16.msra.mxu0 0
        %489 = vmatpush.bf16.msra.mxu0 0
        %490 = vmatpush.bf16.msra.mxu0 0
        %491 = vmatpush.bf16.msra.mxu0 0
        %492 = vmatpush.bf16.msra.mxu0 0
        %493 = vmatpush.bf16.msra.mxu0 0
        %494 = vmatpush.bf16.msra.mxu0 0
        %495 = vmatpush.bf16.msra.mxu0 %v486
        %496 = vmatmul.bf16.gmra.mxu0 %v483
        %v497 = vpop.f32.mrf.mxu0
        %v498 = vadd.f32 0.0, %v497
        %v499 = vpop.f32.mrf.mxu0
        %500 = vdwg.mxu0
        %v502 = vsel %vm330, %v460, 0
        %v505 = vsel %vm465, %v328, 0
        %507 = vmatpush.bf16.msra.mxu0 0
        %508 = vmatpush.bf16.msra.mxu0 0
        %509 = vmatpush.bf16.msra.mxu0 0
        %510 = vmatpush.bf16.msra.mxu0 0
        %511 = vmatpush.bf16.msra.mxu0 0
        %512 = vmatpush.bf16.msra.mxu0 0
        %513 = vmatpush.bf16.msra.mxu0 0
        %514 = vmatpush.bf16.msra.mxu0 %v505
        %515 = vmatmul.bf16.gmra.mxu0 %v502
        %v516 = vpop.f32.mrf.mxu0
        %v517 = vadd.f32 0.0, %v516
        %v518 = vpop.f32.mrf.mxu0
        %519 = vdwg.mxu0
        %v521 = vsel %vm330, %v461, 0
        %v524 = vsel %vm465, %v329, 0
        %526 = vmatpush.bf16.msra.mxu0 0
        %527 = vmatpush.bf16.msra.mxu0 0
        %528 = vmatpush.bf16.msra.mxu0 0
        %529 = vmatpush.bf16.msra.mxu0 0
        %530 = vmatpush.bf16.msra.mxu0 0
        %531 = vmatpush.bf16.msra.mxu0 0
        %532 = vmatpush.bf16.msra.mxu0 0
        %533 = vmatpush.bf16.msra.mxu0 %v524
        %534 = vmatmul.bf16.gmra.mxu0 %v521
        %v535 = vpop.f32.mrf.mxu0
        %v536 = vadd.f32 0.0, %v535
        %v537 = vpop.f32.mrf.mxu0
        %538 = vdwg.mxu0
        %539 = vst.msk [vmem:[%s299] sm:$0xff] %vm330, %v479
        %540 = vst.msk [vmem:[%s299 + $0x8] sm:$0xff] %vm330, %v498
        %541 = vst.msk [vmem:[%s299 + $0x10] sm:$0xff] %vm330, %v517
        %542 = vst.msk [vmem:[%s299 + $0x18] sm:$0xff] %vm330, %v536
        %543 = vst.msk [vmem:[%s273] sm:$0xff] %vm330, %v454
        %544 = vst.msk [vmem:[%s273 + $0x8] sm:$0xff] %vm330, %v455
        %545 = vst.msk [vmem:[%s273 + $0x10] sm:$0xff] %vm330, %v456
        %546 = vst.msk [vmem:[%s273 + $0x18] sm:$0xff] %vm330, %v457
        %p547 = scmp.lt.s32.totalorder %s20, 1
        %s548 = scalar_select %p547, %s20, 1
        %s549 = smul.addr %s548, 4
        %s550 = smul.addr %s549, 8
        %s551 = scalar_lea.vmem %s4, %s550
        %s552 = sand.u32 %s160, 1
        %s553 = scalar_lea.sflag [#allocation3], %s552
        %s554 = sand.u32 %s160, 1
        %s555 = smul.addr %s554, 32
        %s556 = scalar_lea.vmem [#allocation2], %s555
        // Predicated region
        $region37: #{transformer_decoder_forward.43} parent=35 // pred_check
          %p557 = pneg %p144
        $region38: #{transformer_decoder_forward.43} parent=35 // pred_check_branch
          %559 = sbr.rel (%p557) target = $region40
        $region39: #{transformer_decoder_forward.43} parent=35 // pred_region
          _
        $region40: #{transformer_decoder_forward.43} parent=35 // pred_fallthru
          _
        // Predicated region
        $region41: #{transformer_decoder_forward.43} parent=35 // pred_check
          %p560 = pneg %p170
        $region42: #{transformer_decoder_forward.43} parent=35 // pred_check_branch
          %562 = sbr.rel (%p560) target = $region44
        $region43: #{transformer_decoder_forward.43} parent=35 // pred_region
          %564 = vsyncadd %s553, 0
          %s565 = smul.addr %s20, 4
          %s566 = smul.addr %s565, 8
          %s567 = scalar_lea.hbm %s5, %s566
          %s568 = sshll.u32 %s556, 4
          %s569 = int_to_ptr.vmem [resolvable:$true] %s568
          %s570 = sshll.u32 %s567, 4
          %s571 = int_to_ptr.hbm [resolvable:$true] %s570
          %576 = dma.vmem_to_hbm [thread:$0]  %s569, 512, %s571, %s553, 128, 128, 8
        $region44: #{transformer_decoder_forward.43} parent=35 // pred_fallthru
          _
      $region36: #{transformer_decoder_forward.43} parent=5 // pred_fallthru
        _
      %p577 = scmp.le.s32.totalorder 2, %s15
      // Predicated region
      $region45: #{transformer_decoder_forward.43} parent=5 // pred_check
        %p578 = pneg %p577
      $region46: #{transformer_decoder_forward.43} parent=5 // pred_check_branch
        %580 = sbr.rel (%p578) target = $region48
      $region47: #{transformer_decoder_forward.43} parent=5 // pred_region
        %s581 = ssub.s32 %s15, 2
        // Predicated region
        $region49: #{transformer_decoder_forward.43} parent=47 // pred_check
          %p582 = pneg %p150
        $region50: #{transformer_decoder_forward.43} parent=47 // pred_check_branch
          %584 = sbr.rel (%p582) target = $region52
        $region51: #{transformer_decoder_forward.43} parent=47 // pred_region
          %p585 = scmp.lt.s32.totalorder %s21, 1
          %s586 = scalar_select %p585, %s21, 1
          %s587 = smul.addr %s586, 4
          %s588 = smul.addr %s587, 8
          %s589 = scalar_lea.vmem %s4, %s588
        $region52: #{transformer_decoder_forward.43} parent=47 // pred_fallthru
          _
        // Predicated region
        $region53: #{transformer_decoder_forward.43} parent=47 // pred_check
          %p590 = pneg %p176
        $region54: #{transformer_decoder_forward.43} parent=47 // pred_check_branch
          %592 = sbr.rel (%p590) target = $region56
        $region55: #{transformer_decoder_forward.43} parent=47 // pred_region
          %s593 = sand.u32 %s161, 1
          %s594 = scalar_lea.sflag [#allocation3], %s593
          %s595 = sand.u32 %s161, 1
          %s596 = smul.addr %s595, 32
          %s597 = scalar_lea.vmem [#allocation2], %s596
          %599 = dma.done %s594, 512
        $region56: #{transformer_decoder_forward.43} parent=47 // pred_fallthru
          _
      $region48: #{transformer_decoder_forward.43} parent=5 // pred_fallthru
        _
    $region6: #{transformer_decoder_forward.43} parent=1 // loop_footer
      %s19 = sadd.s32 1, %s15
    $region7: #{transformer_decoder_forward.43} parent=1 // loop_footer_branch
      %14 = sbr.rel target = $region3
    $region8: #{transformer_decoder_forward.43} parent=1 // loop_exit
      _
    %600 = vsyncpa [#allocation3], 1
    %s601 = scalar_lea.sflag [#allocation3], 1
    %602 = vsyncpa %s601, 1

</llo_original>
